<compile_context>
chip_gen: v7x
topology: tpu7x:2x2x1
jax: 0.10.0
libtpu: 0.0.40
codegen_flags: <defaults>
</compile_context>

<pallas_src>
import functools
import math

import jax
import jax.numpy as jnp
from jax.experimental import pallas as pl
from jax.experimental.pallas import tpu as pltpu


# ----------------------------- Generation-aware config -----------------------------

def _tpu_vmem_capacity_bytes():
    try:
        info = pltpu.get_tpu_info()
        cap = getattr(info, "vmem_capacity_bytes", None)
        if cap:
            return int(cap)
    except Exception:
        pass
    return 64 * 1024 * 1024  # conservative default (v7x per-TensorCore VMEM)


_VMEM_CAP = _tpu_vmem_capacity_bytes()
if _VMEM_CAP >= 96 * 1024 * 1024:        # v5e / v6e: 128 MiB VMEM per TensorCore
    _VMEM_LIMIT_BYTES = 96 * 1024 * 1024
    _TM_PREF, _TN_PREF, _TK_PREF = 512, 512, 1024
else:                                    # v7x: 64 MiB VMEM per TensorCore
    _VMEM_LIMIT_BYTES = 48 * 1024 * 1024
    _TM_PREF, _TN_PREF, _TK_PREF = 256, 256, 512

_HAS_APPROX_RECIP = hasattr(pl, "reciprocal")


def _recip(x):
    # EUP-slot reciprocal; effectively free next to the VPU/MXU work bounding attention.
    if _HAS_APPROX_RECIP:
        return pl.reciprocal(x, approx=True)
    return 1.0 / x


def _pick_tile(n, pref, aligns):
    """Largest tile <= pref that divides n and is a multiple of one of `aligns`
    (tried in order); falls back to the full dimension (always legal)."""
    if n <= pref:
        return n
    for align in aligns:
        t = (pref // align) * align
        while t >= align:
            if n % t == 0:
                return t
            t -= align
    # TODO(synk): full-dim fallback can exceed the VMEM limit for huge non-divisible dims.
    return n


# ----------------------------- Pallas kernels -----------------------------

def _matmul_kernel(x_ref, w_ref, b_ref, o_ref, acc_ref, *, relu):
    """o = x @ w + b (optional fused ReLU). bf16 MXU operands, f32 accumulator/epilogue."""
    @pl.when(pl.program_id(2) == 0)
    def _():
        acc_ref[...] = jnp.zeros_like(acc_ref)

    acc_ref[...] += jnp.dot(x_ref[...].astype(jnp.bfloat16),
                            w_ref[...].astype(jnp.bfloat16),
                            preferred_element_type=jnp.float32)

    @pl.when(pl.program_id(2) == pl.num_programs(2) - 1)
    def _():
        y = acc_ref[...] + b_ref[...].astype(jnp.float32)
        if relu:
            y = jnp.maximum(y, 0.0)          # F.threshold(x, 0, 0) == ReLU
        o_ref[...] = y.astype(o_ref.dtype)


def _matmul_add_ln_kernel(x_ref, w_ref, b_ref, r_ref, g_ref, beta_ref, o_ref, acc_ref):
    """o = LayerNorm((x @ w + b) + residual), eps=1e-5 (nn.LayerNorm default).
    N (= embed dim) is a single block so the row reduction stays in-kernel."""
    @pl.when(pl.program_id(1) == 0)
    def _():
        acc_ref[...] = jnp.zeros_like(acc_ref)

    acc_ref[...] += jnp.dot(x_ref[...].astype(jnp.bfloat16),
                            w_ref[...].astype(jnp.bfloat16),
                            preferred_element_type=jnp.float32)

    @pl.when(pl.program_id(1) == pl.num_programs(1) - 1)
    def _():
        y = (acc_ref[...] + b_ref[...].astype(jnp.float32)
             + r_ref[...].astype(jnp.float32))
        mean = jnp.mean(y, axis=-1, keepdims=True)
        var = jnp.mean(jnp.square(y - mean), axis=-1, keepdims=True)
        yn = (y - mean) * jax.lax.rsqrt(var + 1e-5)
        o_ref[...] = (yn * g_ref[...].astype(jnp.float32)
                      + beta_ref[...].astype(jnp.float32)).astype(o_ref.dtype)


def _softmax_rows(s):
    m = jnp.max(s, axis=-1, keepdims=True)
    e = jnp.exp(s - m)
    return e * _recip(jnp.sum(e, axis=-1, keepdims=True))


def _self_attn_kernel(qkv_ref, o_ref, *, num_heads, embed_dim, scale):
    # One batch element per grid step. qkv_ref: (T, 3E) bf16 (fused Q|K|V columns).
    # Heads are split via static lane slices and merged back -> lane-dense (T, E) store.
    H, E = num_heads, embed_dim
    d = E // H
    T = qkv_ref.shape[0]
    qkv = qkv_ref[...]
    row = jax.lax.broadcasted_iota(jnp.int32, (T, T), 0)
    col = jax.lax.broadcasted_iota(jnp.int32, (T, T), 1)
    neg = jnp.where(col > row, -1e30, 0.0).astype(jnp.float32)   # causal mask bias
    outs = []
    for h in range(H):                        # static unroll over heads
        q = qkv[:, h * d:(h + 1) * d]
        k = qkv[:, E + h * d:E + (h + 1) * d]
        v = qkv[:, 2 * E + h * d:2 * E + (h + 1) * d]
        s = jax.lax.dot_general(q, k, (((1,), (1,)), ((), ())),
                                preferred_element_type=jnp.float32)
        p = _softmax_rows(s * scale + neg)
        outs.append(jnp.dot(p.astype(v.dtype), v, preferred_element_type=jnp.float32))
    o_ref[...] = jnp.concatenate(outs, axis=-1).astype(o_ref.dtype)


def _cross_attn_kernel(q_ref, kv_ref, o_ref, p_ref, *, num_heads, embed_dim, scale):
    # q_ref: (T, E) bf16, kv_ref: (S, 2E) bf16 (fused K|V of encoder_out).
    # Emits lane-dense (T, E) output plus head-AVERAGED attention weights (T, S).
    H, E = num_heads, embed_dim
    d = E // H
    qf = q_ref[...]
    kvf = kv_ref[...]
    outs = []
    p_sum = jnp.zeros((q_ref.shape[0], kv_ref.shape[0]), jnp.float32)
    for h in range(H):
        q = qf[:, h * d:(h + 1) * d]
        k = kvf[:, h * d:(h + 1) * d]
        v = kvf[:, E + h * d:E + (h + 1) * d]
        s = jax.lax.dot_general(q, k, (((1,), (1,)), ((), ())),
                                preferred_element_type=jnp.float32)
        p = _softmax_rows(s * scale)
        p_sum = p_sum + p
        outs.append(jnp.dot(p.astype(v.dtype), v, preferred_element_type=jnp.float32))
    o_ref[...] = jnp.concatenate(outs, axis=-1).astype(o_ref.dtype)
    p_ref[...] = (p_sum * (1.0 / H)).astype(p_ref.dtype)


# ----------------------------- Pallas wrappers -----------------------------

def linear(x2d, w, b, relu=False, out_dtype=jnp.bfloat16):
    """y = x2d @ w + b (optional fused ReLU). w: (K, N) bf16 (pre-transposed from torch)."""
    M, K = x2d.shape
    N = w.shape[1]
    tm = _pick_tile(M, _TM_PREF, (256, 128, 8))
    tn = _pick_tile(N, _TN_PREF, (128,))
    tk = _pick_tile(K, _TK_PREF, (128,))
    kernel = functools.partial(_matmul_kernel, relu=relu)
    return pl.pallas_call(
        kernel,
        out_shape=jax.ShapeDtypeStruct((M, N), out_dtype),
        grid=(M // tm, N // tn, K // tk),
        in_specs=[pl.BlockSpec((tm, tk), lambda i, j, k: (i, k)),
                  pl.BlockSpec((tk, tn), lambda i, j, k: (k, j)),
                  pl.BlockSpec((1, tn), lambda i, j, k: (0, j))],
        out_specs=pl.BlockSpec((tm, tn), lambda i, j, k: (i, j)),
        scratch_shapes=[pltpu.VMEM((tm, tn), jnp.float32)],
        compiler_params=pltpu.CompilerParams(
            dimension_semantics=("parallel", "parallel", "arbitrary"),
            vmem_limit_bytes=_VMEM_LIMIT_BYTES),
    )(x2d, w, b)


def linear_add_ln(x2d, w, b, residual, gamma, beta):
    """LayerNorm((x2d @ w + b) + residual) fused in one kernel (LN over the last dim)."""
    M, K = x2d.shape
    N = w.shape[1]                       # full feature dim as a single block (needed for LN)
    tm = _pick_tile(M, min(_TM_PREF, 256), (256, 128, 8))   # full-N f32 accumulator in VMEM
    tk = _pick_tile(K, _TK_PREF, (128,))
    return pl.pallas_call(
        _matmul_add_ln_kernel,
        out_shape=jax.ShapeDtypeStruct((M, N), residual.dtype),
        grid=(M // tm, K // tk),
        in_specs=[pl.BlockSpec((tm, tk), lambda i, k: (i, k)),
                  pl.BlockSpec((tk, N), lambda i, k: (k, 0)),
                  pl.BlockSpec((1, N), lambda i, k: (0, 0)),
                  pl.BlockSpec((tm, N), lambda i, k: (i, 0)),
                  pl.BlockSpec((1, N), lambda i, k: (0, 0)),
                  pl.BlockSpec((1, N), lambda i, k: (0, 0))],
        out_specs=pl.BlockSpec((tm, N), lambda i, k: (i, 0)),
        scratch_shapes=[pltpu.VMEM((tm, N), jnp.float32)],
        compiler_params=pltpu.CompilerParams(
            dimension_semantics=("parallel", "arbitrary"),
            vmem_limit_bytes=_VMEM_LIMIT_BYTES),
    )(x2d, w, b, residual, gamma, beta)


def self_attention(qkv, B, T, num_heads):
    """qkv: (B*T, 3E) bf16 (fused Q|K|V). Returns (B*T, E) bf16 (causal self-attention)."""
    E = qkv.shape[1] // 3
    d = E // num_heads
    qkv3 = qkv.reshape(B, T, 3 * E)                         # free reshape (contiguous)
    kernel = functools.partial(_self_attn_kernel, num_heads=num_heads,
                               embed_dim=E, scale=1.0 / math.sqrt(d))
    out = pl.pallas_call(
        kernel,
        out_shape=jax.ShapeDtypeStruct((B, T, E), qkv.dtype),
        grid=(B,),
        in_specs=[pl.BlockSpec((None, T, 3 * E), lambda b: (b, 0, 0))],
        out_specs=pl.BlockSpec((None, T, E), lambda b: (b, 0, 0)),
        compiler_params=pltpu.CompilerParams(
            dimension_semantics=("parallel",),
            vmem_limit_bytes=_VMEM_LIMIT_BYTES),
    )(qkv3)
    return out.reshape(B * T, E)


def cross_attention(q, kv, B, T, S, num_heads):
    """q: (B*T, E) bf16, kv: (B*S, 2E) bf16 (fused K|V of encoder_out).
    Returns ((B*T, E) bf16, (B, T, S) f32 head-averaged attention weights)."""
    E = q.shape[1]
    d = E // num_heads
    q3 = q.reshape(B, T, E)
    kv3 = kv.reshape(B, S, 2 * E)
    kernel = functools.partial(_cross_attn_kernel, num_heads=num_heads,
                               embed_dim=E, scale=1.0 / math.sqrt(d))
    out, probs = pl.pallas_call(
        kernel,
        out_shape=(jax.ShapeDtypeStruct((B, T, E), q.dtype),
                   jax.ShapeDtypeStruct((B, T, S), jnp.float32)),
        grid=(B,),
        in_specs=[pl.BlockSpec((None, T, E), lambda b: (b, 0, 0)),
                  pl.BlockSpec((None, S, 2 * E), lambda b: (b, 0, 0))],
        out_specs=(pl.BlockSpec((None, T, E), lambda b: (b, 0, 0)),
                   pl.BlockSpec((None, T, S), lambda b: (b, 0, 0))),
        compiler_params=pltpu.CompilerParams(
            dimension_semantics=("parallel",),
            vmem_limit_bytes=_VMEM_LIMIT_BYTES),
    )(q3, kv3)
    return out.reshape(B * T, E), probs


# ----------------------------- Decoder layer -----------------------------

def transformer_decoder_layer(x, encoder_out, p, num_heads):
    """x: (T, B, E), encoder_out: (S, B, E) -> (out (T, B, E), attn (B, T, S))."""
    T, B, E = x.shape
    S = encoder_out.shape[0]

    # Batch-major internally so each attention grid step sees one contiguous batch element.
    x2 = jnp.transpose(x, (1, 0, 2)).reshape(B * T, E)
    e2 = jnp.transpose(encoder_out, (1, 0, 2)).reshape(B * S, E)

    # --- self attention (causal); out-proj fused with residual add + LayerNorm ---
    residual = x2
    qkv = linear(x2, p["self_attn"]["w_qkv"], p["self_attn"]["b_qkv"])     # (B*T, 3E) bf16
    attn_out = self_attention(qkv, B, T, num_heads)
    x2 = linear_add_ln(attn_out, p["self_attn"]["wo"], p["self_attn"]["bo"],
                       residual, p["self_attn_ln_g"], p["self_attn_ln_b"])

    # --- encoder-decoder attention (returns head-averaged weights) ---
    residual = x2
    q = linear(x2, p["enc_attn"]["wq"], p["enc_attn"]["bq"])               # (B*T, E) bf16
    kv = linear(e2, p["enc_attn"]["w_kv"], p["enc_attn"]["b_kv"])          # (B*S, 2E) bf16
    attn_out, attn_w = cross_attention(q, kv, B, T, S, num_heads)
    x2 = linear_add_ln(attn_out, p["enc_attn"]["wo"], p["enc_attn"]["bo"],
                       residual, p["enc_attn_ln_g"], p["enc_attn_ln_b"])

    # --- feed-forward: fc1+ReLU fused; fc2 fused with residual add + final LayerNorm ---
    residual = x2
    h = linear(x2, p["fc1_w"], p["fc1_b"], relu=True)                      # (B*T, FFN) bf16
    x2 = linear_add_ln(h, p["fc2_w"], p["fc2_b"],
                       residual, p["final_ln_g"], p["final_ln_b"])

    out = x2.reshape(B, T, E).transpose(1, 0, 2)
    return out, attn_w


# ----------------------------- Parameter init -----------------------------

def xavier_uniform(key, shape):
    # torch nn.Linear weight layout: (fan_out, fan_in)
    fan_out, fan_in = shape
    bound = math.sqrt(6.0 / (fan_in + fan_out))
    return jax.random.uniform(key, shape, jnp.float32, -bound, bound)


def init_params(key, E, ffn):
    keys = jax.random.split(key, 4)
    bf = jnp.bfloat16  # weights stored bf16 (native MXU dtype; halves weight HBM traffic)

    def self_attn_params(k):
        k1, k2 = jax.random.split(k)
        in_proj = xavier_uniform(k1, (3 * E, E))   # fairseq in_proj_weight (q;k;v rows)
        wo = xavier_uniform(k2, (E, E))
        return {"w_qkv": in_proj.T.astype(bf), "b_qkv": jnp.zeros((1, 3 * E), jnp.float32),
                "wo": wo.T.astype(bf), "bo": jnp.zeros((1, E), jnp.float32)}

    def enc_attn_params(k):
        k1, k2 = jax.random.split(k)
        in_proj = xavier_uniform(k1, (3 * E, E))
        wq, wk, wv = jnp.split(in_proj, 3, axis=0)
        wo = xavier_uniform(k2, (E, E))
        return {"wq": wq.T.astype(bf), "bq": jnp.zeros((1, E), jnp.float32),
                "w_kv": jnp.concatenate([wk, wv], axis=0).T.astype(bf),
                "b_kv": jnp.zeros((1, 2 * E), jnp.float32),
                "wo": wo.T.astype(bf), "bo": jnp.zeros((1, E), jnp.float32)}

    ones_e = jnp.ones((1, E), jnp.float32)
    zeros_e = jnp.zeros((1, E), jnp.float32)
    return {
        "self_attn": self_attn_params(keys[0]),
        "enc_attn": enc_attn_params(keys[1]),
        "self_attn_ln_g": ones_e, "self_attn_ln_b": zeros_e,
        "enc_attn_ln_g": ones_e, "enc_attn_ln_b": zeros_e,
        "final_ln_g": ones_e, "final_ln_b": zeros_e,
        "fc1_w": xavier_uniform(keys[2], (ffn, E)).T.astype(bf),
        "fc1_b": jnp.zeros((1, ffn), jnp.float32),
        "fc2_w": xavier_uniform(keys[3], (E, ffn)).T.astype(bf),
        "fc2_b": jnp.zeros((1, E), jnp.float32),
    }


# ----------------------------- Pure-JAX reference -----------------------------

def reference_layer(x, encoder_out, p, num_heads):
    hp = jax.lax.Precision.HIGHEST
    pf = jax.tree_util.tree_map(lambda a: a.astype(jnp.float32), p)  # same bf16-rounded weights
    T, B, E = x.shape
    S = encoder_out.shape[0]
    H = num_heads
    d = E // H

    def ln(v, g, b):
        m = v.mean(-1, keepdims=True)
        var = ((v - m) ** 2).mean(-1, keepdims=True)
        return (v - m) * jax.lax.rsqrt(var + 1e-5) * g + b

    def mha(qx, kvx, wq, bq, wk, bk, wv, bv, wo, bo, causal):
        Tq, Sk = qx.shape[1], kvx.shape[1]
        q = (jnp.dot(qx, wq, precision=hp) + bq).reshape(B, Tq, H, d).transpose(0, 2, 1, 3)
        k = (jnp.dot(kvx, wk, precision=hp) + bk).reshape(B, Sk, H, d).transpose(0, 2, 1, 3)
        v = (jnp.dot(kvx, wv, precision=hp) + bv).reshape(B, Sk, H, d).transpose(0, 2, 1, 3)
        s = jnp.einsum('bhtd,bhsd->bhts', q, k, precision=hp) / math.sqrt(d)
        if causal:
            s = jnp.where(jnp.triu(jnp.ones((Tq, Sk), bool), 1), -1e30, s)
        pr = jax.nn.softmax(s, axis=-1)
        o = jnp.einsum('bhts,bhsd->bhtd', pr, v, precision=hp)
        o = o.transpose(0, 2, 1, 3).reshape(B, Tq, E)
        return jnp.dot(o, wo, precision=hp) + bo, pr.mean(axis=1)

    xb = x.transpose(1, 0, 2)
    eb = encoder_out.transpose(1, 0, 2)

    sa = pf["self_attn"]
    wq, wk, wv = jnp.split(sa["w_qkv"], 3, axis=1)
    bq, bk, bv = jnp.split(sa["b_qkv"], 3, axis=1)
    y, _ = mha(xb, xb, wq, bq, wk, bk, wv, bv, sa["wo"], sa["bo"], causal=True)
    xb = ln(xb + y, pf["self_attn_ln_g"], pf["self_attn_ln_b"])

    ea = pf["enc_attn"]
    wk2, wv2 = jnp.split(ea["w_kv"], 2, axis=1)
    bk2, bv2 = jnp.split(ea["b_kv"], 2, axis=1)
    y, attn = mha(xb, eb, ea["wq"], ea["bq"], wk2, bk2, wv2, bv2, ea["wo"], ea["bo"], causal=False)
    xb = ln(xb + y, pf["enc_attn_ln_g"], pf["enc_attn_ln_b"])

    h = jnp.maximum(jnp.dot(xb, pf["fc1_w"], precision=hp) + pf["fc1_b"], 0.0)
    y = jnp.dot(h, pf["fc2_w"], precision=hp) + pf["fc2_b"]
    xb = ln(xb + y, pf["final_ln_g"], pf["final_ln_b"])
    return xb.transpose(1, 0, 2), attn


# ----------------------------- Main -----------------------------

if __name__ == "__main__":
    T, S, B, E, H, FFN = 8, 16, 2, 32, 4, 64
    key = jax.random.PRNGKey(0)
    kx, ke, kp = jax.random.split(key, 3)

    x = jax.random.normal(kx, (T, B, E), jnp.float32)            # decoder input (T, B, E)
    encoder_out = jax.random.normal(ke, (S, B, E), jnp.float32)  # encoder output (S, B, E)
    params = init_params(kp, E, FFN)

    fwd = jax.jit(lambda xx, ee: transformer_decoder_layer(xx, ee, params, H))
    out, attn = fwd(x, encoder_out)
    jax.block_until_ready(out)
    jax.block_until_ready(attn)

    assert out.shape == (T, B, E) and out.dtype == jnp.float32
    assert attn.shape == (B, T, S)

    ref_out, ref_attn = reference_layer(x, encoder_out, params, H)
    # bf16 MXU operands + approx softmax reciprocal => slightly looser tolerance than pure f32.
    assert bool(jnp.allclose(out, ref_out, rtol=3e-2, atol=3e-2))
    assert bool(jnp.allclose(attn, ref_attn, rtol=2e-2, atol=2e-2))

    print("KERNEL_OK")
</pallas_src>

<mosaic_0001>
module attributes {stable_mosaic.version = 11 : i64} {
  func.func @_matmul_kernel(%arg0: i32, %arg1: i32, %arg2: i32, %arg3: memref<16x32xf32, #tpu.memory_space<vmem>>, %arg4: memref<32x96xbf16, #tpu.memory_space<vmem>>, %arg5: memref<1x96xf32, #tpu.memory_space<vmem>>, %arg6: memref<16x96xbf16, #tpu.memory_space<vmem>>, %arg7: memref<16x96xf32, #tpu.memory_space<vmem>>) attributes {dimension_semantics = [#tpu.dimension_semantics<parallel>, #tpu.dimension_semantics<parallel>, #tpu.dimension_semantics<arbitrary>], iteration_bounds = array<i64: 1, 1, 1>, scalar_prefetch = 0 : i64, scratch_operands = 1 : i64, tpu.core_type = #tpu.core_type<tc>, window_params = [{transform_indices = @transform_0, window_bounds = array<i64: 16, 32>}, {transform_indices = @transform_1, window_bounds = array<i64: 32, 96>}, {transform_indices = @transform_2, window_bounds = array<i64: 1, 96>}, {transform_indices = @transform_3, window_bounds = array<i64: 16, 96>}]} {
    %c0_i32 = arith.constant 0 : i32
    %0 = arith.cmpi eq, %arg2, %c0_i32 : i32
    %1 = arith.extui %0 : i1 to i32
    %c0_i32_0 = arith.constant 0 : i32
    %2 = arith.cmpi ne, %1, %c0_i32_0 : i32
    scf.if %2 {
      %cst_10 = arith.constant 0.000000e+00 : f32
      %13 = vector.broadcast %cst_10 : f32 to vector<16x96xf32>
      %c0_11 = arith.constant 0 : index
      %c0_12 = arith.constant 0 : index
      %14 = vector.load %arg7[%c0_11, %c0_12] : memref<16x96xf32, #tpu.memory_space<vmem>>, vector<16x96xf32>
      tpu.vector_store %arg7[%c0_11, %c0_12], %13 {strides = array<i32>} : memref<16x96xf32, #tpu.memory_space<vmem>>, vector<16x96xf32>,
    } else {
    }
    %c0 = arith.constant 0 : index
    %c0_1 = arith.constant 0 : index
    %3 = vector.load %arg7[%c0, %c0_1] : memref<16x96xf32, #tpu.memory_space<vmem>>, vector<16x96xf32>
    %c0_2 = arith.constant 0 : index
    %c0_3 = arith.constant 0 : index
    %4 = vector.load %arg3[%c0_2, %c0_3] : memref<16x32xf32, #tpu.memory_space<vmem>>, vector<16x32xf32>
    %5 = arith.truncf %4 : vector<16x32xf32> to vector<16x32xbf16>
    %c0_4 = arith.constant 0 : index
    %c0_5 = arith.constant 0 : index
    %6 = vector.load %arg4[%c0_4, %c0_5] : memref<32x96xbf16, #tpu.memory_space<vmem>>, vector<32x96xbf16>
    %cst = arith.constant dense<0.000000e+00> : vector<16x96xf32>
    %7 = tpu.matmul %5, %6, %cst {dimension_numbers = #tpu.dot_dimension_numbers<[1], [0], [0], [1], [0, 0, 1, 1], [], []>} : vector<16x32xbf16>, vector<32x96xbf16>, vector<16x96xf32> -> vector<16x96xf32>
    %8 = arith.addf %3, %7 : vector<16x96xf32>
    %c0_6 = arith.constant 0 : index
    %c0_7 = arith.constant 0 : index
    %9 = vector.load %arg7[%c0_6, %c0_7] : memref<16x96xf32, #tpu.memory_space<vmem>>, vector<16x96xf32>
    tpu.vector_store %arg7[%c0_6, %c0_7], %8 {strides = array<i32>} : memref<16x96xf32, #tpu.memory_space<vmem>>, vector<16x96xf32>,
    %c0_i32_8 = arith.constant 0 : i32
    %10 = arith.cmpi eq, %arg2, %c0_i32_8 : i32
    %11 = arith.extui %10 : i1 to i32
    %c0_i32_9 = arith.constant 0 : i32
    %12 = arith.cmpi ne, %11, %c0_i32_9 : i32
    scf.if %12 {
      %c0_10 = arith.constant 0 : index
      %c0_11 = arith.constant 0 : index
      %13 = vector.load %arg7[%c0_10, %c0_11] : memref<16x96xf32, #tpu.memory_space<vmem>>, vector<16x96xf32>
      %c0_12 = arith.constant 0 : index
      %c0_13 = arith.constant 0 : index
      %14 = vector.load %arg5[%c0_12, %c0_13] : memref<1x96xf32, #tpu.memory_space<vmem>>, vector<1x96xf32>
      %15 = vector.broadcast %14 : vector<1x96xf32> to vector<16x96xf32>
      %16 = arith.addf %13, %15 : vector<16x96xf32>
      %17 = arith.truncf %16 : vector<16x96xf32> to vector<16x96xbf16>
      %c0_14 = arith.constant 0 : index
      %c0_15 = arith.constant 0 : index
      %18 = vector.load %arg6[%c0_14, %c0_15] : memref<16x96xbf16, #tpu.memory_space<vmem>>, vector<16x96xbf16>
      tpu.vector_store %arg6[%c0_14, %c0_15], %17 {strides = array<i32>} : memref<16x96xbf16, #tpu.memory_space<vmem>>, vector<16x96xbf16>,
    } else {
    }
    return
  }
  func.func @transform_0(%arg0: i32, %arg1: i32, %arg2: i32) -> (i32, i32) {
    %c0_i32 = arith.constant 0 : i32
    return %arg0, %arg2 : i32, i32
  }
  func.func @transform_1(%arg0: i32, %arg1: i32, %arg2: i32) -> (i32, i32) {
    %c0_i32 = arith.constant 0 : i32
    return %arg2, %arg1 : i32, i32
  }
  func.func @transform_2(%arg0: i32, %arg1: i32, %arg2: i32) -> (i32, i32) {
    %c0_i32 = arith.constant 0 : i32
    %c0_i32_0 = arith.constant 0 : i32
    return %c0_i32, %arg1 : i32, i32
  }
  func.func @transform_3(%arg0: i32, %arg1: i32, %arg2: i32) -> (i32, i32) {
    %c0_i32 = arith.constant 0 : i32
    return %arg0, %arg1 : i32, i32
  }
}

module attributes {stable_mosaic.version = 11 : i64} {
  func.func @_self_attn_kernel(%arg0: i32, %arg1: memref<1x8x96xbf16, #tpu.memory_space<vmem>>, %arg2: memref<1x8x32xbf16, #tpu.memory_space<vmem>>) attributes {dimension_semantics = [#tpu.dimension_semantics<parallel>], iteration_bounds = array<i64: 2>, scalar_prefetch = 0 : i64, scratch_operands = 0 : i64, tpu.core_type = #tpu.core_type<tc>, window_params = [{transform_indices = @transform_0, window_bounds = array<i64: 1, 8, 96>}, {transform_indices = @transform_1, window_bounds = array<i64: 1, 8, 32>}]} {
    %c0 = arith.constant 0 : index
    %c0_0 = arith.constant 0 : index
    %c0_1 = arith.constant 0 : index
    %0 = vector.load %arg1[%c0, %c0_0, %c0_1] : memref<1x8x96xbf16, #tpu.memory_space<vmem>>, vector<1x8x96xbf16>
    %1 = vector.shape_cast %0 : vector<1x8x96xbf16> to vector<8x96xbf16>
    %2 = tpu.iota {dimensions = array<i32: 0>} : vector<8x8xi32>
    %3 = tpu.iota {dimensions = array<i32: 1>} : vector<8x8xi32>
    %4 = arith.cmpi sgt, %3, %2 : vector<8x8xi32>
    %cst = arith.constant -1.000000e+30 : f32
    %cst_2 = arith.constant 0.000000e+00 : f32
    %5 = vector.broadcast %cst : f32 to vector<8x8xf32>
    %6 = vector.broadcast %cst_2 : f32 to vector<8x8xf32>
    %7 = arith.select %4, %5, %6 : vector<8x8xi1>, vector<8x8xf32>
    %8 = vector.extract_strided_slice %1 {offsets = [0, 0], sizes = [8, 8], strides = [1, 1]} : vector<8x96xbf16> to vector<8x8xbf16>
    %9 = vector.extract_strided_slice %1 {offsets = [0, 32], sizes = [8, 8], strides = [1, 1]} : vector<8x96xbf16> to vector<8x8xbf16>
    %10 = vector.extract_strided_slice %1 {offsets = [0, 64], sizes = [8, 8], strides = [1, 1]} : vector<8x96xbf16> to vector<8x8xbf16>
    %cst_3 = arith.constant dense<0.000000e+00> : vector<8x8xf32>
    %11 = tpu.matmul %8, %9, %cst_3 {dimension_numbers = #tpu.dot_dimension_numbers<[1], [1], [0], [0], [0, 0, 1, 0], [], []>} : vector<8x8xbf16>, vector<8x8xbf16>, vector<8x8xf32> -> vector<8x8xf32>
    %cst_4 = arith.constant 0.353553385 : f32
    %12 = vector.broadcast %cst_4 : f32 to vector<8x8xf32>
    %13 = arith.mulf %11, %12 : vector<8x8xf32>
    %14 = arith.addf %13, %7 : vector<8x8xf32>
    %cst_5 = arith.constant dense<0xFF800000> : vector<8xf32>
    %15 = vector.multi_reduction <maximumf>, %14, %cst_5 [1] : vector<8x8xf32> to vector<8xf32>
    %16 = vector.shape_cast %15 : vector<8xf32> to vector<8x1xf32>
    %17 = vector.broadcast %16 : vector<8x1xf32> to vector<8x8xf32>
    %18 = arith.subf %14, %17 : vector<8x8xf32>
    %19 = math.exp %18 : vector<8x8xf32>
    %cst_6 = arith.constant dense<0.000000e+00> : vector<8xf32>
    %20 = vector.multi_reduction <add>, %19, %cst_6 [1] : vector<8x8xf32> to vector<8xf32>
    %21 = vector.shape_cast %20 : vector<8xf32> to vector<8x1xf32>
    %22 = tpu.reciprocal %21 {approx = true} : vector<8x1xf32> -> vector<8x1xf32>
    %23 = vector.broadcast %22 : vector<8x1xf32> to vector<8x8xf32>
    %24 = arith.mulf %19, %23 : vector<8x8xf32>
    %25 = arith.truncf %24 : vector<8x8xf32> to vector<8x8xbf16>
    %cst_7 = arith.constant dense<0.000000e+00> : vector<8x8xf32>
    %26 = tpu.matmul %25, %10, %cst_7 {dimension_numbers = #tpu.dot_dimension_numbers<[1], [0], [0], [1], [0, 0, 1, 1], [], []>} : vector<8x8xbf16>, vector<8x8xbf16>, vector<8x8xf32> -> vector<8x8xf32>
    %27 = vector.extract_strided_slice %1 {offsets = [0, 8], sizes = [8, 8], strides = [1, 1]} : vector<8x96xbf16> to vector<8x8xbf16>
    %28 = vector.extract_strided_slice %1 {offsets = [0, 40], sizes = [8, 8], strides = [1, 1]} : vector<8x96xbf16> to vector<8x8xbf16>
    %29 = vector.extract_strided_slice %1 {offsets = [0, 72], sizes = [8, 8], strides = [1, 1]} : vector<8x96xbf16> to vector<8x8xbf16>
    %cst_8 = arith.constant dense<0.000000e+00> : vector<8x8xf32>
    %30 = tpu.matmul %27, %28, %cst_8 {dimension_numbers = #tpu.dot_dimension_numbers<[1], [1], [0], [0], [0, 0, 1, 0], [], []>} : vector<8x8xbf16>, vector<8x8xbf16>, vector<8x8xf32> -> vector<8x8xf32>
    %cst_9 = arith.constant 0.353553385 : f32
    %31 = vector.broadcast %cst_9 : f32 to vector<8x8xf32>
    %32 = arith.mulf %30, %31 : vector<8x8xf32>
    %33 = arith.addf %32, %7 : vector<8x8xf32>
    %cst_10 = arith.constant dense<0xFF800000> : vector<8xf32>
    %34 = vector.multi_reduction <maximumf>, %33, %cst_10 [1] : vector<8x8xf32> to vector<8xf32>
    %35 = vector.shape_cast %34 : vector<8xf32> to vector<8x1xf32>
    %36 = vector.broadcast %35 : vector<8x1xf32> to vector<8x8xf32>
    %37 = arith.subf %33, %36 : vector<8x8xf32>
    %38 = math.exp %37 : vector<8x8xf32>
    %cst_11 = arith.constant dense<0.000000e+00> : vector<8xf32>
    %39 = vector.multi_reduction <add>, %38, %cst_11 [1] : vector<8x8xf32> to vector<8xf32>
    %40 = vector.shape_cast %39 : vector<8xf32> to vector<8x1xf32>
    %41 = tpu.reciprocal %40 {approx = true} : vector<8x1xf32> -> vector<8x1xf32>
    %42 = vector.broadcast %41 : vector<8x1xf32> to vector<8x8xf32>
    %43 = arith.mulf %38, %42 : vector<8x8xf32>
    %44 = arith.truncf %43 : vector<8x8xf32> to vector<8x8xbf16>
    %cst_12 = arith.constant dense<0.000000e+00> : vector<8x8xf32>
    %45 = tpu.matmul %44, %29, %cst_12 {dimension_numbers = #tpu.dot_dimension_numbers<[1], [0], [0], [1], [0, 0, 1, 1], [], []>} : vector<8x8xbf16>, vector<8x8xbf16>, vector<8x8xf32> -> vector<8x8xf32>
    %46 = vector.extract_strided_slice %1 {offsets = [0, 16], sizes = [8, 8], strides = [1, 1]} : vector<8x96xbf16> to vector<8x8xbf16>
    %47 = vector.extract_strided_slice %1 {offsets = [0, 48], sizes = [8, 8], strides = [1, 1]} : vector<8x96xbf16> to vector<8x8xbf16>
    %48 = vector.extract_strided_slice %1 {offsets = [0, 80], sizes = [8, 8], strides = [1, 1]} : vector<8x96xbf16> to vector<8x8xbf16>
    %cst_13 = arith.constant dense<0.000000e+00> : vector<8x8xf32>
    %49 = tpu.matmul %46, %47, %cst_13 {dimension_numbers = #tpu.dot_dimension_numbers<[1], [1], [0], [0], [0, 0, 1, 0], [], []>} : vector<8x8xbf16>, vector<8x8xbf16>, vector<8x8xf32> -> vector<8x8xf32>
    %cst_14 = arith.constant 0.353553385 : f32
    %50 = vector.broadcast %cst_14 : f32 to vector<8x8xf32>
    %51 = arith.mulf %49, %50 : vector<8x8xf32>
    %52 = arith.addf %51, %7 : vector<8x8xf32>
    %cst_15 = arith.constant dense<0xFF800000> : vector<8xf32>
    %53 = vector.multi_reduction <maximumf>, %52, %cst_15 [1] : vector<8x8xf32> to vector<8xf32>
    %54 = vector.shape_cast %53 : vector<8xf32> to vector<8x1xf32>
    %55 = vector.broadcast %54 : vector<8x1xf32> to vector<8x8xf32>
    %56 = arith.subf %52, %55 : vector<8x8xf32>
    %57 = math.exp %56 : vector<8x8xf32>
    %cst_16 = arith.constant dense<0.000000e+00> : vector<8xf32>
    %58 = vector.multi_reduction <add>, %57, %cst_16 [1] : vector<8x8xf32> to vector<8xf32>
    %59 = vector.shape_cast %58 : vector<8xf32> to vector<8x1xf32>
    %60 = tpu.reciprocal %59 {approx = true} : vector<8x1xf32> -> vector<8x1xf32>
    %61 = vector.broadcast %60 : vector<8x1xf32> to vector<8x8xf32>
    %62 = arith.mulf %57, %61 : vector<8x8xf32>
    %63 = arith.truncf %62 : vector<8x8xf32> to vector<8x8xbf16>
    %cst_17 = arith.constant dense<0.000000e+00> : vector<8x8xf32>
    %64 = tpu.matmul %63, %48, %cst_17 {dimension_numbers = #tpu.dot_dimension_numbers<[1], [0], [0], [1], [0, 0, 1, 1], [], []>} : vector<8x8xbf16>, vector<8x8xbf16>, vector<8x8xf32> -> vector<8x8xf32>
    %65 = vector.extract_strided_slice %1 {offsets = [0, 24], sizes = [8, 8], strides = [1, 1]} : vector<8x96xbf16> to vector<8x8xbf16>
    %66 = vector.extract_strided_slice %1 {offsets = [0, 56], sizes = [8, 8], strides = [1, 1]} : vector<8x96xbf16> to vector<8x8xbf16>
    %67 = vector.extract_strided_slice %1 {offsets = [0, 88], sizes = [8, 8], strides = [1, 1]} : vector<8x96xbf16> to vector<8x8xbf16>
    %cst_18 = arith.constant dense<0.000000e+00> : vector<8x8xf32>
    %68 = tpu.matmul %65, %66, %cst_18 {dimension_numbers = #tpu.dot_dimension_numbers<[1], [1], [0], [0], [0, 0, 1, 0], [], []>} : vector<8x8xbf16>, vector<8x8xbf16>, vector<8x8xf32> -> vector<8x8xf32>
    %cst_19 = arith.constant 0.353553385 : f32
    %69 = vector.broadcast %cst_19 : f32 to vector<8x8xf32>
    %70 = arith.mulf %68, %69 : vector<8x8xf32>
    %71 = arith.addf %70, %7 : vector<8x8xf32>
    %cst_20 = arith.constant dense<0xFF800000> : vector<8xf32>
    %72 = vector.multi_reduction <maximumf>, %71, %cst_20 [1] : vector<8x8xf32> to vector<8xf32>
    %73 = vector.shape_cast %72 : vector<8xf32> to vector<8x1xf32>
    %74 = vector.broadcast %73 : vector<8x1xf32> to vector<8x8xf32>
    %75 = arith.subf %71, %74 : vector<8x8xf32>
    %76 = math.exp %75 : vector<8x8xf32>
    %cst_21 = arith.constant dense<0.000000e+00> : vector<8xf32>
    %77 = vector.multi_reduction <add>, %76, %cst_21 [1] : vector<8x8xf32> to vector<8xf32>
    %78 = vector.shape_cast %77 : vector<8xf32> to vector<8x1xf32>
    %79 = tpu.reciprocal %78 {approx = true} : vector<8x1xf32> -> vector<8x1xf32>
    %80 = vector.broadcast %79 : vector<8x1xf32> to vector<8x8xf32>
    %81 = arith.mulf %76, %80 : vector<8x8xf32>
    %82 = arith.truncf %81 : vector<8x8xf32> to vector<8x8xbf16>
    %cst_22 = arith.constant dense<0.000000e+00> : vector<8x8xf32>
    %83 = tpu.matmul %82, %67, %cst_22 {dimension_numbers = #tpu.dot_dimension_numbers<[1], [0], [0], [1], [0, 0, 1, 1], [], []>} : vector<8x8xbf16>, vector<8x8xbf16>, vector<8x8xf32> -> vector<8x8xf32>
    %84 = tpu.concatenate %26, %45, %64, %83 in 1 : vector<8x8xf32>, vector<8x8xf32>, vector<8x8xf32>, vector<8x8xf32> -> vector<8x32xf32>
    %85 = arith.truncf %84 : vector<8x32xf32> to vector<8x32xbf16>
    %c0_23 = arith.constant 0 : index
    %c0_24 = arith.constant 0 : index
    %c0_25 = arith.constant 0 : index
    %86 = vector.load %arg2[%c0_23, %c0_24, %c0_25] : memref<1x8x32xbf16, #tpu.memory_space<vmem>>, vector<1x8x32xbf16>
    %87 = vector.shape_cast %86 : vector<1x8x32xbf16> to vector<8x32xbf16>
    %88 = vector.shape_cast %85 : vector<8x32xbf16> to vector<1x8x32xbf16>
    tpu.vector_store %arg2[%c0_23, %c0_24, %c0_25], %88 {strides = array<i32>} : memref<1x8x32xbf16, #tpu.memory_space<vmem>>, vector<1x8x32xbf16>,
    return
  }
  func.func @transform_0(%arg0: i32) -> (i32, i32, i32) {
    %c0_i32 = arith.constant 0 : i32
    %c0_i32_0 = arith.constant 0 : i32
    %c0_i32_1 = arith.constant 0 : i32
    return %arg0, %c0_i32, %c0_i32_0 : i32, i32, i32
  }
  func.func @transform_1(%arg0: i32) -> (i32, i32, i32) {
    %c0_i32 = arith.constant 0 : i32
    %c0_i32_0 = arith.constant 0 : i32
    %c0_i32_1 = arith.constant 0 : i32
    return %arg0, %c0_i32, %c0_i32_0 : i32, i32, i32
  }
}

module attributes {stable_mosaic.version = 11 : i64} {
  func.func @_matmul_add_ln_kernel(%arg0: i32, %arg1: i32, %arg2: memref<16x32xbf16, #tpu.memory_space<vmem>>, %arg3: memref<32x32xbf16, #tpu.memory_space<vmem>>, %arg4: memref<1x32xf32, #tpu.memory_space<vmem>>, %arg5: memref<16x32xf32, #tpu.memory_space<vmem>>, %arg6: memref<1x32xf32, #tpu.memory_space<vmem>>, %arg7: memref<1x32xf32, #tpu.memory_space<vmem>>, %arg8: memref<16x32xf32, #tpu.memory_space<vmem>>, %arg9: memref<16x32xf32, #tpu.memory_space<vmem>>) attributes {dimension_semantics = [#tpu.dimension_semantics<parallel>, #tpu.dimension_semantics<arbitrary>], iteration_bounds = array<i64: 1, 1>, scalar_prefetch = 0 : i64, scratch_operands = 1 : i64, tpu.core_type = #tpu.core_type<tc>, window_params = [{transform_indices = @transform_0, window_bounds = array<i64: 16, 32>}, {transform_indices = @transform_1, window_bounds = array<i64: 32, 32>}, {pipeline_mode = #tpu.pipeline_mode<synchronous>, transform_indices = @transform_2, window_bounds = array<i64: 1, 32>}, {transform_indices = @transform_3, window_bounds = array<i64: 16, 32>}, {pipeline_mode = #tpu.pipeline_mode<synchronous>, transform_indices = @transform_4, window_bounds = array<i64: 1, 32>}, {pipeline_mode = #tpu.pipeline_mode<synchronous>, transform_indices = @transform_5, window_bounds = array<i64: 1, 32>}, {transform_indices = @transform_6, window_bounds = array<i64: 16, 32>}]} {
    %c0_i32 = arith.constant 0 : i32
    %0 = arith.cmpi eq, %arg1, %c0_i32 : i32
    %1 = arith.extui %0 : i1 to i32
    %c0_i32_0 = arith.constant 0 : i32
    %2 = arith.cmpi ne, %1, %c0_i32_0 : i32
    scf.if %2 {
      %cst_10 = arith.constant 0.000000e+00 : f32
      %12 = vector.broadcast %cst_10 : f32 to vector<16x32xf32>
      %c0_11 = arith.constant 0 : index
      %c0_12 = arith.constant 0 : index
      %13 = vector.load %arg9[%c0_11, %c0_12] : memref<16x32xf32, #tpu.memory_space<vmem>>, vector<16x32xf32>
      tpu.vector_store %arg9[%c0_11, %c0_12], %12 {strides = array<i32>} : memref<16x32xf32, #tpu.memory_space<vmem>>, vector<16x32xf32>,
    } else {
    }
    %c0 = arith.constant 0 : index
    %c0_1 = arith.constant 0 : index
    %3 = vector.load %arg9[%c0, %c0_1] : memref<16x32xf32, #tpu.memory_space<vmem>>, vector<16x32xf32>
    %c0_2 = arith.constant 0 : index
    %c0_3 = arith.constant 0 : index
    %4 = vector.load %arg2[%c0_2, %c0_3] : memref<16x32xbf16, #tpu.memory_space<vmem>>, vector<16x32xbf16>
    %c0_4 = arith.constant 0 : index
    %c0_5 = arith.constant 0 : index
    %5 = vector.load %arg3[%c0_4, %c0_5] : memref<32x32xbf16, #tpu.memory_space<vmem>>, vector<32x32xbf16>
    %cst = arith.constant dense<0.000000e+00> : vector<16x32xf32>
    %6 = tpu.matmul %4, %5, %cst {dimension_numbers = #tpu.dot_dimension_numbers<[1], [0], [0], [1], [0, 0, 1, 1], [], []>} : vector<16x32xbf16>, vector<32x32xbf16>, vector<16x32xf32> -> vector<16x32xf32>
    %7 = arith.addf %3, %6 : vector<16x32xf32>
    %c0_6 = arith.constant 0 : index
    %c0_7 = arith.constant 0 : index
    %8 = vector.load %arg9[%c0_6, %c0_7] : memref<16x32xf32, #tpu.memory_space<vmem>>, vector<16x32xf32>
    tpu.vector_store %arg9[%c0_6, %c0_7], %7 {strides = array<i32>} : memref<16x32xf32, #tpu.memory_space<vmem>>, vector<16x32xf32>,
    %c0_i32_8 = arith.constant 0 : i32
    %9 = arith.cmpi eq, %arg1, %c0_i32_8 : i32
    %10 = arith.extui %9 : i1 to i32
    %c0_i32_9 = arith.constant 0 : i32
    %11 = arith.cmpi ne, %10, %c0_i32_9 : i32
    scf.if %11 {
      %c0_10 = arith.constant 0 : index
      %c0_11 = arith.constant 0 : index
      %12 = vector.load %arg9[%c0_10, %c0_11] : memref<16x32xf32, #tpu.memory_space<vmem>>, vector<16x32xf32>
      %c0_12 = arith.constant 0 : index
      %c0_13 = arith.constant 0 : index
      %13 = vector.load %arg4[%c0_12, %c0_13] : memref<1x32xf32, #tpu.memory_space<vmem>>, vector<1x32xf32>
      %14 = vector.broadcast %13 : vector<1x32xf32> to vector<16x32xf32>
      %15 = arith.addf %12, %14 : vector<16x32xf32>
      %c0_14 = arith.constant 0 : index
      %c0_15 = arith.constant 0 : index
      %16 = vector.load %arg5[%c0_14, %c0_15] : memref<16x32xf32, #tpu.memory_space<vmem>>, vector<16x32xf32>
      %17 = arith.addf %15, %16 : vector<16x32xf32>
      %cst_16 = arith.constant dense<0.000000e+00> : vector<16xf32>
      %18 = vector.multi_reduction <add>, %17, %cst_16 [1] : vector<16x32xf32> to vector<16xf32>
      %19 = vector.shape_cast %18 : vector<16xf32> to vector<16x1xf32>
      %cst_17 = arith.constant 3.200000e+01 : f32
      %20 = vector.broadcast %cst_17 : f32 to vector<16x1xf32>
      %21 = arith.divf %19, %20 : vector<16x1xf32>
      %22 = vector.broadcast %21 : vector<16x1xf32> to vector<16x32xf32>
      %23 = arith.subf %17, %22 : vector<16x32xf32>
      %24 = arith.mulf %23, %23 : vector<16x32xf32>
      %cst_18 = arith.constant dense<0.000000e+00> : vector<16xf32>
      %25 = vector.multi_reduction <add>, %24, %cst_18 [1] : vector<16x32xf32> to vector<16xf32>
      %26 = vector.shape_cast %25 : vector<16xf32> to vector<16x1xf32>
      %cst_19 = arith.constant 3.200000e+01 : f32
      %27 = vector.broadcast %cst_19 : f32 to vector<16x1xf32>
      %28 = arith.divf %26, %27 : vector<16x1xf32>
      %29 = vector.broadcast %21 : vector<16x1xf32> to vector<16x32xf32>
      %30 = arith.subf %17, %29 : vector<16x32xf32>
      %cst_20 = arith.constant 9.99999974E-6 : f32
      %31 = vector.broadcast %cst_20 : f32 to vector<16x1xf32>
      %32 = arith.addf %28, %31 : vector<16x1xf32>
      %33 = math.rsqrt %32 : vector<16x1xf32>
      %34 = vector.broadcast %33 : vector<16x1xf32> to vector<16x32xf32>
      %35 = arith.mulf %30, %34 : vector<16x32xf32>
      %c0_21 = arith.constant 0 : index
      %c0_22 = arith.constant 0 : index
      %36 = vector.load %arg6[%c0_21, %c0_22] : memref<1x32xf32, #tpu.memory_space<vmem>>, vector<1x32xf32>
      %37 = vector.broadcast %36 : vector<1x32xf32> to vector<16x32xf32>
      %38 = arith.mulf %35, %37 : vector<16x32xf32>
      %c0_23 = arith.constant 0 : index
      %c0_24 = arith.constant 0 : index
      %39 = vector.load %arg7[%c0_23, %c0_24] : memref<1x32xf32, #tpu.memory_space<vmem>>, vector<1x32xf32>
      %40 = vector.broadcast %39 : vector<1x32xf32> to vector<16x32xf32>
      %41 = arith.addf %38, %40 : vector<16x32xf32>
      %c0_25 = arith.constant 0 : index
      %c0_26 = arith.constant 0 : index
      %42 = vector.load %arg8[%c0_25, %c0_26] : memref<16x32xf32, #tpu.memory_space<vmem>>, vector<16x32xf32>
      tpu.vector_store %arg8[%c0_25, %c0_26], %41 {strides = array<i32>} : memref<16x32xf32, #tpu.memory_space<vmem>>, vector<16x32xf32>,
    } else {
    }
    return
  }
  func.func @transform_0(%arg0: i32, %arg1: i32) -> (i32, i32) {
    %c0_i32 = arith.constant 0 : i32
    return %arg0, %arg1 : i32, i32
  }
  func.func @transform_1(%arg0: i32, %arg1: i32) -> (i32, i32) {
    %c0_i32 = arith.constant 0 : i32
    %c0_i32_0 = arith.constant 0 : i32
    return %arg1, %c0_i32 : i32, i32
  }
  func.func @transform_2(%arg0: i32, %arg1: i32) -> (i32, i32) {
    %c0_i32 = arith.constant 0 : i32
    %c0_i32_0 = arith.constant 0 : i32
    %c0_i32_1 = arith.constant 0 : i32
    return %c0_i32, %c0_i32_0 : i32, i32
  }
  func.func @transform_3(%arg0: i32, %arg1: i32) -> (i32, i32) {
    %c0_i32 = arith.constant 0 : i32
    %c0_i32_0 = arith.constant 0 : i32
    return %arg0, %c0_i32 : i32, i32
  }
  func.func @transform_4(%arg0: i32, %arg1: i32) -> (i32, i32) {
    %c0_i32 = arith.constant 0 : i32
    %c0_i32_0 = arith.constant 0 : i32
    %c0_i32_1 = arith.constant 0 : i32
    return %c0_i32, %c0_i32_0 : i32, i32
  }
  func.func @transform_5(%arg0: i32, %arg1: i32) -> (i32, i32) {
    %c0_i32 = arith.constant 0 : i32
    %c0_i32_0 = arith.constant 0 : i32
    %c0_i32_1 = arith.constant 0 : i32
    return %c0_i32, %c0_i32_0 : i32, i32
  }
  func.func @transform_6(%arg0: i32, %arg1: i32) -> (i32, i32) {
    %c0_i32 = arith.constant 0 : i32
    %c0_i32_0 = arith.constant 0 : i32
    return %arg0, %c0_i32 : i32, i32
  }
}

module attributes {stable_mosaic.version = 11 : i64} {
  func.func @_matmul_kernel(%arg0: i32, %arg1: i32, %arg2: i32, %arg3: memref<16x32xf32, #tpu.memory_space<vmem>>, %arg4: memref<32x32xbf16, #tpu.memory_space<vmem>>, %arg5: memref<1x32xf32, #tpu.memory_space<vmem>>, %arg6: memref<16x32xbf16, #tpu.memory_space<vmem>>, %arg7: memref<16x32xf32, #tpu.memory_space<vmem>>) attributes {dimension_semantics = [#tpu.dimension_semantics<parallel>, #tpu.dimension_semantics<parallel>, #tpu.dimension_semantics<arbitrary>], iteration_bounds = array<i64: 1, 1, 1>, scalar_prefetch = 0 : i64, scratch_operands = 1 : i64, tpu.core_type = #tpu.core_type<tc>, window_params = [{transform_indices = @transform_0, window_bounds = array<i64: 16, 32>}, {transform_indices = @transform_1, window_bounds = array<i64: 32, 32>}, {transform_indices = @transform_2, window_bounds = array<i64: 1, 32>}, {transform_indices = @transform_3, window_bounds = array<i64: 16, 32>}]} {
    %c0_i32 = arith.constant 0 : i32
    %0 = arith.cmpi eq, %arg2, %c0_i32 : i32
    %1 = arith.extui %0 : i1 to i32
    %c0_i32_0 = arith.constant 0 : i32
    %2 = arith.cmpi ne, %1, %c0_i32_0 : i32
    scf.if %2 {
      %cst_10 = arith.constant 0.000000e+00 : f32
      %13 = vector.broadcast %cst_10 : f32 to vector<16x32xf32>
      %c0_11 = arith.constant 0 : index
      %c0_12 = arith.constant 0 : index
      %14 = vector.load %arg7[%c0_11, %c0_12] : memref<16x32xf32, #tpu.memory_space<vmem>>, vector<16x32xf32>
      tpu.vector_store %arg7[%c0_11, %c0_12], %13 {strides = array<i32>} : memref<16x32xf32, #tpu.memory_space<vmem>>, vector<16x32xf32>,
    } else {
    }
    %c0 = arith.constant 0 : index
    %c0_1 = arith.constant 0 : index
    %3 = vector.load %arg7[%c0, %c0_1] : memref<16x32xf32, #tpu.memory_space<vmem>>, vector<16x32xf32>
    %c0_2 = arith.constant 0 : index
    %c0_3 = arith.constant 0 : index
    %4 = vector.load %arg3[%c0_2, %c0_3] : memref<16x32xf32, #tpu.memory_space<vmem>>, vector<16x32xf32>
    %5 = arith.truncf %4 : vector<16x32xf32> to vector<16x32xbf16>
    %c0_4 = arith.constant 0 : index
    %c0_5 = arith.constant 0 : index
    %6 = vector.load %arg4[%c0_4, %c0_5] : memref<32x32xbf16, #tpu.memory_space<vmem>>, vector<32x32xbf16>
    %cst = arith.constant dense<0.000000e+00> : vector<16x32xf32>
    %7 = tpu.matmul %5, %6, %cst {dimension_numbers = #tpu.dot_dimension_numbers<[1], [0], [0], [1], [0, 0, 1, 1], [], []>} : vector<16x32xbf16>, vector<32x32xbf16>, vector<16x32xf32> -> vector<16x32xf32>
    %8 = arith.addf %3, %7 : vector<16x32xf32>
    %c0_6 = arith.constant 0 : index
    %c0_7 = arith.constant 0 : index
    %9 = vector.load %arg7[%c0_6, %c0_7] : memref<16x32xf32, #tpu.memory_space<vmem>>, vector<16x32xf32>
    tpu.vector_store %arg7[%c0_6, %c0_7], %8 {strides = array<i32>} : memref<16x32xf32, #tpu.memory_space<vmem>>, vector<16x32xf32>,
    %c0_i32_8 = arith.constant 0 : i32
    %10 = arith.cmpi eq, %arg2, %c0_i32_8 : i32
    %11 = arith.extui %10 : i1 to i32
    %c0_i32_9 = arith.constant 0 : i32
    %12 = arith.cmpi ne, %11, %c0_i32_9 : i32
    scf.if %12 {
      %c0_10 = arith.constant 0 : index
      %c0_11 = arith.constant 0 : index
      %13 = vector.load %arg7[%c0_10, %c0_11] : memref<16x32xf32, #tpu.memory_space<vmem>>, vector<16x32xf32>
      %c0_12 = arith.constant 0 : index
      %c0_13 = arith.constant 0 : index
      %14 = vector.load %arg5[%c0_12, %c0_13] : memref<1x32xf32, #tpu.memory_space<vmem>>, vector<1x32xf32>
      %15 = vector.broadcast %14 : vector<1x32xf32> to vector<16x32xf32>
      %16 = arith.addf %13, %15 : vector<16x32xf32>
      %17 = arith.truncf %16 : vector<16x32xf32> to vector<16x32xbf16>
      %c0_14 = arith.constant 0 : index
      %c0_15 = arith.constant 0 : index
      %18 = vector.load %arg6[%c0_14, %c0_15] : memref<16x32xbf16, #tpu.memory_space<vmem>>, vector<16x32xbf16>
      tpu.vector_store %arg6[%c0_14, %c0_15], %17 {strides = array<i32>} : memref<16x32xbf16, #tpu.memory_space<vmem>>, vector<16x32xbf16>,
    } else {
    }
    return
  }
  func.func @transform_0(%arg0: i32, %arg1: i32, %arg2: i32) -> (i32, i32) {
    %c0_i32 = arith.constant 0 : i32
    return %arg0, %arg2 : i32, i32
  }
  func.func @transform_1(%arg0: i32, %arg1: i32, %arg2: i32) -> (i32, i32) {
    %c0_i32 = arith.constant 0 : i32
    return %arg2, %arg1 : i32, i32
  }
  func.func @transform_2(%arg0: i32, %arg1: i32, %arg2: i32) -> (i32, i32) {
    %c0_i32 = arith.constant 0 : i32
    %c0_i32_0 = arith.constant 0 : i32
    return %c0_i32, %arg1 : i32, i32
  }
  func.func @transform_3(%arg0: i32, %arg1: i32, %arg2: i32) -> (i32, i32) {
    %c0_i32 = arith.constant 0 : i32
    return %arg0, %arg1 : i32, i32
  }
}

module attributes {stable_mosaic.version = 11 : i64} {
  func.func @_matmul_kernel(%arg0: i32, %arg1: i32, %arg2: i32, %arg3: memref<32x32xf32, #tpu.memory_space<vmem>>, %arg4: memref<32x64xbf16, #tpu.memory_space<vmem>>, %arg5: memref<1x64xf32, #tpu.memory_space<vmem>>, %arg6: memref<32x64xbf16, #tpu.memory_space<vmem>>, %arg7: memref<32x64xf32, #tpu.memory_space<vmem>>) attributes {dimension_semantics = [#tpu.dimension_semantics<parallel>, #tpu.dimension_semantics<parallel>, #tpu.dimension_semantics<arbitrary>], iteration_bounds = array<i64: 1, 1, 1>, scalar_prefetch = 0 : i64, scratch_operands = 1 : i64, tpu.core_type = #tpu.core_type<tc>, window_params = [{transform_indices = @transform_0, window_bounds = array<i64: 32, 32>}, {transform_indices = @transform_1, window_bounds = array<i64: 32, 64>}, {transform_indices = @transform_2, window_bounds = array<i64: 1, 64>}, {transform_indices = @transform_3, window_bounds = array<i64: 32, 64>}]} {
    %c0_i32 = arith.constant 0 : i32
    %0 = arith.cmpi eq, %arg2, %c0_i32 : i32
    %1 = arith.extui %0 : i1 to i32
    %c0_i32_0 = arith.constant 0 : i32
    %2 = arith.cmpi ne, %1, %c0_i32_0 : i32
    scf.if %2 {
      %cst_10 = arith.constant 0.000000e+00 : f32
      %13 = vector.broadcast %cst_10 : f32 to vector<32x64xf32>
      %c0_11 = arith.constant 0 : index
      %c0_12 = arith.constant 0 : index
      %14 = vector.load %arg7[%c0_11, %c0_12] : memref<32x64xf32, #tpu.memory_space<vmem>>, vector<32x64xf32>
      tpu.vector_store %arg7[%c0_11, %c0_12], %13 {strides = array<i32>} : memref<32x64xf32, #tpu.memory_space<vmem>>, vector<32x64xf32>,
    } else {
    }
    %c0 = arith.constant 0 : index
    %c0_1 = arith.constant 0 : index
    %3 = vector.load %arg7[%c0, %c0_1] : memref<32x64xf32, #tpu.memory_space<vmem>>, vector<32x64xf32>
    %c0_2 = arith.constant 0 : index
    %c0_3 = arith.constant 0 : index
    %4 = vector.load %arg3[%c0_2, %c0_3] : memref<32x32xf32, #tpu.memory_space<vmem>>, vector<32x32xf32>
    %5 = arith.truncf %4 : vector<32x32xf32> to vector<32x32xbf16>
    %c0_4 = arith.constant 0 : index
    %c0_5 = arith.constant 0 : index
    %6 = vector.load %arg4[%c0_4, %c0_5] : memref<32x64xbf16, #tpu.memory_space<vmem>>, vector<32x64xbf16>
    %cst = arith.constant dense<0.000000e+00> : vector<32x64xf32>
    %7 = tpu.matmul %5, %6, %cst {dimension_numbers = #tpu.dot_dimension_numbers<[1], [0], [0], [1], [0, 0, 1, 1], [], []>} : vector<32x32xbf16>, vector<32x64xbf16>, vector<32x64xf32> -> vector<32x64xf32>
    %8 = arith.addf %3, %7 : vector<32x64xf32>
    %c0_6 = arith.constant 0 : index
    %c0_7 = arith.constant 0 : index
    %9 = vector.load %arg7[%c0_6, %c0_7] : memref<32x64xf32, #tpu.memory_space<vmem>>, vector<32x64xf32>
    tpu.vector_store %arg7[%c0_6, %c0_7], %8 {strides = array<i32>} : memref<32x64xf32, #tpu.memory_space<vmem>>, vector<32x64xf32>,
    %c0_i32_8 = arith.constant 0 : i32
    %10 = arith.cmpi eq, %arg2, %c0_i32_8 : i32
    %11 = arith.extui %10 : i1 to i32
    %c0_i32_9 = arith.constant 0 : i32
    %12 = arith.cmpi ne, %11, %c0_i32_9 : i32
    scf.if %12 {
      %c0_10 = arith.constant 0 : index
      %c0_11 = arith.constant 0 : index
      %13 = vector.load %arg7[%c0_10, %c0_11] : memref<32x64xf32, #tpu.memory_space<vmem>>, vector<32x64xf32>
      %c0_12 = arith.constant 0 : index
      %c0_13 = arith.constant 0 : index
      %14 = vector.load %arg5[%c0_12, %c0_13] : memref<1x64xf32, #tpu.memory_space<vmem>>, vector<1x64xf32>
      %15 = vector.broadcast %14 : vector<1x64xf32> to vector<32x64xf32>
      %16 = arith.addf %13, %15 : vector<32x64xf32>
      %17 = arith.truncf %16 : vector<32x64xf32> to vector<32x64xbf16>
      %c0_14 = arith.constant 0 : index
      %c0_15 = arith.constant 0 : index
      %18 = vector.load %arg6[%c0_14, %c0_15] : memref<32x64xbf16, #tpu.memory_space<vmem>>, vector<32x64xbf16>
      tpu.vector_store %arg6[%c0_14, %c0_15], %17 {strides = array<i32>} : memref<32x64xbf16, #tpu.memory_space<vmem>>, vector<32x64xbf16>,
    } else {
    }
    return
  }
  func.func @transform_0(%arg0: i32, %arg1: i32, %arg2: i32) -> (i32, i32) {
    %c0_i32 = arith.constant 0 : i32
    return %arg0, %arg2 : i32, i32
  }
  func.func @transform_1(%arg0: i32, %arg1: i32, %arg2: i32) -> (i32, i32) {
    %c0_i32 = arith.constant 0 : i32
    return %arg2, %arg1 : i32, i32
  }
  func.func @transform_2(%arg0: i32, %arg1: i32, %arg2: i32) -> (i32, i32) {
    %c0_i32 = arith.constant 0 : i32
    %c0_i32_0 = arith.constant 0 : i32
    return %c0_i32, %arg1 : i32, i32
  }
  func.func @transform_3(%arg0: i32, %arg1: i32, %arg2: i32) -> (i32, i32) {
    %c0_i32 = arith.constant 0 : i32
    return %arg0, %arg1 : i32, i32
  }
}

module attributes {stable_mosaic.version = 11 : i64} {
  func.func @_matmul_kernel(%arg0: i32, %arg1: i32, %arg2: i32, %arg3: memref<16x32xf32, #tpu.memory_space<vmem>>, %arg4: memref<32x64xbf16, #tpu.memory_space<vmem>>, %arg5: memref<1x64xf32, #tpu.memory_space<vmem>>, %arg6: memref<16x64xbf16, #tpu.memory_space<vmem>>, %arg7: memref<16x64xf32, #tpu.memory_space<vmem>>) attributes {dimension_semantics = [#tpu.dimension_semantics<parallel>, #tpu.dimension_semantics<parallel>, #tpu.dimension_semantics<arbitrary>], iteration_bounds = array<i64: 1, 1, 1>, scalar_prefetch = 0 : i64, scratch_operands = 1 : i64, tpu.core_type = #tpu.core_type<tc>, window_params = [{transform_indices = @transform_0, window_bounds = array<i64: 16, 32>}, {transform_indices = @transform_1, window_bounds = array<i64: 32, 64>}, {transform_indices = @transform_2, window_bounds = array<i64: 1, 64>}, {transform_indices = @transform_3, window_bounds = array<i64: 16, 64>}]} {
    %c0_i32 = arith.constant 0 : i32
    %0 = arith.cmpi eq, %arg2, %c0_i32 : i32
    %1 = arith.extui %0 : i1 to i32
    %c0_i32_0 = arith.constant 0 : i32
    %2 = arith.cmpi ne, %1, %c0_i32_0 : i32
    scf.if %2 {
      %cst_10 = arith.constant 0.000000e+00 : f32
      %13 = vector.broadcast %cst_10 : f32 to vector<16x64xf32>
      %c0_11 = arith.constant 0 : index
      %c0_12 = arith.constant 0 : index
      %14 = vector.load %arg7[%c0_11, %c0_12] : memref<16x64xf32, #tpu.memory_space<vmem>>, vector<16x64xf32>
      tpu.vector_store %arg7[%c0_11, %c0_12], %13 {strides = array<i32>} : memref<16x64xf32, #tpu.memory_space<vmem>>, vector<16x64xf32>,
    } else {
    }
    %c0 = arith.constant 0 : index
    %c0_1 = arith.constant 0 : index
    %3 = vector.load %arg7[%c0, %c0_1] : memref<16x64xf32, #tpu.memory_space<vmem>>, vector<16x64xf32>
    %c0_2 = arith.constant 0 : index
    %c0_3 = arith.constant 0 : index
    %4 = vector.load %arg3[%c0_2, %c0_3] : memref<16x32xf32, #tpu.memory_space<vmem>>, vector<16x32xf32>
    %5 = arith.truncf %4 : vector<16x32xf32> to vector<16x32xbf16>
    %c0_4 = arith.constant 0 : index
    %c0_5 = arith.constant 0 : index
    %6 = vector.load %arg4[%c0_4, %c0_5] : memref<32x64xbf16, #tpu.memory_space<vmem>>, vector<32x64xbf16>
    %cst = arith.constant dense<0.000000e+00> : vector<16x64xf32>
    %7 = tpu.matmul %5, %6, %cst {dimension_numbers = #tpu.dot_dimension_numbers<[1], [0], [0], [1], [0, 0, 1, 1], [], []>} : vector<16x32xbf16>, vector<32x64xbf16>, vector<16x64xf32> -> vector<16x64xf32>
    %8 = arith.addf %3, %7 : vector<16x64xf32>
    %c0_6 = arith.constant 0 : index
    %c0_7 = arith.constant 0 : index
    %9 = vector.load %arg7[%c0_6, %c0_7] : memref<16x64xf32, #tpu.memory_space<vmem>>, vector<16x64xf32>
    tpu.vector_store %arg7[%c0_6, %c0_7], %8 {strides = array<i32>} : memref<16x64xf32, #tpu.memory_space<vmem>>, vector<16x64xf32>,
    %c0_i32_8 = arith.constant 0 : i32
    %10 = arith.cmpi eq, %arg2, %c0_i32_8 : i32
    %11 = arith.extui %10 : i1 to i32
    %c0_i32_9 = arith.constant 0 : i32
    %12 = arith.cmpi ne, %11, %c0_i32_9 : i32
    scf.if %12 {
      %c0_10 = arith.constant 0 : index
      %c0_11 = arith.constant 0 : index
      %13 = vector.load %arg7[%c0_10, %c0_11] : memref<16x64xf32, #tpu.memory_space<vmem>>, vector<16x64xf32>
      %c0_12 = arith.constant 0 : index
      %c0_13 = arith.constant 0 : index
      %14 = vector.load %arg5[%c0_12, %c0_13] : memref<1x64xf32, #tpu.memory_space<vmem>>, vector<1x64xf32>
      %15 = vector.broadcast %14 : vector<1x64xf32> to vector<16x64xf32>
      %16 = arith.addf %13, %15 : vector<16x64xf32>
      %cst_14 = arith.constant 0.000000e+00 : f32
      %17 = vector.broadcast %cst_14 : f32 to vector<16x64xf32>
      %18 = arith.maximumf %16, %17 : vector<16x64xf32>
      %19 = arith.truncf %18 : vector<16x64xf32> to vector<16x64xbf16>
      %c0_15 = arith.constant 0 : index
      %c0_16 = arith.constant 0 : index
      %20 = vector.load %arg6[%c0_15, %c0_16] : memref<16x64xbf16, #tpu.memory_space<vmem>>, vector<16x64xbf16>
      tpu.vector_store %arg6[%c0_15, %c0_16], %19 {strides = array<i32>} : memref<16x64xbf16, #tpu.memory_space<vmem>>, vector<16x64xbf16>,
    } else {
    }
    return
  }
  func.func @transform_0(%arg0: i32, %arg1: i32, %arg2: i32) -> (i32, i32) {
    %c0_i32 = arith.constant 0 : i32
    return %arg0, %arg2 : i32, i32
  }
  func.func @transform_1(%arg0: i32, %arg1: i32, %arg2: i32) -> (i32, i32) {
    %c0_i32 = arith.constant 0 : i32
    return %arg2, %arg1 : i32, i32
  }
  func.func @transform_2(%arg0: i32, %arg1: i32, %arg2: i32) -> (i32, i32) {
    %c0_i32 = arith.constant 0 : i32
    %c0_i32_0 = arith.constant 0 : i32
    return %c0_i32, %arg1 : i32, i32
  }
  func.func @transform_3(%arg0: i32, %arg1: i32, %arg2: i32) -> (i32, i32) {
    %c0_i32 = arith.constant 0 : i32
    return %arg0, %arg1 : i32, i32
  }
}

module attributes {stable_mosaic.version = 11 : i64} {
  func.func @_cross_attn_kernel(%arg0: i32, %arg1: memref<1x8x32xbf16, #tpu.memory_space<vmem>>, %arg2: memref<1x16x64xbf16, #tpu.memory_space<vmem>>, %arg3: memref<1x8x32xbf16, #tpu.memory_space<vmem>>, %arg4: memref<1x8x16xf32, #tpu.memory_space<vmem>>) attributes {dimension_semantics = [#tpu.dimension_semantics<parallel>], iteration_bounds = array<i64: 2>, scalar_prefetch = 0 : i64, scratch_operands = 0 : i64, tpu.core_type = #tpu.core_type<tc>, window_params = [{transform_indices = @transform_0, window_bounds = array<i64: 1, 8, 32>}, {transform_indices = @transform_1, window_bounds = array<i64: 1, 16, 64>}, {transform_indices = @transform_2, window_bounds = array<i64: 1, 8, 32>}, {transform_indices = @transform_3, window_bounds = array<i64: 1, 8, 16>}]} {
    %c0 = arith.constant 0 : index
    %c0_0 = arith.constant 0 : index
    %c0_1 = arith.constant 0 : index
    %0 = vector.load %arg1[%c0, %c0_0, %c0_1] : memref<1x8x32xbf16, #tpu.memory_space<vmem>>, vector<1x8x32xbf16>
    %1 = vector.shape_cast %0 : vector<1x8x32xbf16> to vector<8x32xbf16>
    %c0_2 = arith.constant 0 : index
    %c0_3 = arith.constant 0 : index
    %c0_4 = arith.constant 0 : index
    %2 = vector.load %arg2[%c0_2, %c0_3, %c0_4] : memref<1x16x64xbf16, #tpu.memory_space<vmem>>, vector<1x16x64xbf16>
    %3 = vector.shape_cast %2 : vector<1x16x64xbf16> to vector<16x64xbf16>
    %cst = arith.constant 0.000000e+00 : f32
    %4 = vector.broadcast %cst : f32 to vector<8x16xf32>
    %5 = vector.extract_strided_slice %1 {offsets = [0, 0], sizes = [8, 8], strides = [1, 1]} : vector<8x32xbf16> to vector<8x8xbf16>
    %6 = vector.extract_strided_slice %3 {offsets = [0, 0], sizes = [16, 8], strides = [1, 1]} : vector<16x64xbf16> to vector<16x8xbf16>
    %7 = vector.extract_strided_slice %3 {offsets = [0, 32], sizes = [16, 8], strides = [1, 1]} : vector<16x64xbf16> to vector<16x8xbf16>
    %cst_5 = arith.constant dense<0.000000e+00> : vector<8x16xf32>
    %8 = tpu.matmul %5, %6, %cst_5 {dimension_numbers = #tpu.dot_dimension_numbers<[1], [1], [0], [0], [0, 0, 1, 0], [], []>} : vector<8x8xbf16>, vector<16x8xbf16>, vector<8x16xf32> -> vector<8x16xf32>
    %cst_6 = arith.constant 0.353553385 : f32
    %9 = vector.broadcast %cst_6 : f32 to vector<8x16xf32>
    %10 = arith.mulf %8, %9 : vector<8x16xf32>
    %cst_7 = arith.constant dense<0xFF800000> : vector<8xf32>
    %11 = vector.multi_reduction <maximumf>, %10, %cst_7 [1] : vector<8x16xf32> to vector<8xf32>
    %12 = vector.shape_cast %11 : vector<8xf32> to vector<8x1xf32>
    %13 = vector.broadcast %12 : vector<8x1xf32> to vector<8x16xf32>
    %14 = arith.subf %10, %13 : vector<8x16xf32>
    %15 = math.exp %14 : vector<8x16xf32>
    %cst_8 = arith.constant dense<0.000000e+00> : vector<8xf32>
    %16 = vector.multi_reduction <add>, %15, %cst_8 [1] : vector<8x16xf32> to vector<8xf32>
    %17 = vector.shape_cast %16 : vector<8xf32> to vector<8x1xf32>
    %18 = tpu.reciprocal %17 {approx = true} : vector<8x1xf32> -> vector<8x1xf32>
    %19 = vector.broadcast %18 : vector<8x1xf32> to vector<8x16xf32>
    %20 = arith.mulf %15, %19 : vector<8x16xf32>
    %21 = arith.addf %4, %20 : vector<8x16xf32>
    %22 = arith.truncf %20 : vector<8x16xf32> to vector<8x16xbf16>
    %cst_9 = arith.constant dense<0.000000e+00> : vector<8x8xf32>
    %23 = tpu.matmul %22, %7, %cst_9 {dimension_numbers = #tpu.dot_dimension_numbers<[1], [0], [0], [1], [0, 0, 1, 1], [], []>} : vector<8x16xbf16>, vector<16x8xbf16>, vector<8x8xf32> -> vector<8x8xf32>
    %24 = vector.extract_strided_slice %1 {offsets = [0, 8], sizes = [8, 8], strides = [1, 1]} : vector<8x32xbf16> to vector<8x8xbf16>
    %25 = vector.extract_strided_slice %3 {offsets = [0, 8], sizes = [16, 8], strides = [1, 1]} : vector<16x64xbf16> to vector<16x8xbf16>
    %26 = vector.extract_strided_slice %3 {offsets = [0, 40], sizes = [16, 8], strides = [1, 1]} : vector<16x64xbf16> to vector<16x8xbf16>
    %cst_10 = arith.constant dense<0.000000e+00> : vector<8x16xf32>
    %27 = tpu.matmul %24, %25, %cst_10 {dimension_numbers = #tpu.dot_dimension_numbers<[1], [1], [0], [0], [0, 0, 1, 0], [], []>} : vector<8x8xbf16>, vector<16x8xbf16>, vector<8x16xf32> -> vector<8x16xf32>
    %cst_11 = arith.constant 0.353553385 : f32
    %28 = vector.broadcast %cst_11 : f32 to vector<8x16xf32>
    %29 = arith.mulf %27, %28 : vector<8x16xf32>
    %cst_12 = arith.constant dense<0xFF800000> : vector<8xf32>
    %30 = vector.multi_reduction <maximumf>, %29, %cst_12 [1] : vector<8x16xf32> to vector<8xf32>
    %31 = vector.shape_cast %30 : vector<8xf32> to vector<8x1xf32>
    %32 = vector.broadcast %31 : vector<8x1xf32> to vector<8x16xf32>
    %33 = arith.subf %29, %32 : vector<8x16xf32>
    %34 = math.exp %33 : vector<8x16xf32>
    %cst_13 = arith.constant dense<0.000000e+00> : vector<8xf32>
    %35 = vector.multi_reduction <add>, %34, %cst_13 [1] : vector<8x16xf32> to vector<8xf32>
    %36 = vector.shape_cast %35 : vector<8xf32> to vector<8x1xf32>
    %37 = tpu.reciprocal %36 {approx = true} : vector<8x1xf32> -> vector<8x1xf32>
    %38 = vector.broadcast %37 : vector<8x1xf32> to vector<8x16xf32>
    %39 = arith.mulf %34, %38 : vector<8x16xf32>
    %40 = arith.addf %21, %39 : vector<8x16xf32>
    %41 = arith.truncf %39 : vector<8x16xf32> to vector<8x16xbf16>
    %cst_14 = arith.constant dense<0.000000e+00> : vector<8x8xf32>
    %42 = tpu.matmul %41, %26, %cst_14 {dimension_numbers = #tpu.dot_dimension_numbers<[1], [0], [0], [1], [0, 0, 1, 1], [], []>} : vector<8x16xbf16>, vector<16x8xbf16>, vector<8x8xf32> -> vector<8x8xf32>
    %43 = vector.extract_strided_slice %1 {offsets = [0, 16], sizes = [8, 8], strides = [1, 1]} : vector<8x32xbf16> to vector<8x8xbf16>
    %44 = vector.extract_strided_slice %3 {offsets = [0, 16], sizes = [16, 8], strides = [1, 1]} : vector<16x64xbf16> to vector<16x8xbf16>
    %45 = vector.extract_strided_slice %3 {offsets = [0, 48], sizes = [16, 8], strides = [1, 1]} : vector<16x64xbf16> to vector<16x8xbf16>
    %cst_15 = arith.constant dense<0.000000e+00> : vector<8x16xf32>
    %46 = tpu.matmul %43, %44, %cst_15 {dimension_numbers = #tpu.dot_dimension_numbers<[1], [1], [0], [0], [0, 0, 1, 0], [], []>} : vector<8x8xbf16>, vector<16x8xbf16>, vector<8x16xf32> -> vector<8x16xf32>
    %cst_16 = arith.constant 0.353553385 : f32
    %47 = vector.broadcast %cst_16 : f32 to vector<8x16xf32>
    %48 = arith.mulf %46, %47 : vector<8x16xf32>
    %cst_17 = arith.constant dense<0xFF800000> : vector<8xf32>
    %49 = vector.multi_reduction <maximumf>, %48, %cst_17 [1] : vector<8x16xf32> to vector<8xf32>
    %50 = vector.shape_cast %49 : vector<8xf32> to vector<8x1xf32>
    %51 = vector.broadcast %50 : vector<8x1xf32> to vector<8x16xf32>
    %52 = arith.subf %48, %51 : vector<8x16xf32>
    %53 = math.exp %52 : vector<8x16xf32>
    %cst_18 = arith.constant dense<0.000000e+00> : vector<8xf32>
    %54 = vector.multi_reduction <add>, %53, %cst_18 [1] : vector<8x16xf32> to vector<8xf32>
    %55 = vector.shape_cast %54 : vector<8xf32> to vector<8x1xf32>
    %56 = tpu.reciprocal %55 {approx = true} : vector<8x1xf32> -> vector<8x1xf32>
    %57 = vector.broadcast %56 : vector<8x1xf32> to vector<8x16xf32>
    %58 = arith.mulf %53, %57 : vector<8x16xf32>
    %59 = arith.addf %40, %58 : vector<8x16xf32>
    %60 = arith.truncf %58 : vector<8x16xf32> to vector<8x16xbf16>
    %cst_19 = arith.constant dense<0.000000e+00> : vector<8x8xf32>
    %61 = tpu.matmul %60, %45, %cst_19 {dimension_numbers = #tpu.dot_dimension_numbers<[1], [0], [0], [1], [0, 0, 1, 1], [], []>} : vector<8x16xbf16>, vector<16x8xbf16>, vector<8x8xf32> -> vector<8x8xf32>
    %62 = vector.extract_strided_slice %1 {offsets = [0, 24], sizes = [8, 8], strides = [1, 1]} : vector<8x32xbf16> to vector<8x8xbf16>
    %63 = vector.extract_strided_slice %3 {offsets = [0, 24], sizes = [16, 8], strides = [1, 1]} : vector<16x64xbf16> to vector<16x8xbf16>
    %64 = vector.extract_strided_slice %3 {offsets = [0, 56], sizes = [16, 8], strides = [1, 1]} : vector<16x64xbf16> to vector<16x8xbf16>
    %cst_20 = arith.constant dense<0.000000e+00> : vector<8x16xf32>
    %65 = tpu.matmul %62, %63, %cst_20 {dimension_numbers = #tpu.dot_dimension_numbers<[1], [1], [0], [0], [0, 0, 1, 0], [], []>} : vector<8x8xbf16>, vector<16x8xbf16>, vector<8x16xf32> -> vector<8x16xf32>
    %cst_21 = arith.constant 0.353553385 : f32
    %66 = vector.broadcast %cst_21 : f32 to vector<8x16xf32>
    %67 = arith.mulf %65, %66 : vector<8x16xf32>
    %cst_22 = arith.constant dense<0xFF800000> : vector<8xf32>
    %68 = vector.multi_reduction <maximumf>, %67, %cst_22 [1] : vector<8x16xf32> to vector<8xf32>
    %69 = vector.shape_cast %68 : vector<8xf32> to vector<8x1xf32>
    %70 = vector.broadcast %69 : vector<8x1xf32> to vector<8x16xf32>
    %71 = arith.subf %67, %70 : vector<8x16xf32>
    %72 = math.exp %71 : vector<8x16xf32>
    %cst_23 = arith.constant dense<0.000000e+00> : vector<8xf32>
    %73 = vector.multi_reduction <add>, %72, %cst_23 [1] : vector<8x16xf32> to vector<8xf32>
    %74 = vector.shape_cast %73 : vector<8xf32> to vector<8x1xf32>
    %75 = tpu.reciprocal %74 {approx = true} : vector<8x1xf32> -> vector<8x1xf32>
    %76 = vector.broadcast %75 : vector<8x1xf32> to vector<8x16xf32>
    %77 = arith.mulf %72, %76 : vector<8x16xf32>
    %78 = arith.addf %59, %77 : vector<8x16xf32>
    %79 = arith.truncf %77 : vector<8x16xf32> to vector<8x16xbf16>
    %cst_24 = arith.constant dense<0.000000e+00> : vector<8x8xf32>
    %80 = tpu.matmul %79, %64, %cst_24 {dimension_numbers = #tpu.dot_dimension_numbers<[1], [0], [0], [1], [0, 0, 1, 1], [], []>} : vector<8x16xbf16>, vector<16x8xbf16>, vector<8x8xf32> -> vector<8x8xf32>
    %81 = tpu.concatenate %23, %42, %61, %80 in 1 : vector<8x8xf32>, vector<8x8xf32>, vector<8x8xf32>, vector<8x8xf32> -> vector<8x32xf32>
    %82 = arith.truncf %81 : vector<8x32xf32> to vector<8x32xbf16>
    %c0_25 = arith.constant 0 : index
    %c0_26 = arith.constant 0 : index
    %c0_27 = arith.constant 0 : index
    %83 = vector.load %arg3[%c0_25, %c0_26, %c0_27] : memref<1x8x32xbf16, #tpu.memory_space<vmem>>, vector<1x8x32xbf16>
    %84 = vector.shape_cast %83 : vector<1x8x32xbf16> to vector<8x32xbf16>
    %85 = vector.shape_cast %82 : vector<8x32xbf16> to vector<1x8x32xbf16>
    tpu.vector_store %arg3[%c0_25, %c0_26, %c0_27], %85 {strides = array<i32>} : memref<1x8x32xbf16, #tpu.memory_space<vmem>>, vector<1x8x32xbf16>,
    %cst_28 = arith.constant 2.500000e-01 : f32
    %86 = vector.broadcast %cst_28 : f32 to vector<8x16xf32>
    %87 = arith.mulf %78, %86 : vector<8x16xf32>
    %c0_29 = arith.constant 0 : index
    %c0_30 = arith.constant 0 : index
    %c0_31 = arith.constant 0 : index
    %88 = vector.load %arg4[%c0_29, %c0_30, %c0_31] : memref<1x8x16xf32, #tpu.memory_space<vmem>>, vector<1x8x16xf32>
    %89 = vector.shape_cast %88 : vector<1x8x16xf32> to vector<8x16xf32>
    %90 = vector.shape_cast %87 : vector<8x16xf32> to vector<1x8x16xf32>
    tpu.vector_store %arg4[%c0_29, %c0_30, %c0_31], %90 {strides = array<i32>} : memref<1x8x16xf32, #tpu.memory_space<vmem>>, vector<1x8x16xf32>,
    return
  }
  func.func @transform_0(%arg0: i32) -> (i32, i32, i32) {
    %c0_i32 = arith.constant 0 : i32
    %c0_i32_0 = arith.constant 0 : i32
    %c0_i32_1 = arith.constant 0 : i32
    return %arg0, %c0_i32, %c0_i32_0 : i32, i32, i32
  }
  func.func @transform_1(%arg0: i32) -> (i32, i32, i32) {
    %c0_i32 = arith.constant 0 : i32
    %c0_i32_0 = arith.constant 0 : i32
    %c0_i32_1 = arith.constant 0 : i32
    return %arg0, %c0_i32, %c0_i32_0 : i32, i32, i32
  }
  func.func @transform_2(%arg0: i32) -> (i32, i32, i32) {
    %c0_i32 = arith.constant 0 : i32
    %c0_i32_0 = arith.constant 0 : i32
    %c0_i32_1 = arith.constant 0 : i32
    return %arg0, %c0_i32, %c0_i32_0 : i32, i32, i32
  }
  func.func @transform_3(%arg0: i32) -> (i32, i32, i32) {
    %c0_i32 = arith.constant 0 : i32
    %c0_i32_0 = arith.constant 0 : i32
    %c0_i32_1 = arith.constant 0 : i32
    return %arg0, %c0_i32, %c0_i32_0 : i32, i32, i32
  }
}

module attributes {stable_mosaic.version = 11 : i64} {
  func.func @_matmul_add_ln_kernel(%arg0: i32, %arg1: i32, %arg2: memref<16x64xbf16, #tpu.memory_space<vmem>>, %arg3: memref<64x32xbf16, #tpu.memory_space<vmem>>, %arg4: memref<1x32xf32, #tpu.memory_space<vmem>>, %arg5: memref<16x32xf32, #tpu.memory_space<vmem>>, %arg6: memref<1x32xf32, #tpu.memory_space<vmem>>, %arg7: memref<1x32xf32, #tpu.memory_space<vmem>>, %arg8: memref<16x32xf32, #tpu.memory_space<vmem>>, %arg9: memref<16x32xf32, #tpu.memory_space<vmem>>) attributes {dimension_semantics = [#tpu.dimension_semantics<parallel>, #tpu.dimension_semantics<arbitrary>], iteration_bounds = array<i64: 1, 1>, scalar_prefetch = 0 : i64, scratch_operands = 1 : i64, tpu.core_type = #tpu.core_type<tc>, window_params = [{transform_indices = @transform_0, window_bounds = array<i64: 16, 64>}, {transform_indices = @transform_1, window_bounds = array<i64: 64, 32>}, {pipeline_mode = #tpu.pipeline_mode<synchronous>, transform_indices = @transform_2, window_bounds = array<i64: 1, 32>}, {transform_indices = @transform_3, window_bounds = array<i64: 16, 32>}, {pipeline_mode = #tpu.pipeline_mode<synchronous>, transform_indices = @transform_4, window_bounds = array<i64: 1, 32>}, {pipeline_mode = #tpu.pipeline_mode<synchronous>, transform_indices = @transform_5, window_bounds = array<i64: 1, 32>}, {transform_indices = @transform_6, window_bounds = array<i64: 16, 32>}]} {
    %c0_i32 = arith.constant 0 : i32
    %0 = arith.cmpi eq, %arg1, %c0_i32 : i32
    %1 = arith.extui %0 : i1 to i32
    %c0_i32_0 = arith.constant 0 : i32
    %2 = arith.cmpi ne, %1, %c0_i32_0 : i32
    scf.if %2 {
      %cst_10 = arith.constant 0.000000e+00 : f32
      %12 = vector.broadcast %cst_10 : f32 to vector<16x32xf32>
      %c0_11 = arith.constant 0 : index
      %c0_12 = arith.constant 0 : index
      %13 = vector.load %arg9[%c0_11, %c0_12] : memref<16x32xf32, #tpu.memory_space<vmem>>, vector<16x32xf32>
      tpu.vector_store %arg9[%c0_11, %c0_12], %12 {strides = array<i32>} : memref<16x32xf32, #tpu.memory_space<vmem>>, vector<16x32xf32>,
    } else {
    }
    %c0 = arith.constant 0 : index
    %c0_1 = arith.constant 0 : index
    %3 = vector.load %arg9[%c0, %c0_1] : memref<16x32xf32, #tpu.memory_space<vmem>>, vector<16x32xf32>
    %c0_2 = arith.constant 0 : index
    %c0_3 = arith.constant 0 : index
    %4 = vector.load %arg2[%c0_2, %c0_3] : memref<16x64xbf16, #tpu.memory_space<vmem>>, vector<16x64xbf16>
    %c0_4 = arith.constant 0 : index
    %c0_5 = arith.constant 0 : index
    %5 = vector.load %arg3[%c0_4, %c0_5] : memref<64x32xbf16, #tpu.memory_space<vmem>>, vector<64x32xbf16>
    %cst = arith.constant dense<0.000000e+00> : vector<16x32xf32>
    %6 = tpu.matmul %4, %5, %cst {dimension_numbers = #tpu.dot_dimension_numbers<[1], [0], [0], [1], [0, 0, 1, 1], [], []>} : vector<16x64xbf16>, vector<64x32xbf16>, vector<16x32xf32> -> vector<16x32xf32>
    %7 = arith.addf %3, %6 : vector<16x32xf32>
    %c0_6 = arith.constant 0 : index
    %c0_7 = arith.constant 0 : index
    %8 = vector.load %arg9[%c0_6, %c0_7] : memref<16x32xf32, #tpu.memory_space<vmem>>, vector<16x32xf32>
    tpu.vector_store %arg9[%c0_6, %c0_7], %7 {strides = array<i32>} : memref<16x32xf32, #tpu.memory_space<vmem>>, vector<16x32xf32>,
    %c0_i32_8 = arith.constant 0 : i32
    %9 = arith.cmpi eq, %arg1, %c0_i32_8 : i32
    %10 = arith.extui %9 : i1 to i32
    %c0_i32_9 = arith.constant 0 : i32
    %11 = arith.cmpi ne, %10, %c0_i32_9 : i32
    scf.if %11 {
      %c0_10 = arith.constant 0 : index
      %c0_11 = arith.constant 0 : index
      %12 = vector.load %arg9[%c0_10, %c0_11] : memref<16x32xf32, #tpu.memory_space<vmem>>, vector<16x32xf32>
      %c0_12 = arith.constant 0 : index
      %c0_13 = arith.constant 0 : index
      %13 = vector.load %arg4[%c0_12, %c0_13] : memref<1x32xf32, #tpu.memory_space<vmem>>, vector<1x32xf32>
      %14 = vector.broadcast %13 : vector<1x32xf32> to vector<16x32xf32>
      %15 = arith.addf %12, %14 : vector<16x32xf32>
      %c0_14 = arith.constant 0 : index
      %c0_15 = arith.constant 0 : index
      %16 = vector.load %arg5[%c0_14, %c0_15] : memref<16x32xf32, #tpu.memory_space<vmem>>, vector<16x32xf32>
      %17 = arith.addf %15, %16 : vector<16x32xf32>
      %cst_16 = arith.constant dense<0.000000e+00> : vector<16xf32>
      %18 = vector.multi_reduction <add>, %17, %cst_16 [1] : vector<16x32xf32> to vector<16xf32>
      %19 = vector.shape_cast %18 : vector<16xf32> to vector<16x1xf32>
      %cst_17 = arith.constant 3.200000e+01 : f32
      %20 = vector.broadcast %cst_17 : f32 to vector<16x1xf32>
      %21 = arith.divf %19, %20 : vector<16x1xf32>
      %22 = vector.broadcast %21 : vector<16x1xf32> to vector<16x32xf32>
      %23 = arith.subf %17, %22 : vector<16x32xf32>
      %24 = arith.mulf %23, %23 : vector<16x32xf32>
      %cst_18 = arith.constant dense<0.000000e+00> : vector<16xf32>
      %25 = vector.multi_reduction <add>, %24, %cst_18 [1] : vector<16x32xf32> to vector<16xf32>
      %26 = vector.shape_cast %25 : vector<16xf32> to vector<16x1xf32>
      %cst_19 = arith.constant 3.200000e+01 : f32
      %27 = vector.broadcast %cst_19 : f32 to vector<16x1xf32>
      %28 = arith.divf %26, %27 : vector<16x1xf32>
      %29 = vector.broadcast %21 : vector<16x1xf32> to vector<16x32xf32>
      %30 = arith.subf %17, %29 : vector<16x32xf32>
      %cst_20 = arith.constant 9.99999974E-6 : f32
      %31 = vector.broadcast %cst_20 : f32 to vector<16x1xf32>
      %32 = arith.addf %28, %31 : vector<16x1xf32>
      %33 = math.rsqrt %32 : vector<16x1xf32>
      %34 = vector.broadcast %33 : vector<16x1xf32> to vector<16x32xf32>
      %35 = arith.mulf %30, %34 : vector<16x32xf32>
      %c0_21 = arith.constant 0 : index
      %c0_22 = arith.constant 0 : index
      %36 = vector.load %arg6[%c0_21, %c0_22] : memref<1x32xf32, #tpu.memory_space<vmem>>, vector<1x32xf32>
      %37 = vector.broadcast %36 : vector<1x32xf32> to vector<16x32xf32>
      %38 = arith.mulf %35, %37 : vector<16x32xf32>
      %c0_23 = arith.constant 0 : index
      %c0_24 = arith.constant 0 : index
      %39 = vector.load %arg7[%c0_23, %c0_24] : memref<1x32xf32, #tpu.memory_space<vmem>>, vector<1x32xf32>
      %40 = vector.broadcast %39 : vector<1x32xf32> to vector<16x32xf32>
      %41 = arith.addf %38, %40 : vector<16x32xf32>
      %c0_25 = arith.constant 0 : index
      %c0_26 = arith.constant 0 : index
      %42 = vector.load %arg8[%c0_25, %c0_26] : memref<16x32xf32, #tpu.memory_space<vmem>>, vector<16x32xf32>
      tpu.vector_store %arg8[%c0_25, %c0_26], %41 {strides = array<i32>} : memref<16x32xf32, #tpu.memory_space<vmem>>, vector<16x32xf32>,
    } else {
    }
    return
  }
  func.func @transform_0(%arg0: i32, %arg1: i32) -> (i32, i32) {
    %c0_i32 = arith.constant 0 : i32
    return %arg0, %arg1 : i32, i32
  }
  func.func @transform_1(%arg0: i32, %arg1: i32) -> (i32, i32) {
    %c0_i32 = arith.constant 0 : i32
    %c0_i32_0 = arith.constant 0 : i32
    return %arg1, %c0_i32 : i32, i32
  }
  func.func @transform_2(%arg0: i32, %arg1: i32) -> (i32, i32) {
    %c0_i32 = arith.constant 0 : i32
    %c0_i32_0 = arith.constant 0 : i32
    %c0_i32_1 = arith.constant 0 : i32
    return %c0_i32, %c0_i32_0 : i32, i32
  }
  func.func @transform_3(%arg0: i32, %arg1: i32) -> (i32, i32) {
    %c0_i32 = arith.constant 0 : i32
    %c0_i32_0 = arith.constant 0 : i32
    return %arg0, %c0_i32 : i32, i32
  }
  func.func @transform_4(%arg0: i32, %arg1: i32) -> (i32, i32) {
    %c0_i32 = arith.constant 0 : i32
    %c0_i32_0 = arith.constant 0 : i32
    %c0_i32_1 = arith.constant 0 : i32
    return %c0_i32, %c0_i32_0 : i32, i32
  }
  func.func @transform_5(%arg0: i32, %arg1: i32) -> (i32, i32) {
    %c0_i32 = arith.constant 0 : i32
    %c0_i32_0 = arith.constant 0 : i32
    %c0_i32_1 = arith.constant 0 : i32
    return %c0_i32, %c0_i32_0 : i32, i32
  }
  func.func @transform_6(%arg0: i32, %arg1: i32) -> (i32, i32) {
    %c0_i32 = arith.constant 0 : i32
    %c0_i32_0 = arith.constant 0 : i32
    return %arg0, %c0_i32 : i32, i32
  }
}

</mosaic_0001>

<llo_original>
// kernel: _lambda_.9
$region0: #{_lambda_.9}
  #allocation0 [shape = 'u32[]', space=smem, size = 0x4, offset = 0x4, fixed_abs, tag = 'smem constant byte address 0x4 - core index']
  #allocation1 [shape = 'u32[144,128]{1,0:T(1,128)}', space=vmem, size = 0x12000, scoped, tag = 'internal scratch']
  #allocation2 [shape = 'f32[16,96]{1,0:T(8,128)}', space=vmem, size = 0x2000, scoped, tag = 'scratch operand']
  %s0 = inlined_call_operand.vmem [shape: f32[16,32], index: 0, kind: input, shape index: {}]
  %s1 = inlined_call_operand.vmem [shape: bf16[32,96], index: 1, kind: input, shape index: {}]
  %s2 = inlined_call_operand.vmem [shape: f32[1,96], index: 2, kind: input, shape index: {}]
  %s3 = inlined_call_operand.vmem [shape: bf16[16,96], index: 3, kind: output, shape index: {}]
  %s4 = sld [smem:[#allocation0]]
  $region30: #{_lambda_.9} parent=0
    _
  %s6 = ssub.s32 1, %s4
  %s7 = scalar_select 0, %s6, %s4
  // Predicated region
  $region2: #{_lambda_.9} parent=0 // pred_check
    _
  $region3: #{_lambda_.9} parent=0 // pred_check_branch
    %9 = sbr.rel (0) target = $region5
  $region4: #{_lambda_.9} parent=0 // pred_region
    _
  $region5: #{_lambda_.9} parent=0 // pred_fallthru
    _
  // Predicated region
  $region6: #{_lambda_.9} parent=0 // pred_check
    _
  $region7: #{_lambda_.9} parent=0 // pred_check_branch
    %11 = sbr.rel (0) target = $region9
  $region8: #{_lambda_.9} parent=0 // pred_region
    _
  $region9: #{_lambda_.9} parent=0 // pred_fallthru
    _
  // Predicated region
  $region10: #{_lambda_.9} parent=0 // pred_check
    _
  $region11: #{_lambda_.9} parent=0 // pred_check_branch
    %13 = sbr.rel (0) target = $region13
  $region12: #{_lambda_.9} parent=0 // pred_region
    _
  $region13: #{_lambda_.9} parent=0 // pred_fallthru
    _
  %p15 = scmp.eq.s32.totalorder 0, 0
  // Predicated region
  $region14: #{_lambda_.9} parent=0 // pred_check
    %p16 = pneg %p15
  $region15: #{_lambda_.9} parent=0 // pred_check_branch
    %18 = sbr.rel (%p16) target = $region17
  $region16: #{_lambda_.9} parent=0 // pred_region
    %vm19 = vcmask 785408
    %20 = vst.msk [vmem:[#allocation2] sm:$0xff] %vm19, 0.0
    %21 = vst.msk [vmem:[#allocation2 + $0x8] sm:$0xff] %vm19, 0.0
  $region17: #{_lambda_.9} parent=0 // pred_fallthru
    _
  %v22 = vld [vmem:[#allocation2] sm:$0xff]
  %v23 = vld [vmem:[#allocation2 + $0x8] sm:$0xff]
  %v24 = vld [vmem:[%s0] sm:$0xff]
  %v25 = vld [vmem:[%s0 + $0x8] sm:$0xff]
  %v26 = vpack.c.bf16 %v25, %v24
  %v27 = vld [vmem:[%s1] sm:$0xf]
  %v28 = vld [vmem:[%s1 + $0x4] sm:$0xf]
  %v29 = vld [vmem:[%s1 + $0x8] sm:$0xf]
  %v30 = vld [vmem:[%s1 + $0xc] sm:$0xf]
  %v35 = vunpack.c.l.b16 %v27
  %v36 = vunpack.c.l.b16 %v28
  %v37 = vunpack.c.l.b16 %v29
  %v38 = vunpack.c.l.b16 %v30
  %v39 = vpack.c.b16 %v36, %v35
  %v40 = vpack.c.b16 %v38, %v37
  %vm43 = vcmask 261120
  %v45 = vsel %vm43, %v26, 0
  %47 = vmatprep.subr.bf16.mxu0 0
  %48 = vmatpush1.bf16.msra.mxu0 %v39
  %49 = vmatprep.subr.bf16.mxu0 0
  %50 = vmatpush1.bf16.msra.mxu0 %v40
  %51 = vmatprep.subr.bf16.mxu0 0
  %52 = vmatpush1.bf16.msra.mxu0 0
  %53 = vmatprep.subr.bf16.mxu0 0
  %54 = vmatpush1.bf16.msra.mxu0 0
  %55 = vmatprep.subr.bf16.mxu0 0
  %56 = vmatpush1.bf16.msra.mxu0 0
  %57 = vmatprep.subr.bf16.mxu0 0
  %58 = vmatpush1.bf16.msra.mxu0 0
  %59 = vmatprep.subr.bf16.mxu0 0
  %60 = vmatpush1.bf16.msra.mxu0 0
  %61 = vmatprep.subr.bf16.mxu0 0
  %62 = vmatpush1.bf16.msra.mxu0 0
  %63 = vmatprep.subr.bf16.mxu0 0
  %64 = vmatpush1.bf16.msra.mxu0 0
  %65 = vmatprep.subr.bf16.mxu0 0
  %66 = vmatpush1.bf16.msra.mxu0 0
  %67 = vmatprep.subr.bf16.mxu0 0
  %68 = vmatpush1.bf16.msra.mxu0 0
  %69 = vmatprep.subr.bf16.mxu0 0
  %70 = vmatpush1.bf16.msra.mxu0 0
  %71 = vmatprep.subr.bf16.mxu0 0
  %72 = vmatpush1.bf16.msra.mxu0 0
  %73 = vmatprep.subr.bf16.mxu0 0
  %74 = vmatpush1.bf16.msra.mxu0 0
  %75 = vmatprep.subr.bf16.mxu0 0
  %76 = vmatpush1.bf16.msra.mxu0 0
  %77 = vmatprep.subr.bf16.mxu0 0
  %78 = vmatpush1.bf16.msra.mxu0 0
  %79 = vmatprep.mubr.bf16.mxu0 0
  %80 = vmatmul.mubr.bf16.gmra.mrb[0].mxu0 %v45
  %v81 = vpop.f32.mrb[0].mxu0
  %v82 = vadd.f32 0.0, %v81
  %v83 = vpop.f32.mrb[0].mxu0
  %v84 = vpop.f32.mrb[0].mxu0
  %v85 = vadd.f32 0.0, %v84
  %v86 = vpop.f32.mrb[0].mxu0
  %87 = vdwg.mxu0
  %v88 = vadd.f32 %v22, %v82
  %v89 = vadd.f32 %v23, %v85
  %vm90 = vcmask 785408
  %91 = vst.msk [vmem:[#allocation2] sm:$0xff] %vm90, %v88
  %92 = vst.msk [vmem:[#allocation2 + $0x8] sm:$0xff] %vm90, %v89
  // Predicated region
  $region18: #{_lambda_.9} parent=0 // pred_check
    %p93 = pneg %p15
  $region19: #{_lambda_.9} parent=0 // pred_check_branch
    %95 = sbr.rel (%p93) target = $region21
  $region20: #{_lambda_.9} parent=0 // pred_region
    %v96 = vld [vmem:[#allocation2] sm:$0xff]
    %v97 = vld [vmem:[#allocation2 + $0x8] sm:$0xff]
    %v98 = vld [vmem:[%s2] sm:$0x1]
    %v100 = vlaneseq
    %v101 = vshrl.u32 %v100, 7
    %v102 = vsub.s32 0, %v101
    %v103 = vrot.slane %v98, %v102
    %v105 = vadd.f32 %v96, %v103
    %v106 = vadd.f32 %v97, %v103
    %v107 = vpack.c.bf16 %v106, %v105
    %v109 = vunpack.c.l.b16 %v107
    %v110 = vunpack.c.h.b16 %v107
    %v111 = vpack.c.b16 %v109, %v109
    %v112 = vpack.c.b16 %v110, %v110
    %vm115 = vcmask 781312
    %116 = vst.msk [vmem:[%s3] sm:$0xf] %vm115, %v111
    %117 = vst.msk [vmem:[%s3 + $0x4] sm:$0xf] %vm115, %v112
  $region21: #{_lambda_.9} parent=0 // pred_fallthru
    _
  // Predicated region
  $region22: #{_lambda_.9} parent=0 // pred_check
    _
  $region23: #{_lambda_.9} parent=0 // pred_check_branch
    %119 = sbr.rel (0) target = $region25
  $region24: #{_lambda_.9} parent=0 // pred_region
    _
  $region25: #{_lambda_.9} parent=0 // pred_fallthru
    _
  // Predicated region
  $region26: #{_lambda_.9} parent=0 // pred_check
    _
  $region27: #{_lambda_.9} parent=0 // pred_check_branch
    %121 = sbr.rel (0) target = $region29
  $region28: #{_lambda_.9} parent=0 // pred_region
    _
  $region29: #{_lambda_.9} parent=0 // pred_fallthru
    _

// kernel: _lambda_.10
$region0: #{_lambda_.10}
  #allocation0 [shape = 'u32[]', space=smem, size = 0x4, offset = 0x4, fixed_abs, tag = 'smem constant byte address 0x4 - core index']
  #allocation1 [shape = 'u32[144,128]{1,0:T(1,128)}', space=vmem, size = 0x12000, scoped, tag = 'internal scratch']
  %s0 = inlined_call_operand.vmem [shape: bf16[2,8,96], index: 0, kind: input, shape index: {}]
  %s1 = inlined_call_operand.vmem [shape: bf16[2,8,32], index: 1, kind: output, shape index: {}]
  %s2 = sld [smem:[#allocation0]]
  $region37: #{_lambda_.10} parent=0
    _
  %s4 = ssub.s32 1, %s2
  %s5 = scalar_select 0, %s4, %s2
  loop: start=0, step=1, limit=4
  $region2: #{_lambda_.10} parent=0 // loop_pre_header
    _
  $region3: #{_lambda_.10} parent=0 // loop_header
    %s7 = sphi 0, %s11
    %p8 = scmp.ge.s32.totalorder %s7, 4
    %s17 = sphi 0, %s19
    %s20 = sphi 0, %s17
    %s21 = sphi 0, %s20
    %s37 = sphi 0, %s21
    %s43 = sphi 0, %s45
    %s46 = sphi 0, %s43
    %s47 = sphi 0, %s46
    %s63 = sphi 0, %s47
  $region4: #{_lambda_.10} parent=0 // loop_header_branch
    %10 = sbr.rel (%p8) target = $region8
  $region5: #{_lambda_.10} parent=0 // loop_body
    %s12 = ssub.s32 %s7, 1
    %s13 = ssub.s32 %s7, 2
    %s14 = sadd.s32 %s7, 1
    %s15 = ssub.s32 %s7, %s14
    %p16 = scmp.eq.s32.totalorder %s15, 0
    %s18 = sadd.s32 %s17, 1
    %s19 = scalar_select %p16, %s17, %s18
    %p22 = pneg %p16
    %p23 = scmp.eq.s32.totalorder %s7, 1
    %p24 = por %p22, %p23
    %p25 = scmp.ne.s32.totalorder %s17, %s20
    %p26 = scmp.eq.s32.totalorder %s7, 0
    %p27 = por %p25, %p26
    %p28 = scmp.ne.s32.totalorder %s17, %s20
    %p29 = scmp.eq.s32.totalorder %s12, 1
    %p30 = por %p28, %p29
    %p31 = scmp.ne.s32.totalorder %s20, %s21
    %p32 = scmp.eq.s32.totalorder %s12, 0
    %p33 = por %p31, %p32
    %p34 = scmp.ne.s32.totalorder %s20, %s21
    %p35 = scmp.eq.s32.totalorder %s13, 1
    %p36 = por %p34, %p35
    %p38 = scmp.ne.s32.totalorder %s21, %s37
    %p39 = scmp.eq.s32.totalorder %s13, 0
    %p40 = por %p38, %p39
    %s41 = ssub.s32 %s7, %s14
    %p42 = scmp.eq.s32.totalorder %s41, 0
    %s44 = sadd.s32 %s43, 1
    %s45 = scalar_select %p42, %s43, %s44
    %p48 = pneg %p42
    %p49 = scmp.eq.s32.totalorder %s7, 1
    %p50 = por %p48, %p49
    %p51 = scmp.ne.s32.totalorder %s43, %s46
    %p52 = scmp.eq.s32.totalorder %s7, 0
    %p53 = por %p51, %p52
    %p54 = scmp.ne.s32.totalorder %s43, %s46
    %p55 = scmp.eq.s32.totalorder %s12, 1
    %p56 = por %p54, %p55
    %p57 = scmp.ne.s32.totalorder %s46, %s47
    %p58 = scmp.eq.s32.totalorder %s12, 0
    %p59 = por %p57, %p58
    %p60 = scmp.ne.s32.totalorder %s46, %s47
    %p61 = scmp.eq.s32.totalorder %s13, 1
    %p62 = por %p60, %p61
    %p64 = scmp.ne.s32.totalorder %s47, %s63
    %p65 = scmp.eq.s32.totalorder %s13, 0
    %p66 = por %p64, %p65
    %p67 = scmp.le.s32.totalorder 1, %s7
    %p68 = scmp.lt.s32.totalorder %s7, 3
    %p69 = pnand %p67, %p68
    %p70 = pneg %p69
    // Predicated region
    $region9: #{_lambda_.10} parent=5 // pred_check
      _
    $region10: #{_lambda_.10} parent=5 // pred_check_branch
      %72 = sbr.rel (%p69) target = $region12
    $region11: #{_lambda_.10} parent=5 // pred_region
      %s73 = ssub.s32 %s7, 1
    $region12: #{_lambda_.10} parent=5 // pred_fallthru
      _
    %p74 = scmp.lt.s32.totalorder %s7, 2
    // Predicated region
    $region13: #{_lambda_.10} parent=5 // pred_check
      %p75 = pneg %p74
    $region14: #{_lambda_.10} parent=5 // pred_check_branch
      %77 = sbr.rel (%p75) target = $region16
    $region15: #{_lambda_.10} parent=5 // pred_region
      // Predicated region
      $region17: #{_lambda_.10} parent=15 // pred_check
        %p78 = pneg %p27
      $region18: #{_lambda_.10} parent=15 // pred_check_branch
        %80 = sbr.rel (%p78) target = $region20
      $region19: #{_lambda_.10} parent=15 // pred_region
        %p81 = scmp.lt.s32.totalorder %s7, 1
        %s82 = scalar_select %p81, %s7, 1
        %s83 = smul.addr %s82, 4
        %s84 = scalar_lea.vmem %s0, %s83
      $region20: #{_lambda_.10} parent=15 // pred_fallthru
        _
    $region16: #{_lambda_.10} parent=5 // pred_fallthru
      _
    %p85 = scmp.le.s32.totalorder 1, %s7
    %p86 = scmp.lt.s32.totalorder %s7, 3
    %p87 = pnand %p85, %p86
    %p88 = pneg %p87
    // Predicated region
    $region21: #{_lambda_.10} parent=5 // pred_check
      _
    $region22: #{_lambda_.10} parent=5 // pred_check_branch
      %90 = sbr.rel (%p87) target = $region24
    $region23: #{_lambda_.10} parent=5 // pred_region
      %s91 = ssub.s32 %s7, 1
      %p92 = scmp.lt.s32.totalorder %s12, 1
      %s93 = scalar_select %p92, %s12, 1
      %s94 = smul.addr %s93, 4
      %s95 = scalar_lea.vmem %s0, %s94
      %p96 = pneg %p33
      %p97 = pneg %p30
      %p98 = pneg %p59
      %p99 = pneg %p56
      %p100 = scmp.lt.s32.totalorder %s12, 1
      %s101 = scalar_select %p100, %s12, 1
      %s102 = smul.addr %s101, 4
      %s103 = scalar_lea.vmem %s1, %s102
      %p104 = scmp.lt.s32.totalorder %s12, 1
      %s105 = scalar_select %p104, %s12, 1
      %s106 = smul.addr %s105, 4
      %s107 = scalar_lea.vmem %s0, %s106
      %p108 = scmp.lt.s32.totalorder %s12, 1
      %s109 = scalar_select %p108, %s12, 1
      %s110 = smul.addr %s109, 4
      %s111 = scalar_lea.vmem %s1, %s110
      %v113 = vld [vmem:[%s107] sm:$0xf]
      %v114 = vlaneseq
      %v115 = vshrl.u32 %v114, 7
      %v116 = vlaneseq
      %v117 = vand.u32 %v116, 127
      %vm118 = vcmp.gt.s32.totalorder %v117, %v115
      %v119 = vsel %vm118, -1e+30, 0.0
      %v121 = vunpack.c.l.b16 %v113
      %v122 = vpack.c.b16 %v121, %v121
      %123 = vrot.lane.b32.xlu0 %v122, 96
      %v124 = vpop.permute.xlu0 %123
      %vm125 = vcmask 64512
      %v127 = vsel %vm125, %v113, 0
      %v130 = vsel %vm125, %v124, 0
      %132 = vmatprep.subr.bf16.mxu0 0
      %133 = vmatpush1.bf16.xpose.msra.mxu0 %v130
      %134 = vmatprep.subr.bf16.mxu0 0
      %135 = vmatpush1.bf16.xpose.msra.mxu0 0
      %136 = vmatprep.subr.bf16.mxu0 0
      %137 = vmatpush1.bf16.xpose.msra.mxu0 0
      %138 = vmatprep.subr.bf16.mxu0 0
      %139 = vmatpush1.bf16.xpose.msra.mxu0 0
      %140 = vmatprep.subr.bf16.mxu0 0
      %141 = vmatpush1.bf16.xpose.msra.mxu0 0
      %142 = vmatprep.subr.bf16.mxu0 0
      %143 = vmatpush1.bf16.xpose.msra.mxu0 0
      %144 = vmatprep.subr.bf16.mxu0 0
      %145 = vmatpush1.bf16.xpose.msra.mxu0 0
      %146 = vmatprep.subr.bf16.mxu0 0
      %147 = vmatpush1.bf16.xpose.msra.mxu0 0
      %148 = vmatprep.subr.bf16.mxu0 0
      %149 = vmatpush1.bf16.xpose.msra.mxu0 0
      %150 = vmatprep.subr.bf16.mxu0 0
      %151 = vmatpush1.bf16.xpose.msra.mxu0 0
      %152 = vmatprep.subr.bf16.mxu0 0
      %153 = vmatpush1.bf16.xpose.msra.mxu0 0
      %154 = vmatprep.subr.bf16.mxu0 0
      %155 = vmatpush1.bf16.xpose.msra.mxu0 0
      %156 = vmatprep.subr.bf16.mxu0 0
      %157 = vmatpush1.bf16.xpose.msra.mxu0 0
      %158 = vmatprep.subr.bf16.mxu0 0
      %159 = vmatpush1.bf16.xpose.msra.mxu0 0
      %160 = vmatprep.subr.bf16.mxu0 0
      %161 = vmatpush1.bf16.xpose.msra.mxu0 0
      %162 = vmatprep.subr.bf16.mxu0 0
      %163 = vmatpush1.bf16.xpose.msra.mxu0 0
      %164 = vmatprep.mubr.bf16.mxu0 0
      %165 = vmatmul.mubr.bf16.gmra.mrb[0].mxu0 %v127
      %v166 = vpop.f32.mrb[0].mxu0
      %v167 = vadd.f32 0.0, %v166
      %v168 = vpop.f32.mrb[0].mxu0
      %v169 = vpop.f32.mrb[0].mxu0
      %v170 = vpop.f32.mrb[0].mxu0
      %171 = vdwg.mxu0
      %v172 = vmul.f32 %v167, 0.35355338
      %v173 = vadd.f32 %v172, %v119
      %v174 = vsel %vm125, %v173, -inf
      %175 = vmax.xlane.f32.xlu0 %v174
      %v176 = vpop.xlane.xlu0 %175
      %v177 = vsub.f32 %v173, %v176
      %v178 = vmul.f32 %v177, 1.442695
      %v179 = vpow.pop %v178
      %v180 = vsel %vm125, %v179, 0.0
      %181 = vadd.xlane.f32.xlu0 %v180
      %v182 = vpop.xlane.xlu0 %181
      %v183 = vrcp.pop %v182
      %v184 = vmul.f32 %v179, %v183
      %v185 = vpack.c.bf16 %v184, %v184
      %186 = vrot.lane.b32.xlu0 %v122, 64
      %v187 = vpop.permute.xlu0 %186
      %v189 = vsel %vm125, %v185, 0
      %vm191 = vcmask 1043456
      %v193 = vsel %vm191, %v187, 0
      %195 = vmatprep.subr.bf16.mxu0 0
      %196 = vmatpush1.bf16.msra.mxu0 %v193
      %197 = vmatprep.subr.bf16.mxu0 0
      %198 = vmatpush1.bf16.msra.mxu0 0
      %199 = vmatprep.subr.bf16.mxu0 0
      %200 = vmatpush1.bf16.msra.mxu0 0
      %201 = vmatprep.subr.bf16.mxu0 0
      %202 = vmatpush1.bf16.msra.mxu0 0
      %203 = vmatprep.subr.bf16.mxu0 0
      %204 = vmatpush1.bf16.msra.mxu0 0
      %205 = vmatprep.subr.bf16.mxu0 0
      %206 = vmatpush1.bf16.msra.mxu0 0
      %207 = vmatprep.subr.bf16.mxu0 0
      %208 = vmatpush1.bf16.msra.mxu0 0
      %209 = vmatprep.subr.bf16.mxu0 0
      %210 = vmatpush1.bf16.msra.mxu0 0
      %211 = vmatprep.subr.bf16.mxu0 0
      %212 = vmatpush1.bf16.msra.mxu0 0
      %213 = vmatprep.subr.bf16.mxu0 0
      %214 = vmatpush1.bf16.msra.mxu0 0
      %215 = vmatprep.subr.bf16.mxu0 0
      %216 = vmatpush1.bf16.msra.mxu0 0
      %217 = vmatprep.subr.bf16.mxu0 0
      %218 = vmatpush1.bf16.msra.mxu0 0
      %219 = vmatprep.subr.bf16.mxu0 0
      %220 = vmatpush1.bf16.msra.mxu0 0
      %221 = vmatprep.subr.bf16.mxu0 0
      %222 = vmatpush1.bf16.msra.mxu0 0
      %223 = vmatprep.subr.bf16.mxu0 0
      %224 = vmatpush1.bf16.msra.mxu0 0
      %225 = vmatprep.subr.bf16.mxu0 0
      %226 = vmatpush1.bf16.msra.mxu0 0
      %227 = vmatprep.mubr.bf16.mxu0 0
      %228 = vmatmul.mubr.bf16.gmra.mrb[0].mxu0 %v189
      %v229 = vpop.f32.mrb[0].mxu0
      %v230 = vadd.f32 0.0, %v229
      %v231 = vpop.f32.mrb[0].mxu0
      %v232 = vpop.f32.mrb[0].mxu0
      %v233 = vpop.f32.mrb[0].mxu0
      %234 = vdwg.mxu0
      %235 = vrot.lane.b32.xlu0 %v122, 120
      %v236 = vpop.permute.xlu0 %235
      %237 = vrot.lane.b32.xlu0 %v122, 88
      %v238 = vpop.permute.xlu0 %237
      %v240 = vsel %vm125, %v236, 0
      %v243 = vsel %vm125, %v238, 0
      %245 = vmatprep.subr.bf16.mxu0 0
      %246 = vmatpush1.bf16.xpose.msra.mxu0 %v243
      %247 = vmatprep.subr.bf16.mxu0 0
      %248 = vmatpush1.bf16.xpose.msra.mxu0 0
      %249 = vmatprep.subr.bf16.mxu0 0
      %250 = vmatpush1.bf16.xpose.msra.mxu0 0
      %251 = vmatprep.subr.bf16.mxu0 0
      %252 = vmatpush1.bf16.xpose.msra.mxu0 0
      %253 = vmatprep.subr.bf16.mxu0 0
      %254 = vmatpush1.bf16.xpose.msra.mxu0 0
      %255 = vmatprep.subr.bf16.mxu0 0
      %256 = vmatpush1.bf16.xpose.msra.mxu0 0
      %257 = vmatprep.subr.bf16.mxu0 0
      %258 = vmatpush1.bf16.xpose.msra.mxu0 0
      %259 = vmatprep.subr.bf16.mxu0 0
      %260 = vmatpush1.bf16.xpose.msra.mxu0 0
      %261 = vmatprep.subr.bf16.mxu0 0
      %262 = vmatpush1.bf16.xpose.msra.mxu0 0
      %263 = vmatprep.subr.bf16.mxu0 0
      %264 = vmatpush1.bf16.xpose.msra.mxu0 0
      %265 = vmatprep.subr.bf16.mxu0 0
      %266 = vmatpush1.bf16.xpose.msra.mxu0 0
      %267 = vmatprep.subr.bf16.mxu0 0
      %268 = vmatpush1.bf16.xpose.msra.mxu0 0
      %269 = vmatprep.subr.bf16.mxu0 0
      %270 = vmatpush1.bf16.xpose.msra.mxu0 0
      %271 = vmatprep.subr.bf16.mxu0 0
      %272 = vmatpush1.bf16.xpose.msra.mxu0 0
      %273 = vmatprep.subr.bf16.mxu0 0
      %274 = vmatpush1.bf16.xpose.msra.mxu0 0
      %275 = vmatprep.subr.bf16.mxu0 0
      %276 = vmatpush1.bf16.xpose.msra.mxu0 0
      %277 = vmatprep.mubr.bf16.mxu0 0
      %278 = vmatmul.mubr.bf16.gmra.mrb[0].mxu0 %v240
      %v279 = vpop.f32.mrb[0].mxu0
      %v280 = vadd.f32 0.0, %v279
      %v281 = vpop.f32.mrb[0].mxu0
      %v282 = vpop.f32.mrb[0].mxu0
      %v283 = vpop.f32.mrb[0].mxu0
      %284 = vdwg.mxu0
      %v285 = vmul.f32 %v280, 0.35355338
      %v286 = vadd.f32 %v285, %v119
      %v287 = vsel %vm125, %v286, -inf
      %288 = vmax.xlane.f32.xlu0 %v287
      %v289 = vpop.xlane.xlu0 %288
      %v290 = vsub.f32 %v286, %v289
      %v291 = vmul.f32 %v290, 1.442695
      %v292 = vpow.pop %v291
      %v293 = vsel %vm125, %v292, 0.0
      %294 = vadd.xlane.f32.xlu0 %v293
      %v295 = vpop.xlane.xlu0 %294
      %v296 = vrcp.pop %v295
      %v297 = vmul.f32 %v292, %v296
      %v298 = vpack.c.bf16 %v297, %v297
      %299 = vrot.lane.b32.xlu0 %v122, 56
      %v300 = vpop.permute.xlu0 %299
      %v302 = vsel %vm125, %v298, 0
      %v305 = vsel %vm191, %v300, 0
      %307 = vmatprep.subr.bf16.mxu0 0
      %308 = vmatpush1.bf16.msra.mxu0 %v305
      %309 = vmatprep.subr.bf16.mxu0 0
      %310 = vmatpush1.bf16.msra.mxu0 0
      %311 = vmatprep.subr.bf16.mxu0 0
      %312 = vmatpush1.bf16.msra.mxu0 0
      %313 = vmatprep.subr.bf16.mxu0 0
      %314 = vmatpush1.bf16.msra.mxu0 0
      %315 = vmatprep.subr.bf16.mxu0 0
      %316 = vmatpush1.bf16.msra.mxu0 0
      %317 = vmatprep.subr.bf16.mxu0 0
      %318 = vmatpush1.bf16.msra.mxu0 0
      %319 = vmatprep.subr.bf16.mxu0 0
      %320 = vmatpush1.bf16.msra.mxu0 0
      %321 = vmatprep.subr.bf16.mxu0 0
      %322 = vmatpush1.bf16.msra.mxu0 0
      %323 = vmatprep.subr.bf16.mxu0 0
      %324 = vmatpush1.bf16.msra.mxu0 0
      %325 = vmatprep.subr.bf16.mxu0 0
      %326 = vmatpush1.bf16.msra.mxu0 0
      %327 = vmatprep.subr.bf16.mxu0 0
      %328 = vmatpush1.bf16.msra.mxu0 0
      %329 = vmatprep.subr.bf16.mxu0 0
      %330 = vmatpush1.bf16.msra.mxu0 0
      %331 = vmatprep.subr.bf16.mxu0 0
      %332 = vmatpush1.bf16.msra.mxu0 0
      %333 = vmatprep.subr.bf16.mxu0 0
      %334 = vmatpush1.bf16.msra.mxu0 0
      %335 = vmatprep.subr.bf16.mxu0 0
      %336 = vmatpush1.bf16.msra.mxu0 0
      %337 = vmatprep.subr.bf16.mxu0 0
      %338 = vmatpush1.bf16.msra.mxu0 0
      %339 = vmatprep.mubr.bf16.mxu0 0
      %340 = vmatmul.mubr.bf16.gmra.mrb[0].mxu0 %v302
      %v341 = vpop.f32.mrb[0].mxu0
      %v342 = vadd.f32 0.0, %v341
      %v343 = vpop.f32.mrb[0].mxu0
      %v344 = vpop.f32.mrb[0].mxu0
      %v345 = vpop.f32.mrb[0].mxu0
      %346 = vdwg.mxu0
      %347 = vrot.lane.b32.xlu0 %v122, 112
      %v348 = vpop.permute.xlu0 %347
      %349 = vrot.lane.b32.xlu0 %v122, 80
      %v350 = vpop.permute.xlu0 %349
      %v352 = vsel %vm125, %v348, 0
      %v355 = vsel %vm125, %v350, 0
      %357 = vmatprep.subr.bf16.mxu0 0
      %358 = vmatpush1.bf16.xpose.msra.mxu0 %v355
      %359 = vmatprep.subr.bf16.mxu0 0
      %360 = vmatpush1.bf16.xpose.msra.mxu0 0
      %361 = vmatprep.subr.bf16.mxu0 0
      %362 = vmatpush1.bf16.xpose.msra.mxu0 0
      %363 = vmatprep.subr.bf16.mxu0 0
      %364 = vmatpush1.bf16.xpose.msra.mxu0 0
      %365 = vmatprep.subr.bf16.mxu0 0
      %366 = vmatpush1.bf16.xpose.msra.mxu0 0
      %367 = vmatprep.subr.bf16.mxu0 0
      %368 = vmatpush1.bf16.xpose.msra.mxu0 0
      %369 = vmatprep.subr.bf16.mxu0 0
      %370 = vmatpush1.bf16.xpose.msra.mxu0 0
      %371 = vmatprep.subr.bf16.mxu0 0
      %372 = vmatpush1.bf16.xpose.msra.mxu0 0
      %373 = vmatprep.subr.bf16.mxu0 0
      %374 = vmatpush1.bf16.xpose.msra.mxu0 0
      %375 = vmatprep.subr.bf16.mxu0 0
      %376 = vmatpush1.bf16.xpose.msra.mxu0 0
      %377 = vmatprep.subr.bf16.mxu0 0
      %378 = vmatpush1.bf16.xpose.msra.mxu0 0
      %379 = vmatprep.subr.bf16.mxu0 0
      %380 = vmatpush1.bf16.xpose.msra.mxu0 0
      %381 = vmatprep.subr.bf16.mxu0 0
      %382 = vmatpush1.bf16.xpose.msra.mxu0 0
      %383 = vmatprep.subr.bf16.mxu0 0
      %384 = vmatpush1.bf16.xpose.msra.mxu0 0
      %385 = vmatprep.subr.bf16.mxu0 0
      %386 = vmatpush1.bf16.xpose.msra.mxu0 0
      %387 = vmatprep.subr.bf16.mxu0 0
      %388 = vmatpush1.bf16.xpose.msra.mxu0 0
      %389 = vmatprep.mubr.bf16.mxu0 0
      %390 = vmatmul.mubr.bf16.gmra.mrb[0].mxu0 %v352
      %v391 = vpop.f32.mrb[0].mxu0
      %v392 = vadd.f32 0.0, %v391
      %v393 = vpop.f32.mrb[0].mxu0
      %v394 = vpop.f32.mrb[0].mxu0
      %v395 = vpop.f32.mrb[0].mxu0
      %396 = vdwg.mxu0
      %v397 = vmul.f32 %v392, 0.35355338
      %v398 = vadd.f32 %v397, %v119
      %v399 = vsel %vm125, %v398, -inf
      %400 = vmax.xlane.f32.xlu0 %v399
      %v401 = vpop.xlane.xlu0 %400
      %v402 = vsub.f32 %v398, %v401
      %v403 = vmul.f32 %v402, 1.442695
      %v404 = vpow.pop %v403
      %v405 = vsel %vm125, %v404, 0.0
      %406 = vadd.xlane.f32.xlu0 %v405
      %v407 = vpop.xlane.xlu0 %406
      %v408 = vrcp.pop %v407
      %v409 = vmul.f32 %v404, %v408
      %v410 = vpack.c.bf16 %v409, %v409
      %411 = vrot.lane.b32.xlu0 %v122, 48
      %v412 = vpop.permute.xlu0 %411
      %v414 = vsel %vm125, %v410, 0
      %v417 = vsel %vm191, %v412, 0
      %419 = vmatprep.subr.bf16.mxu0 0
      %420 = vmatpush1.bf16.msra.mxu0 %v417
      %421 = vmatprep.subr.bf16.mxu0 0
      %422 = vmatpush1.bf16.msra.mxu0 0
      %423 = vmatprep.subr.bf16.mxu0 0
      %424 = vmatpush1.bf16.msra.mxu0 0
      %425 = vmatprep.subr.bf16.mxu0 0
      %426 = vmatpush1.bf16.msra.mxu0 0
      %427 = vmatprep.subr.bf16.mxu0 0
      %428 = vmatpush1.bf16.msra.mxu0 0
      %429 = vmatprep.subr.bf16.mxu0 0
      %430 = vmatpush1.bf16.msra.mxu0 0
      %431 = vmatprep.subr.bf16.mxu0 0
      %432 = vmatpush1.bf16.msra.mxu0 0
      %433 = vmatprep.subr.bf16.mxu0 0
      %434 = vmatpush1.bf16.msra.mxu0 0
      %435 = vmatprep.subr.bf16.mxu0 0
      %436 = vmatpush1.bf16.msra.mxu0 0
      %437 = vmatprep.subr.bf16.mxu0 0
      %438 = vmatpush1.bf16.msra.mxu0 0
      %439 = vmatprep.subr.bf16.mxu0 0
      %440 = vmatpush1.bf16.msra.mxu0 0
      %441 = vmatprep.subr.bf16.mxu0 0
      %442 = vmatpush1.bf16.msra.mxu0 0
      %443 = vmatprep.subr.bf16.mxu0 0
      %444 = vmatpush1.bf16.msra.mxu0 0
      %445 = vmatprep.subr.bf16.mxu0 0
      %446 = vmatpush1.bf16.msra.mxu0 0
      %447 = vmatprep.subr.bf16.mxu0 0
      %448 = vmatpush1.bf16.msra.mxu0 0
      %449 = vmatprep.subr.bf16.mxu0 0
      %450 = vmatpush1.bf16.msra.mxu0 0
      %451 = vmatprep.mubr.bf16.mxu0 0
      %452 = vmatmul.mubr.bf16.gmra.mrb[0].mxu0 %v414
      %v453 = vpop.f32.mrb[0].mxu0
      %v454 = vadd.f32 0.0, %v453
      %v455 = vpop.f32.mrb[0].mxu0
      %v456 = vpop.f32.mrb[0].mxu0
      %v457 = vpop.f32.mrb[0].mxu0
      %458 = vdwg.mxu0
      %459 = vrot.lane.b32.xlu0 %v122, 104
      %v460 = vpop.permute.xlu0 %459
      %461 = vrot.lane.b32.xlu0 %v122, 72
      %v462 = vpop.permute.xlu0 %461
      %v464 = vsel %vm125, %v460, 0
      %v467 = vsel %vm125, %v462, 0
      %469 = vmatprep.subr.bf16.mxu0 0
      %470 = vmatpush1.bf16.xpose.msra.mxu0 %v467
      %471 = vmatprep.subr.bf16.mxu0 0
      %472 = vmatpush1.bf16.xpose.msra.mxu0 0
      %473 = vmatprep.subr.bf16.mxu0 0
      %474 = vmatpush1.bf16.xpose.msra.mxu0 0
      %475 = vmatprep.subr.bf16.mxu0 0
      %476 = vmatpush1.bf16.xpose.msra.mxu0 0
      %477 = vmatprep.subr.bf16.mxu0 0
      %478 = vmatpush1.bf16.xpose.msra.mxu0 0
      %479 = vmatprep.subr.bf16.mxu0 0
      %480 = vmatpush1.bf16.xpose.msra.mxu0 0
      %481 = vmatprep.subr.bf16.mxu0 0
      %482 = vmatpush1.bf16.xpose.msra.mxu0 0
      %483 = vmatprep.subr.bf16.mxu0 0
      %484 = vmatpush1.bf16.xpose.msra.mxu0 0
      %485 = vmatprep.subr.bf16.mxu0 0
      %486 = vmatpush1.bf16.xpose.msra.mxu0 0
      %487 = vmatprep.subr.bf16.mxu0 0
      %488 = vmatpush1.bf16.xpose.msra.mxu0 0
      %489 = vmatprep.subr.bf16.mxu0 0
      %490 = vmatpush1.bf16.xpose.msra.mxu0 0
      %491 = vmatprep.subr.bf16.mxu0 0
      %492 = vmatpush1.bf16.xpose.msra.mxu0 0
      %493 = vmatprep.subr.bf16.mxu0 0
      %494 = vmatpush1.bf16.xpose.msra.mxu0 0
      %495 = vmatprep.subr.bf16.mxu0 0
      %496 = vmatpush1.bf16.xpose.msra.mxu0 0
      %497 = vmatprep.subr.bf16.mxu0 0
      %498 = vmatpush1.bf16.xpose.msra.mxu0 0
      %499 = vmatprep.subr.bf16.mxu0 0
      %500 = vmatpush1.bf16.xpose.msra.mxu0 0
      %501 = vmatprep.mubr.bf16.mxu0 0
      %502 = vmatmul.mubr.bf16.gmra.mrb[0].mxu0 %v464
      %v503 = vpop.f32.mrb[0].mxu0
      %v504 = vadd.f32 0.0, %v503
      %v505 = vpop.f32.mrb[0].mxu0
      %v506 = vpop.f32.mrb[0].mxu0
      %v507 = vpop.f32.mrb[0].mxu0
      %508 = vdwg.mxu0
      %v509 = vmul.f32 %v504, 0.35355338
      %v510 = vadd.f32 %v509, %v119
      %v511 = vsel %vm125, %v510, -inf
      %512 = vmax.xlane.f32.xlu0 %v511
      %v513 = vpop.xlane.xlu0 %512
      %v514 = vsub.f32 %v510, %v513
      %v515 = vmul.f32 %v514, 1.442695
      %v516 = vpow.pop %v515
      %v517 = vsel %vm125, %v516, 0.0
      %518 = vadd.xlane.f32.xlu0 %v517
      %v519 = vpop.xlane.xlu0 %518
      %v520 = vrcp.pop %v519
      %v521 = vmul.f32 %v516, %v520
      %v522 = vpack.c.bf16 %v521, %v521
      %523 = vrot.lane.b32.xlu0 %v122, 40
      %v524 = vpop.permute.xlu0 %523
      %v526 = vsel %vm125, %v522, 0
      %v529 = vsel %vm191, %v524, 0
      %531 = vmatprep.subr.bf16.mxu0 0
      %532 = vmatpush1.bf16.msra.mxu0 %v529
      %533 = vmatprep.subr.bf16.mxu0 0
      %534 = vmatpush1.bf16.msra.mxu0 0
      %535 = vmatprep.subr.bf16.mxu0 0
      %536 = vmatpush1.bf16.msra.mxu0 0
      %537 = vmatprep.subr.bf16.mxu0 0
      %538 = vmatpush1.bf16.msra.mxu0 0
      %539 = vmatprep.subr.bf16.mxu0 0
      %540 = vmatpush1.bf16.msra.mxu0 0
      %541 = vmatprep.subr.bf16.mxu0 0
      %542 = vmatpush1.bf16.msra.mxu0 0
      %543 = vmatprep.subr.bf16.mxu0 0
      %544 = vmatpush1.bf16.msra.mxu0 0
      %545 = vmatprep.subr.bf16.mxu0 0
      %546 = vmatpush1.bf16.msra.mxu0 0
      %547 = vmatprep.subr.bf16.mxu0 0
      %548 = vmatpush1.bf16.msra.mxu0 0
      %549 = vmatprep.subr.bf16.mxu0 0
      %550 = vmatpush1.bf16.msra.mxu0 0
      %551 = vmatprep.subr.bf16.mxu0 0
      %552 = vmatpush1.bf16.msra.mxu0 0
      %553 = vmatprep.subr.bf16.mxu0 0
      %554 = vmatpush1.bf16.msra.mxu0 0
      %555 = vmatprep.subr.bf16.mxu0 0
      %556 = vmatpush1.bf16.msra.mxu0 0
      %557 = vmatprep.subr.bf16.mxu0 0
      %558 = vmatpush1.bf16.msra.mxu0 0
      %559 = vmatprep.subr.bf16.mxu0 0
      %560 = vmatpush1.bf16.msra.mxu0 0
      %561 = vmatprep.subr.bf16.mxu0 0
      %562 = vmatpush1.bf16.msra.mxu0 0
      %563 = vmatprep.mubr.bf16.mxu0 0
      %564 = vmatmul.mubr.bf16.gmra.mrb[0].mxu0 %v526
      %v565 = vpop.f32.mrb[0].mxu0
      %v566 = vadd.f32 0.0, %v565
      %v567 = vpop.f32.mrb[0].mxu0
      %v568 = vpop.f32.mrb[0].mxu0
      %v569 = vpop.f32.mrb[0].mxu0
      %570 = vdwg.mxu0
      %572 = vrot.lane.b32.xlu0 %v342, 8
      %v573 = vpop.permute.xlu0 %572
      %576 = vrot.lane.b32.xlu0 %v454, 16
      %v577 = vpop.permute.xlu0 %576
      %580 = vrot.lane.b32.xlu0 %v566, 24
      %v581 = vpop.permute.xlu0 %580
      %v583 = vsel %vm125, %v230, %v573
      %vm584 = vcmask 130048
      %v585 = vsel %vm584, %v583, %v577
      %vm586 = vcmask 195584
      %v587 = vsel %vm586, %v585, %v581
      %v588 = vpack.c.bf16 %v587, %v587
      %vm589 = vcmask 257024
      %590 = vst.msk [vmem:[%s111] sm:$0xf] %vm589, %v588
      %p591 = scmp.lt.s32.totalorder %s12, 1
      %s592 = scalar_select %p591, %s12, 1
      %s593 = smul.addr %s592, 4
      %s594 = scalar_lea.vmem %s1, %s593
      // Predicated region
      $region25: #{_lambda_.10} parent=23 // pred_check
        %p595 = pneg %p56
      $region26: #{_lambda_.10} parent=23 // pred_check_branch
        %597 = sbr.rel (%p595) target = $region28
      $region27: #{_lambda_.10} parent=23 // pred_region
        _
      $region28: #{_lambda_.10} parent=23 // pred_fallthru
        _
    $region24: #{_lambda_.10} parent=5 // pred_fallthru
      _
    %p598 = scmp.le.s32.totalorder 2, %s7
    // Predicated region
    $region29: #{_lambda_.10} parent=5 // pred_check
      %p599 = pneg %p598
    $region30: #{_lambda_.10} parent=5 // pred_check_branch
      %601 = sbr.rel (%p599) target = $region32
    $region31: #{_lambda_.10} parent=5 // pred_region
      %s602 = ssub.s32 %s7, 2
      // Predicated region
      $region33: #{_lambda_.10} parent=31 // pred_check
        %p603 = pneg %p62
      $region34: #{_lambda_.10} parent=31 // pred_check_branch
        %605 = sbr.rel (%p603) target = $region36
      $region35: #{_lambda_.10} parent=31 // pred_region
        %p606 = scmp.lt.s32.totalorder %s13, 1
        %s607 = scalar_select %p606, %s13, 1
        %s608 = smul.addr %s607, 4
        %s609 = scalar_lea.vmem %s1, %s608
      $region36: #{_lambda_.10} parent=31 // pred_fallthru
        _
    $region32: #{_lambda_.10} parent=5 // pred_fallthru
      _
  $region6: #{_lambda_.10} parent=0 // loop_footer
    %s11 = sadd.s32 1, %s7
  $region7: #{_lambda_.10} parent=0 // loop_footer_branch
    %6 = sbr.rel target = $region3
  $region8: #{_lambda_.10} parent=0 // loop_exit
    _

// kernel: _lambda_.12
$region0: #{_lambda_.12}
  #allocation0 [shape = 'u32[]', space=smem, size = 0x4, offset = 0x4, fixed_abs, tag = 'smem constant byte address 0x4 - core index']
  #allocation1 [shape = 'u32[144,128]{1,0:T(1,128)}', space=vmem, size = 0x12000, scoped, tag = 'internal scratch']
  #allocation2 [shape = 'f32[16,32]{1,0:T(8,128)}', space=vmem, size = 0x2000, scoped, tag = 'scratch operand']
  %s0 = inlined_call_operand.vmem [shape: f32[16,32], index: 0, kind: input, shape index: {}]
  %s1 = inlined_call_operand.vmem [shape: bf16[32,32], index: 1, kind: input, shape index: {}]
  %s2 = inlined_call_operand.vmem [shape: f32[1,32], index: 2, kind: input, shape index: {}]
  %s3 = inlined_call_operand.vmem [shape: bf16[16,32], index: 3, kind: output, shape index: {}]
  %s4 = sld [smem:[#allocation0]]
  $region30: #{_lambda_.12} parent=0
    _
  %s6 = ssub.s32 1, %s4
  %s7 = scalar_select 0, %s6, %s4
  // Predicated region
  $region2: #{_lambda_.12} parent=0 // pred_check
    _
  $region3: #{_lambda_.12} parent=0 // pred_check_branch
    %9 = sbr.rel (0) target = $region5
  $region4: #{_lambda_.12} parent=0 // pred_region
    _
  $region5: #{_lambda_.12} parent=0 // pred_fallthru
    _
  // Predicated region
  $region6: #{_lambda_.12} parent=0 // pred_check
    _
  $region7: #{_lambda_.12} parent=0 // pred_check_branch
    %11 = sbr.rel (0) target = $region9
  $region8: #{_lambda_.12} parent=0 // pred_region
    _
  $region9: #{_lambda_.12} parent=0 // pred_fallthru
    _
  // Predicated region
  $region10: #{_lambda_.12} parent=0 // pred_check
    _
  $region11: #{_lambda_.12} parent=0 // pred_check_branch
    %13 = sbr.rel (0) target = $region13
  $region12: #{_lambda_.12} parent=0 // pred_region
    _
  $region13: #{_lambda_.12} parent=0 // pred_fallthru
    _
  %p15 = scmp.eq.s32.totalorder 0, 0
  // Predicated region
  $region14: #{_lambda_.12} parent=0 // pred_check
    %p16 = pneg %p15
  $region15: #{_lambda_.12} parent=0 // pred_check_branch
    %18 = sbr.rel (%p16) target = $region17
  $region16: #{_lambda_.12} parent=0 // pred_region
    %vm19 = vcmask 261120
    %20 = vst.msk [vmem:[#allocation2] sm:$0xff] %vm19, 0.0
    %21 = vst.msk [vmem:[#allocation2 + $0x8] sm:$0xff] %vm19, 0.0
  $region17: #{_lambda_.12} parent=0 // pred_fallthru
    _
  %v22 = vld [vmem:[#allocation2] sm:$0xff]
  %v23 = vld [vmem:[#allocation2 + $0x8] sm:$0xff]
  %v24 = vld [vmem:[%s0] sm:$0xff]
  %v25 = vld [vmem:[%s0 + $0x8] sm:$0xff]
  %v26 = vpack.c.bf16 %v25, %v24
  %v27 = vld [vmem:[%s1] sm:$0xf]
  %v28 = vld [vmem:[%s1 + $0x4] sm:$0xf]
  %v29 = vld [vmem:[%s1 + $0x8] sm:$0xf]
  %v30 = vld [vmem:[%s1 + $0xc] sm:$0xf]
  %v35 = vunpack.c.l.b16 %v27
  %v36 = vunpack.c.l.b16 %v28
  %v37 = vunpack.c.l.b16 %v29
  %v38 = vunpack.c.l.b16 %v30
  %v39 = vpack.c.b16 %v36, %v35
  %v40 = vpack.c.b16 %v38, %v37
  %vm43 = vcmask 261120
  %v45 = vsel %vm43, %v26, 0
  %47 = vmatprep.subr.bf16.mxu0 0
  %48 = vmatpush1.bf16.msra.mxu0 %v39
  %49 = vmatprep.subr.bf16.mxu0 0
  %50 = vmatpush1.bf16.msra.mxu0 %v40
  %51 = vmatprep.subr.bf16.mxu0 0
  %52 = vmatpush1.bf16.msra.mxu0 0
  %53 = vmatprep.subr.bf16.mxu0 0
  %54 = vmatpush1.bf16.msra.mxu0 0
  %55 = vmatprep.subr.bf16.mxu0 0
  %56 = vmatpush1.bf16.msra.mxu0 0
  %57 = vmatprep.subr.bf16.mxu0 0
  %58 = vmatpush1.bf16.msra.mxu0 0
  %59 = vmatprep.subr.bf16.mxu0 0
  %60 = vmatpush1.bf16.msra.mxu0 0
  %61 = vmatprep.subr.bf16.mxu0 0
  %62 = vmatpush1.bf16.msra.mxu0 0
  %63 = vmatprep.subr.bf16.mxu0 0
  %64 = vmatpush1.bf16.msra.mxu0 0
  %65 = vmatprep.subr.bf16.mxu0 0
  %66 = vmatpush1.bf16.msra.mxu0 0
  %67 = vmatprep.subr.bf16.mxu0 0
  %68 = vmatpush1.bf16.msra.mxu0 0
  %69 = vmatprep.subr.bf16.mxu0 0
  %70 = vmatpush1.bf16.msra.mxu0 0
  %71 = vmatprep.subr.bf16.mxu0 0
  %72 = vmatpush1.bf16.msra.mxu0 0
  %73 = vmatprep.subr.bf16.mxu0 0
  %74 = vmatpush1.bf16.msra.mxu0 0
  %75 = vmatprep.subr.bf16.mxu0 0
  %76 = vmatpush1.bf16.msra.mxu0 0
  %77 = vmatprep.subr.bf16.mxu0 0
  %78 = vmatpush1.bf16.msra.mxu0 0
  %79 = vmatprep.mubr.bf16.mxu0 0
  %80 = vmatmul.mubr.bf16.gmra.mrb[0].mxu0 %v45
  %v81 = vpop.f32.mrb[0].mxu0
  %v82 = vadd.f32 0.0, %v81
  %v83 = vpop.f32.mrb[0].mxu0
  %v84 = vpop.f32.mrb[0].mxu0
  %v85 = vadd.f32 0.0, %v84
  %v86 = vpop.f32.mrb[0].mxu0
  %87 = vdwg.mxu0
  %v88 = vadd.f32 %v22, %v82
  %v89 = vadd.f32 %v23, %v85
  %90 = vst.msk [vmem:[#allocation2] sm:$0xff] %vm43, %v88
  %91 = vst.msk [vmem:[#allocation2 + $0x8] sm:$0xff] %vm43, %v89
  // Predicated region
  $region18: #{_lambda_.12} parent=0 // pred_check
    %p92 = pneg %p15
  $region19: #{_lambda_.12} parent=0 // pred_check_branch
    %94 = sbr.rel (%p92) target = $region21
  $region20: #{_lambda_.12} parent=0 // pred_region
    %v95 = vld [vmem:[#allocation2] sm:$0xff]
    %v96 = vld [vmem:[#allocation2 + $0x8] sm:$0xff]
    %v97 = vld [vmem:[%s2] sm:$0x1]
    %v99 = vlaneseq
    %v100 = vshrl.u32 %v99, 7
    %v101 = vsub.s32 0, %v100
    %v102 = vrot.slane %v97, %v101
    %v104 = vadd.f32 %v95, %v102
    %v105 = vadd.f32 %v96, %v102
    %v106 = vpack.c.bf16 %v105, %v104
    %v108 = vunpack.c.l.b16 %v106
    %v109 = vunpack.c.h.b16 %v106
    %v110 = vpack.c.b16 %v108, %v108
    %v111 = vpack.c.b16 %v109, %v109
    %vm114 = vcmask 257024
    %115 = vst.msk [vmem:[%s3] sm:$0xf] %vm114, %v110
    %116 = vst.msk [vmem:[%s3 + $0x4] sm:$0xf] %vm114, %v111
  $region21: #{_lambda_.12} parent=0 // pred_fallthru
    _
  // Predicated region
  $region22: #{_lambda_.12} parent=0 // pred_check
    _
  $region23: #{_lambda_.12} parent=0 // pred_check_branch
    %118 = sbr.rel (0) target = $region25
  $region24: #{_lambda_.12} parent=0 // pred_region
    _
  $region25: #{_lambda_.12} parent=0 // pred_fallthru
    _
  // Predicated region
  $region26: #{_lambda_.12} parent=0 // pred_check
    _
  $region27: #{_lambda_.12} parent=0 // pred_check_branch
    %120 = sbr.rel (0) target = $region29
  $region28: #{_lambda_.12} parent=0 // pred_region
    _
  $region29: #{_lambda_.12} parent=0 // pred_fallthru
    _

// kernel: _lambda_.11
$region0: #{_lambda_.11}
  #allocation0 [shape = 'u32[]', space=smem, size = 0x4, offset = 0x4, fixed_abs, tag = 'smem constant byte address 0x4 - core index']
  #allocation1 [shape = 'u32[144,128]{1,0:T(1,128)}', space=vmem, size = 0x12000, scoped, tag = 'internal scratch']
  #allocation2 [shape = 'f32[16,32]{1,0:T(8,128)}', space=vmem, size = 0x2000, scoped, tag = 'scratch operand']
  %s0 = inlined_call_operand.vmem [shape: bf16[16,32], index: 0, kind: input, shape index: {}]
  %s1 = inlined_call_operand.vmem [shape: bf16[32,32], index: 1, kind: input, shape index: {}]
  %s2 = inlined_call_operand.vmem [shape: f32[1,32], index: 2, kind: input, shape index: {}, may-alias: {2,5}]
  %s3 = inlined_call_operand.vmem [shape: f32[16,32], index: 3, kind: input, shape index: {}]
  %s4 = inlined_call_operand.vmem [shape: f32[1,32], index: 4, kind: input, shape index: {}]
  %s5 = inlined_call_operand.vmem [shape: f32[1,32], index: 5, kind: input, shape index: {}, may-alias: {2,5}]
  %s6 = inlined_call_operand.vmem [shape: f32[16,32], index: 6, kind: output, shape index: {}]
  %s7 = sld [smem:[#allocation0]]
  $region42: #{_lambda_.11} parent=0
    _
  %s9 = ssub.s32 1, %s7
  %s10 = scalar_select 0, %s9, %s7
  // Predicated region
  $region2: #{_lambda_.11} parent=0 // pred_check
    _
  $region3: #{_lambda_.11} parent=0 // pred_check_branch
    %12 = sbr.rel (0) target = $region5
  $region4: #{_lambda_.11} parent=0 // pred_region
    _
  $region5: #{_lambda_.11} parent=0 // pred_fallthru
    _
  // Predicated region
  $region6: #{_lambda_.11} parent=0 // pred_check
    _
  $region7: #{_lambda_.11} parent=0 // pred_check_branch
    %14 = sbr.rel (0) target = $region9
  $region8: #{_lambda_.11} parent=0 // pred_region
    _
  $region9: #{_lambda_.11} parent=0 // pred_fallthru
    _
  // Predicated region
  $region10: #{_lambda_.11} parent=0 // pred_check
    _
  $region11: #{_lambda_.11} parent=0 // pred_check_branch
    %16 = sbr.rel (0) target = $region13
  $region12: #{_lambda_.11} parent=0 // pred_region
    _
  $region13: #{_lambda_.11} parent=0 // pred_fallthru
    _
  // Predicated region
  $region14: #{_lambda_.11} parent=0 // pred_check
    _
  $region15: #{_lambda_.11} parent=0 // pred_check_branch
    %18 = sbr.rel (0) target = $region17
  $region16: #{_lambda_.11} parent=0 // pred_region
    _
  $region17: #{_lambda_.11} parent=0 // pred_fallthru
    _
  // Predicated region
  $region18: #{_lambda_.11} parent=0 // pred_check
    _
  $region19: #{_lambda_.11} parent=0 // pred_check_branch
    %20 = sbr.rel (0) target = $region21
  $region20: #{_lambda_.11} parent=0 // pred_region
    _
  $region21: #{_lambda_.11} parent=0 // pred_fallthru
    _
  // Predicated region
  $region22: #{_lambda_.11} parent=0 // pred_check
    _
  $region23: #{_lambda_.11} parent=0 // pred_check_branch
    %22 = sbr.rel (0) target = $region25
  $region24: #{_lambda_.11} parent=0 // pred_region
    _
  $region25: #{_lambda_.11} parent=0 // pred_fallthru
    _
  %p24 = scmp.eq.s32.totalorder 0, 0
  // Predicated region
  $region26: #{_lambda_.11} parent=0 // pred_check
    %p25 = pneg %p24
  $region27: #{_lambda_.11} parent=0 // pred_check_branch
    %27 = sbr.rel (%p25) target = $region29
  $region28: #{_lambda_.11} parent=0 // pred_region
    %vm28 = vcmask 261120
    %29 = vst.msk [vmem:[#allocation2] sm:$0xff] %vm28, 0.0
    %30 = vst.msk [vmem:[#allocation2 + $0x8] sm:$0xff] %vm28, 0.0
  $region29: #{_lambda_.11} parent=0 // pred_fallthru
    _
  %v31 = vld [vmem:[#allocation2] sm:$0xff]
  %v32 = vld [vmem:[#allocation2 + $0x8] sm:$0xff]
  %v33 = vld [vmem:[%s0] sm:$0xf]
  %v34 = vld [vmem:[%s0 + $0x4] sm:$0xf]
  %v35 = vld [vmem:[%s1] sm:$0xf]
  %v36 = vld [vmem:[%s1 + $0x4] sm:$0xf]
  %v37 = vld [vmem:[%s1 + $0x8] sm:$0xf]
  %v38 = vld [vmem:[%s1 + $0xc] sm:$0xf]
  %v41 = vunpack.c.l.b16 %v33
  %v42 = vunpack.c.l.b16 %v34
  %v43 = vpack.c.b16 %v42, %v41
  %v48 = vunpack.c.l.b16 %v35
  %v49 = vunpack.c.l.b16 %v36
  %v50 = vunpack.c.l.b16 %v37
  %v51 = vunpack.c.l.b16 %v38
  %v52 = vpack.c.b16 %v49, %v48
  %v53 = vpack.c.b16 %v51, %v50
  %vm56 = vcmask 261120
  %v58 = vsel %vm56, %v43, 0
  %60 = vmatprep.subr.bf16.mxu0 0
  %61 = vmatpush1.bf16.msra.mxu0 %v52
  %62 = vmatprep.subr.bf16.mxu0 0
  %63 = vmatpush1.bf16.msra.mxu0 %v53
  %64 = vmatprep.subr.bf16.mxu0 0
  %65 = vmatpush1.bf16.msra.mxu0 0
  %66 = vmatprep.subr.bf16.mxu0 0
  %67 = vmatpush1.bf16.msra.mxu0 0
  %68 = vmatprep.subr.bf16.mxu0 0
  %69 = vmatpush1.bf16.msra.mxu0 0
  %70 = vmatprep.subr.bf16.mxu0 0
  %71 = vmatpush1.bf16.msra.mxu0 0
  %72 = vmatprep.subr.bf16.mxu0 0
  %73 = vmatpush1.bf16.msra.mxu0 0
  %74 = vmatprep.subr.bf16.mxu0 0
  %75 = vmatpush1.bf16.msra.mxu0 0
  %76 = vmatprep.subr.bf16.mxu0 0
  %77 = vmatpush1.bf16.msra.mxu0 0
  %78 = vmatprep.subr.bf16.mxu0 0
  %79 = vmatpush1.bf16.msra.mxu0 0
  %80 = vmatprep.subr.bf16.mxu0 0
  %81 = vmatpush1.bf16.msra.mxu0 0
  %82 = vmatprep.subr.bf16.mxu0 0
  %83 = vmatpush1.bf16.msra.mxu0 0
  %84 = vmatprep.subr.bf16.mxu0 0
  %85 = vmatpush1.bf16.msra.mxu0 0
  %86 = vmatprep.subr.bf16.mxu0 0
  %87 = vmatpush1.bf16.msra.mxu0 0
  %88 = vmatprep.subr.bf16.mxu0 0
  %89 = vmatpush1.bf16.msra.mxu0 0
  %90 = vmatprep.subr.bf16.mxu0 0
  %91 = vmatpush1.bf16.msra.mxu0 0
  %92 = vmatprep.mubr.bf16.mxu0 0
  %93 = vmatmul.mubr.bf16.gmra.mrb[0].mxu0 %v58
  %v94 = vpop.f32.mrb[0].mxu0
  %v95 = vadd.f32 0.0, %v94
  %v96 = vpop.f32.mrb[0].mxu0
  %v97 = vpop.f32.mrb[0].mxu0
  %v98 = vadd.f32 0.0, %v97
  %v99 = vpop.f32.mrb[0].mxu0
  %100 = vdwg.mxu0
  %v101 = vadd.f32 %v31, %v95
  %v102 = vadd.f32 %v32, %v98
  %103 = vst.msk [vmem:[#allocation2] sm:$0xff] %vm56, %v101
  %104 = vst.msk [vmem:[#allocation2 + $0x8] sm:$0xff] %vm56, %v102
  // Predicated region
  $region30: #{_lambda_.11} parent=0 // pred_check
    %p105 = pneg %p24
  $region31: #{_lambda_.11} parent=0 // pred_check_branch
    %107 = sbr.rel (%p105) target = $region33
  $region32: #{_lambda_.11} parent=0 // pred_region
    %v108 = vld [vmem:[#allocation2] sm:$0xff]
    %v109 = vld [vmem:[#allocation2 + $0x8] sm:$0xff]
    %v110 = vld [vmem:[%s2] sm:$0x1]
    %v112 = vlaneseq
    %v113 = vshrl.u32 %v112, 7
    %v114 = vsub.s32 0, %v113
    %v115 = vrot.slane %v110, %v114
    %v117 = vadd.f32 %v108, %v115
    %v118 = vadd.f32 %v109, %v115
    %v119 = vld [vmem:[%s3] sm:$0xff]
    %v120 = vld [vmem:[%s3 + $0x8] sm:$0xff]
    %v121 = vadd.f32 %v117, %v119
    %v122 = vadd.f32 %v118, %v120
    %v123 = vsel %vm56, %v121, 0.0
    %124 = vadd.xlane.f32.xlu0 %v123
    %v125 = vpop.xlane.xlu0 %124
    %v126 = vsel %vm56, %v122, 0.0
    %127 = vadd.xlane.f32.xlu0 %v126
    %v128 = vpop.xlane.xlu0 %127
    %v129 = vrcp.pop 32.0
    %v130 = vmul.f32 %v125, %v129
    %v131 = vmul.f32 %v128, %v129
    %v132 = vsub.f32 %v121, %v130
    %v133 = vsub.f32 %v122, %v131
    %v134 = vmul.f32 %v132, %v132
    %v135 = vmul.f32 %v133, %v133
    %v136 = vsel %vm56, %v134, 0.0
    %137 = vadd.xlane.f32.xlu0 %v136
    %v138 = vpop.xlane.xlu0 %137
    %v139 = vsel %vm56, %v135, 0.0
    %140 = vadd.xlane.f32.xlu0 %v139
    %v141 = vpop.xlane.xlu0 %140
    %v142 = vmul.f32 %v138, %v129
    %v143 = vmul.f32 %v141, %v129
    %v144 = vadd.f32 %v142, 1e-05
    %v145 = vadd.f32 %v143, 1e-05
    %v146 = vrsqrt.pop %v144
    %v147 = vrsqrt.pop %v145
    %v148 = vmul.f32 %v132, %v146
    %v149 = vmul.f32 %v133, %v147
    %v150 = vld [vmem:[%s4] sm:$0x1]
    %v152 = vlaneseq
    %v153 = vshrl.u32 %v152, 7
    %v154 = vsub.s32 0, %v153
    %v155 = vrot.slane %v150, %v154
    %v157 = vmul.f32 %v148, %v155
    %v158 = vmul.f32 %v149, %v155
    %v159 = vld [vmem:[%s5] sm:$0x1]
    %v161 = vlaneseq
    %v162 = vshrl.u32 %v161, 7
    %v163 = vsub.s32 0, %v162
    %v164 = vrot.slane %v159, %v163
    %v166 = vadd.f32 %v157, %v164
    %v167 = vadd.f32 %v158, %v164
    %168 = vst.msk [vmem:[%s6] sm:$0xff] %vm56, %v166
    %169 = vst.msk [vmem:[%s6 + $0x8] sm:$0xff] %vm56, %v167
  $region33: #{_lambda_.11} parent=0 // pred_fallthru
    _
  // Predicated region
  $region34: #{_lambda_.11} parent=0 // pred_check
    _
  $region35: #{_lambda_.11} parent=0 // pred_check_branch
    %171 = sbr.rel (0) target = $region37
  $region36: #{_lambda_.11} parent=0 // pred_region
    _
  $region37: #{_lambda_.11} parent=0 // pred_fallthru
    _
  // Predicated region
  $region38: #{_lambda_.11} parent=0 // pred_check
    _
  $region39: #{_lambda_.11} parent=0 // pred_check_branch
    %173 = sbr.rel (0) target = $region41
  $region40: #{_lambda_.11} parent=0 // pred_region
    _
  $region41: #{_lambda_.11} parent=0 // pred_fallthru
    _

// kernel: _lambda_.13
$region0: #{_lambda_.13}
  #allocation0 [shape = 'u32[]', space=smem, size = 0x4, offset = 0x4, fixed_abs, tag = 'smem constant byte address 0x4 - core index']
  #allocation1 [shape = 'u32[144,128]{1,0:T(1,128)}', space=vmem, size = 0x12000, scoped, tag = 'internal scratch']
  #allocation2 [shape = 'f32[32,64]{1,0:T(8,128)}', space=vmem, size = 0x4000, scoped, tag = 'scratch operand']
  %s0 = inlined_call_operand.vmem [shape: f32[32,32], index: 0, kind: input, shape index: {}]
  %s1 = inlined_call_operand.vmem [shape: bf16[32,64], index: 1, kind: input, shape index: {}]
  %s2 = inlined_call_operand.vmem [shape: f32[1,64], index: 2, kind: input, shape index: {}]
  %s3 = inlined_call_operand.vmem [shape: bf16[32,64], index: 3, kind: output, shape index: {}]
  %s4 = sld [smem:[#allocation0]]
  $region30: #{_lambda_.13} parent=0
    _
  %s6 = ssub.s32 1, %s4
  %s7 = scalar_select 0, %s6, %s4
  // Predicated region
  $region2: #{_lambda_.13} parent=0 // pred_check
    _
  $region3: #{_lambda_.13} parent=0 // pred_check_branch
    %9 = sbr.rel (0) target = $region5
  $region4: #{_lambda_.13} parent=0 // pred_region
    _
  $region5: #{_lambda_.13} parent=0 // pred_fallthru
    _
  // Predicated region
  $region6: #{_lambda_.13} parent=0 // pred_check
    _
  $region7: #{_lambda_.13} parent=0 // pred_check_branch
    %11 = sbr.rel (0) target = $region9
  $region8: #{_lambda_.13} parent=0 // pred_region
    _
  $region9: #{_lambda_.13} parent=0 // pred_fallthru
    _
  // Predicated region
  $region10: #{_lambda_.13} parent=0 // pred_check
    _
  $region11: #{_lambda_.13} parent=0 // pred_check_branch
    %13 = sbr.rel (0) target = $region13
  $region12: #{_lambda_.13} parent=0 // pred_region
    _
  $region13: #{_lambda_.13} parent=0 // pred_fallthru
    _
  %p15 = scmp.eq.s32.totalorder 0, 0
  // Predicated region
  $region14: #{_lambda_.13} parent=0 // pred_check
    %p16 = pneg %p15
  $region15: #{_lambda_.13} parent=0 // pred_check_branch
    %18 = sbr.rel (%p16) target = $region17
  $region16: #{_lambda_.13} parent=0 // pred_region
    %vm19 = vcmask 523264
    %20 = vst.msk [vmem:[#allocation2] sm:$0xff] %vm19, 0.0
    %21 = vst.msk [vmem:[#allocation2 + $0x8] sm:$0xff] %vm19, 0.0
    %22 = vst.msk [vmem:[#allocation2 + $0x10] sm:$0xff] %vm19, 0.0
    %23 = vst.msk [vmem:[#allocation2 + $0x18] sm:$0xff] %vm19, 0.0
  $region17: #{_lambda_.13} parent=0 // pred_fallthru
    _
  %v24 = vld [vmem:[#allocation2] sm:$0xff]
  %v25 = vld [vmem:[#allocation2 + $0x8] sm:$0xff]
  %v26 = vld [vmem:[#allocation2 + $0x10] sm:$0xff]
  %v27 = vld [vmem:[#allocation2 + $0x18] sm:$0xff]
  %v28 = vld [vmem:[%s0] sm:$0xff]
  %v29 = vld [vmem:[%s0 + $0x8] sm:$0xff]
  %v30 = vld [vmem:[%s0 + $0x10] sm:$0xff]
  %v31 = vld [vmem:[%s0 + $0x18] sm:$0xff]
  %v32 = vpack.c.bf16 %v29, %v28
  %v33 = vpack.c.bf16 %v31, %v30
  %v34 = vld [vmem:[%s1] sm:$0xf]
  %v35 = vld [vmem:[%s1 + $0x4] sm:$0xf]
  %v36 = vld [vmem:[%s1 + $0x8] sm:$0xf]
  %v37 = vld [vmem:[%s1 + $0xc] sm:$0xf]
  %v42 = vunpack.c.l.b16 %v34
  %v43 = vunpack.c.l.b16 %v35
  %v44 = vunpack.c.l.b16 %v36
  %v45 = vunpack.c.l.b16 %v37
  %v46 = vpack.c.b16 %v43, %v42
  %v47 = vpack.c.b16 %v45, %v44
  %vm50 = vcmask 261120
  %v52 = vsel %vm50, %v32, 0
  %v55 = vsel %vm50, %v33, 0
  %57 = vmatprep.subr.bf16.mxu0 0
  %58 = vmatpush1.bf16.msra.mxu0 %v46
  %59 = vmatprep.subr.bf16.mxu0 0
  %60 = vmatpush1.bf16.msra.mxu0 %v47
  %61 = vmatprep.subr.bf16.mxu0 0
  %62 = vmatpush1.bf16.msra.mxu0 0
  %63 = vmatprep.subr.bf16.mxu0 0
  %64 = vmatpush1.bf16.msra.mxu0 0
  %65 = vmatprep.subr.bf16.mxu0 0
  %66 = vmatpush1.bf16.msra.mxu0 0
  %67 = vmatprep.subr.bf16.mxu0 0
  %68 = vmatpush1.bf16.msra.mxu0 0
  %69 = vmatprep.subr.bf16.mxu0 0
  %70 = vmatpush1.bf16.msra.mxu0 0
  %71 = vmatprep.subr.bf16.mxu0 0
  %72 = vmatpush1.bf16.msra.mxu0 0
  %73 = vmatprep.subr.bf16.mxu0 0
  %74 = vmatpush1.bf16.msra.mxu0 0
  %75 = vmatprep.subr.bf16.mxu0 0
  %76 = vmatpush1.bf16.msra.mxu0 0
  %77 = vmatprep.subr.bf16.mxu0 0
  %78 = vmatpush1.bf16.msra.mxu0 0
  %79 = vmatprep.subr.bf16.mxu0 0
  %80 = vmatpush1.bf16.msra.mxu0 0
  %81 = vmatprep.subr.bf16.mxu0 0
  %82 = vmatpush1.bf16.msra.mxu0 0
  %83 = vmatprep.subr.bf16.mxu0 0
  %84 = vmatpush1.bf16.msra.mxu0 0
  %85 = vmatprep.subr.bf16.mxu0 0
  %86 = vmatpush1.bf16.msra.mxu0 0
  %87 = vmatprep.subr.bf16.mxu0 0
  %88 = vmatpush1.bf16.msra.mxu0 0
  %89 = vmatprep.mubr.bf16.mxu0 0
  %90 = vmatmul.mubr.bf16.gmra.mrb[0].mxu0 %v52
  %v91 = vpop.f32.mrb[0].mxu0
  %v92 = vadd.f32 0.0, %v91
  %v93 = vpop.f32.mrb[0].mxu0
  %v94 = vpop.f32.mrb[0].mxu0
  %v95 = vadd.f32 0.0, %v94
  %v96 = vpop.f32.mrb[0].mxu0
  %97 = vmatprep.mubr.bf16.mxu0 0
  %98 = vmatmul.mubr.bf16.gmra.mrb[0].mxu0 %v55
  %v99 = vpop.f32.mrb[0].mxu0
  %v100 = vadd.f32 0.0, %v99
  %v101 = vpop.f32.mrb[0].mxu0
  %v102 = vpop.f32.mrb[0].mxu0
  %v103 = vadd.f32 0.0, %v102
  %v104 = vpop.f32.mrb[0].mxu0
  %105 = vdwg.mxu0
  %v106 = vadd.f32 %v24, %v92
  %v107 = vadd.f32 %v25, %v95
  %v108 = vadd.f32 %v26, %v100
  %v109 = vadd.f32 %v27, %v103
  %vm110 = vcmask 523264
  %111 = vst.msk [vmem:[#allocation2] sm:$0xff] %vm110, %v106
  %112 = vst.msk [vmem:[#allocation2 + $0x8] sm:$0xff] %vm110, %v107
  %113 = vst.msk [vmem:[#allocation2 + $0x10] sm:$0xff] %vm110, %v108
  %114 = vst.msk [vmem:[#allocation2 + $0x18] sm:$0xff] %vm110, %v109
  // Predicated region
  $region18: #{_lambda_.13} parent=0 // pred_check
    %p115 = pneg %p15
  $region19: #{_lambda_.13} parent=0 // pred_check_branch
    %117 = sbr.rel (%p115) target = $region21
  $region20: #{_lambda_.13} parent=0 // pred_region
    %v118 = vld [vmem:[#allocation2] sm:$0xff]
    %v119 = vld [vmem:[#allocation2 + $0x8] sm:$0xff]
    %v120 = vld [vmem:[#allocation2 + $0x10] sm:$0xff]
    %v121 = vld [vmem:[#allocation2 + $0x18] sm:$0xff]
    %v122 = vld [vmem:[%s2] sm:$0x1]
    %v124 = vlaneseq
    %v125 = vshrl.u32 %v124, 7
    %v126 = vsub.s32 0, %v125
    %v127 = vrot.slane %v122, %v126
    %v129 = vadd.f32 %v118, %v127
    %v130 = vadd.f32 %v119, %v127
    %v131 = vadd.f32 %v120, %v127
    %v132 = vadd.f32 %v121, %v127
    %v133 = vpack.c.bf16 %v130, %v129
    %v134 = vpack.c.bf16 %v132, %v131
    %v137 = vunpack.c.l.b16 %v133
    %v138 = vunpack.c.h.b16 %v133
    %v139 = vunpack.c.l.b16 %v134
    %v140 = vunpack.c.h.b16 %v134
    %v141 = vpack.c.b16 %v137, %v137
    %v142 = vpack.c.b16 %v138, %v138
    %v143 = vpack.c.b16 %v139, %v139
    %v144 = vpack.c.b16 %v140, %v140
    %vm149 = vcmask 519168
    %150 = vst.msk [vmem:[%s3] sm:$0xf] %vm149, %v141
    %151 = vst.msk [vmem:[%s3 + $0x4] sm:$0xf] %vm149, %v142
    %152 = vst.msk [vmem:[%s3 + $0x8] sm:$0xf] %vm149, %v143
    %153 = vst.msk [vmem:[%s3 + $0xc] sm:$0xf] %vm149, %v144
  $region21: #{_lambda_.13} parent=0 // pred_fallthru
    _
  // Predicated region
  $region22: #{_lambda_.13} parent=0 // pred_check
    _
  $region23: #{_lambda_.13} parent=0 // pred_check_branch
    %155 = sbr.rel (0) target = $region25
  $region24: #{_lambda_.13} parent=0 // pred_region
    _
  $region25: #{_lambda_.13} parent=0 // pred_fallthru
    _
  // Predicated region
  $region26: #{_lambda_.13} parent=0 // pred_check
    _
  $region27: #{_lambda_.13} parent=0 // pred_check_branch
    %157 = sbr.rel (0) target = $region29
  $region28: #{_lambda_.13} parent=0 // pred_region
    _
  $region29: #{_lambda_.13} parent=0 // pred_fallthru
    _

// kernel: _lambda_.16
$region0: #{_lambda_.16}
  #allocation0 [shape = 'u32[]', space=smem, size = 0x4, offset = 0x4, fixed_abs, tag = 'smem constant byte address 0x4 - core index']
  #allocation1 [shape = 'u32[144,128]{1,0:T(1,128)}', space=vmem, size = 0x12000, scoped, tag = 'internal scratch']
  #allocation2 [shape = 'f32[16,64]{1,0:T(8,128)}', space=vmem, size = 0x2000, scoped, tag = 'scratch operand']
  %s0 = inlined_call_operand.vmem [shape: f32[16,32], index: 0, kind: input, shape index: {}]
  %s1 = inlined_call_operand.vmem [shape: bf16[32,64], index: 1, kind: input, shape index: {}]
  %s2 = inlined_call_operand.vmem [shape: f32[1,64], index: 2, kind: input, shape index: {}]
  %s3 = inlined_call_operand.vmem [shape: bf16[16,64], index: 3, kind: output, shape index: {}]
  %s4 = sld [smem:[#allocation0]]
  $region30: #{_lambda_.16} parent=0
    _
  %s6 = ssub.s32 1, %s4
  %s7 = scalar_select 0, %s6, %s4
  // Predicated region
  $region2: #{_lambda_.16} parent=0 // pred_check
    _
  $region3: #{_lambda_.16} parent=0 // pred_check_branch
    %9 = sbr.rel (0) target = $region5
  $region4: #{_lambda_.16} parent=0 // pred_region
    _
  $region5: #{_lambda_.16} parent=0 // pred_fallthru
    _
  // Predicated region
  $region6: #{_lambda_.16} parent=0 // pred_check
    _
  $region7: #{_lambda_.16} parent=0 // pred_check_branch
    %11 = sbr.rel (0) target = $region9
  $region8: #{_lambda_.16} parent=0 // pred_region
    _
  $region9: #{_lambda_.16} parent=0 // pred_fallthru
    _
  // Predicated region
  $region10: #{_lambda_.16} parent=0 // pred_check
    _
  $region11: #{_lambda_.16} parent=0 // pred_check_branch
    %13 = sbr.rel (0) target = $region13
  $region12: #{_lambda_.16} parent=0 // pred_region
    _
  $region13: #{_lambda_.16} parent=0 // pred_fallthru
    _
  %p15 = scmp.eq.s32.totalorder 0, 0
  // Predicated region
  $region14: #{_lambda_.16} parent=0 // pred_check
    %p16 = pneg %p15
  $region15: #{_lambda_.16} parent=0 // pred_check_branch
    %18 = sbr.rel (%p16) target = $region17
  $region16: #{_lambda_.16} parent=0 // pred_region
    %vm19 = vcmask 523264
    %20 = vst.msk [vmem:[#allocation2] sm:$0xff] %vm19, 0.0
    %21 = vst.msk [vmem:[#allocation2 + $0x8] sm:$0xff] %vm19, 0.0
  $region17: #{_lambda_.16} parent=0 // pred_fallthru
    _
  %v22 = vld [vmem:[#allocation2] sm:$0xff]
  %v23 = vld [vmem:[#allocation2 + $0x8] sm:$0xff]
  %v24 = vld [vmem:[%s0] sm:$0xff]
  %v25 = vld [vmem:[%s0 + $0x8] sm:$0xff]
  %v26 = vpack.c.bf16 %v25, %v24
  %v27 = vld [vmem:[%s1] sm:$0xf]
  %v28 = vld [vmem:[%s1 + $0x4] sm:$0xf]
  %v29 = vld [vmem:[%s1 + $0x8] sm:$0xf]
  %v30 = vld [vmem:[%s1 + $0xc] sm:$0xf]
  %v35 = vunpack.c.l.b16 %v27
  %v36 = vunpack.c.l.b16 %v28
  %v37 = vunpack.c.l.b16 %v29
  %v38 = vunpack.c.l.b16 %v30
  %v39 = vpack.c.b16 %v36, %v35
  %v40 = vpack.c.b16 %v38, %v37
  %vm43 = vcmask 261120
  %v45 = vsel %vm43, %v26, 0
  %47 = vmatprep.subr.bf16.mxu0 0
  %48 = vmatpush1.bf16.msra.mxu0 %v39
  %49 = vmatprep.subr.bf16.mxu0 0
  %50 = vmatpush1.bf16.msra.mxu0 %v40
  %51 = vmatprep.subr.bf16.mxu0 0
  %52 = vmatpush1.bf16.msra.mxu0 0
  %53 = vmatprep.subr.bf16.mxu0 0
  %54 = vmatpush1.bf16.msra.mxu0 0
  %55 = vmatprep.subr.bf16.mxu0 0
  %56 = vmatpush1.bf16.msra.mxu0 0
  %57 = vmatprep.subr.bf16.mxu0 0
  %58 = vmatpush1.bf16.msra.mxu0 0
  %59 = vmatprep.subr.bf16.mxu0 0
  %60 = vmatpush1.bf16.msra.mxu0 0
  %61 = vmatprep.subr.bf16.mxu0 0
  %62 = vmatpush1.bf16.msra.mxu0 0
  %63 = vmatprep.subr.bf16.mxu0 0
  %64 = vmatpush1.bf16.msra.mxu0 0
  %65 = vmatprep.subr.bf16.mxu0 0
  %66 = vmatpush1.bf16.msra.mxu0 0
  %67 = vmatprep.subr.bf16.mxu0 0
  %68 = vmatpush1.bf16.msra.mxu0 0
  %69 = vmatprep.subr.bf16.mxu0 0
  %70 = vmatpush1.bf16.msra.mxu0 0
  %71 = vmatprep.subr.bf16.mxu0 0
  %72 = vmatpush1.bf16.msra.mxu0 0
  %73 = vmatprep.subr.bf16.mxu0 0
  %74 = vmatpush1.bf16.msra.mxu0 0
  %75 = vmatprep.subr.bf16.mxu0 0
  %76 = vmatpush1.bf16.msra.mxu0 0
  %77 = vmatprep.subr.bf16.mxu0 0
  %78 = vmatpush1.bf16.msra.mxu0 0
  %79 = vmatprep.mubr.bf16.mxu0 0
  %80 = vmatmul.mubr.bf16.gmra.mrb[0].mxu0 %v45
  %v81 = vpop.f32.mrb[0].mxu0
  %v82 = vadd.f32 0.0, %v81
  %v83 = vpop.f32.mrb[0].mxu0
  %v84 = vpop.f32.mrb[0].mxu0
  %v85 = vadd.f32 0.0, %v84
  %v86 = vpop.f32.mrb[0].mxu0
  %87 = vdwg.mxu0
  %v88 = vadd.f32 %v22, %v82
  %v89 = vadd.f32 %v23, %v85
  %vm90 = vcmask 523264
  %91 = vst.msk [vmem:[#allocation2] sm:$0xff] %vm90, %v88
  %92 = vst.msk [vmem:[#allocation2 + $0x8] sm:$0xff] %vm90, %v89
  // Predicated region
  $region18: #{_lambda_.16} parent=0 // pred_check
    %p93 = pneg %p15
  $region19: #{_lambda_.16} parent=0 // pred_check_branch
    %95 = sbr.rel (%p93) target = $region21
  $region20: #{_lambda_.16} parent=0 // pred_region
    %v96 = vld [vmem:[#allocation2] sm:$0xff]
    %v97 = vld [vmem:[#allocation2 + $0x8] sm:$0xff]
    %v98 = vld [vmem:[%s2] sm:$0x1]
    %v100 = vlaneseq
    %v101 = vshrl.u32 %v100, 7
    %v102 = vsub.s32 0, %v101
    %v103 = vrot.slane %v98, %v102
    %v105 = vadd.f32 %v96, %v103
    %v106 = vadd.f32 %v97, %v103
    %v107 = vmax.f32 %v105, 0.0
    %v108 = vmax.f32 %v106, 0.0
    %v109 = vpack.c.bf16 %v108, %v107
    %v111 = vunpack.c.l.b16 %v109
    %v112 = vunpack.c.h.b16 %v109
    %v113 = vpack.c.b16 %v111, %v111
    %v114 = vpack.c.b16 %v112, %v112
    %vm117 = vcmask 519168
    %118 = vst.msk [vmem:[%s3] sm:$0xf] %vm117, %v113
    %119 = vst.msk [vmem:[%s3 + $0x4] sm:$0xf] %vm117, %v114
  $region21: #{_lambda_.16} parent=0 // pred_fallthru
    _
  // Predicated region
  $region22: #{_lambda_.16} parent=0 // pred_check
    _
  $region23: #{_lambda_.16} parent=0 // pred_check_branch
    %121 = sbr.rel (0) target = $region25
  $region24: #{_lambda_.16} parent=0 // pred_region
    _
  $region25: #{_lambda_.16} parent=0 // pred_fallthru
    _
  // Predicated region
  $region26: #{_lambda_.16} parent=0 // pred_check
    _
  $region27: #{_lambda_.16} parent=0 // pred_check_branch
    %123 = sbr.rel (0) target = $region29
  $region28: #{_lambda_.16} parent=0 // pred_region
    _
  $region29: #{_lambda_.16} parent=0 // pred_fallthru
    _

// kernel: _lambda_.14
$region0: #{_lambda_.14}
  #allocation0 [shape = 'u32[]', space=smem, size = 0x4, offset = 0x4, fixed_abs, tag = 'smem constant byte address 0x4 - core index']
  #allocation1 [shape = 'u32[144,128]{1,0:T(1,128)}', space=vmem, size = 0x12000, scoped, tag = 'internal scratch']
  %s0 = inlined_call_operand.vmem [shape: bf16[2,8,32], index: 0, kind: input, shape index: {}]
  %s1 = inlined_call_operand.vmem [shape: bf16[2,16,64], index: 1, kind: input, shape index: {}]
  %s2 = inlined_call_operand.vmem [shape: bf16[2,8,32], index: 2, kind: output, shape index: {0}]
  %s3 = inlined_call_operand.hbm [shape: f32[2,8,16], index: 3, kind: output, shape index: {1}]
  %4 = xla_tuple %s2, %s3
  %s5 = sld [smem:[#allocation0]]
  $region49: #{_lambda_.14} parent=0
    _
  %s7 = ssub.s32 1, %s5
  %s8 = scalar_select 0, %s7, %s5
  $region1: #{_lambda_.14} parent=0
    #allocation2 [shape = 'u8[8192]{0}', space=vmem, size = 0x2000, scoped, tag = 'output window, operand 1']
    #allocation3 [shape = 's32[2]{0}', space=sflag, size = 0x8, scoped, tag = 'scoped memory for _lambda_.14']
    %9 = vsyncpa [#allocation3], 0
    %s10 = scalar_lea.sflag [#allocation3], 1
    %11 = vsyncpa %s10, 0
    loop: start=0, step=1, limit=4
    $region2: #{_lambda_.14} parent=1 // loop_pre_header
      _
    $region3: #{_lambda_.14} parent=1 // loop_header
      %s13 = sphi 0, %s17
      %p14 = scmp.ge.s32.totalorder %s13, 4
      %s23 = sphi 0, %s25
      %s26 = sphi 0, %s23
      %s27 = sphi 0, %s26
      %s43 = sphi 0, %s27
      %s49 = sphi 0, %s51
      %s52 = sphi 0, %s49
      %s53 = sphi 0, %s52
      %s69 = sphi 0, %s53
      %s75 = sphi 0, %s77
      %s78 = sphi 0, %s75
      %s79 = sphi 0, %s78
      %s95 = sphi 0, %s79
      %s101 = sphi 0, %s103
      %s104 = sphi 0, %s101
      %s105 = sphi 0, %s104
      %s121 = sphi 0, %s105
    $region4: #{_lambda_.14} parent=1 // loop_header_branch
      %16 = sbr.rel (%p14) target = $region8
    $region5: #{_lambda_.14} parent=1 // loop_body
      %s18 = ssub.s32 %s13, 1
      %s19 = ssub.s32 %s13, 2
      %s20 = sadd.s32 %s13, 1
      %s21 = ssub.s32 %s13, %s20
      %p22 = scmp.eq.s32.totalorder %s21, 0
      %s24 = sadd.s32 %s23, 1
      %s25 = scalar_select %p22, %s23, %s24
      %p28 = pneg %p22
      %p29 = scmp.eq.s32.totalorder %s13, 1
      %p30 = por %p28, %p29
      %p31 = scmp.ne.s32.totalorder %s23, %s26
      %p32 = scmp.eq.s32.totalorder %s13, 0
      %p33 = por %p31, %p32
      %p34 = scmp.ne.s32.totalorder %s23, %s26
      %p35 = scmp.eq.s32.totalorder %s18, 1
      %p36 = por %p34, %p35
      %p37 = scmp.ne.s32.totalorder %s26, %s27
      %p38 = scmp.eq.s32.totalorder %s18, 0
      %p39 = por %p37, %p38
      %p40 = scmp.ne.s32.totalorder %s26, %s27
      %p41 = scmp.eq.s32.totalorder %s19, 1
      %p42 = por %p40, %p41
      %p44 = scmp.ne.s32.totalorder %s27, %s43
      %p45 = scmp.eq.s32.totalorder %s19, 0
      %p46 = por %p44, %p45
      %s47 = ssub.s32 %s13, %s20
      %p48 = scmp.eq.s32.totalorder %s47, 0
      %s50 = sadd.s32 %s49, 1
      %s51 = scalar_select %p48, %s49, %s50
      %p54 = pneg %p48
      %p55 = scmp.eq.s32.totalorder %s13, 1
      %p56 = por %p54, %p55
      %p57 = scmp.ne.s32.totalorder %s49, %s52
      %p58 = scmp.eq.s32.totalorder %s13, 0
      %p59 = por %p57, %p58
      %p60 = scmp.ne.s32.totalorder %s49, %s52
      %p61 = scmp.eq.s32.totalorder %s18, 1
      %p62 = por %p60, %p61
      %p63 = scmp.ne.s32.totalorder %s52, %s53
      %p64 = scmp.eq.s32.totalorder %s18, 0
      %p65 = por %p63, %p64
      %p66 = scmp.ne.s32.totalorder %s52, %s53
      %p67 = scmp.eq.s32.totalorder %s19, 1
      %p68 = por %p66, %p67
      %p70 = scmp.ne.s32.totalorder %s53, %s69
      %p71 = scmp.eq.s32.totalorder %s19, 0
      %p72 = por %p70, %p71
      %s73 = ssub.s32 %s13, %s20
      %p74 = scmp.eq.s32.totalorder %s73, 0
      %s76 = sadd.s32 %s75, 1
      %s77 = scalar_select %p74, %s75, %s76
      %p80 = pneg %p74
      %p81 = scmp.eq.s32.totalorder %s13, 1
      %p82 = por %p80, %p81
      %p83 = scmp.ne.s32.totalorder %s75, %s78
      %p84 = scmp.eq.s32.totalorder %s13, 0
      %p85 = por %p83, %p84
      %p86 = scmp.ne.s32.totalorder %s75, %s78
      %p87 = scmp.eq.s32.totalorder %s18, 1
      %p88 = por %p86, %p87
      %p89 = scmp.ne.s32.totalorder %s78, %s79
      %p90 = scmp.eq.s32.totalorder %s18, 0
      %p91 = por %p89, %p90
      %p92 = scmp.ne.s32.totalorder %s78, %s79
      %p93 = scmp.eq.s32.totalorder %s19, 1
      %p94 = por %p92, %p93
      %p96 = scmp.ne.s32.totalorder %s79, %s95
      %p97 = scmp.eq.s32.totalorder %s19, 0
      %p98 = por %p96, %p97
      %s99 = ssub.s32 %s13, %s20
      %p100 = scmp.eq.s32.totalorder %s99, 0
      %s102 = sadd.s32 %s101, 1
      %s103 = scalar_select %p100, %s101, %s102
      %p106 = pneg %p100
      %p107 = scmp.eq.s32.totalorder %s13, 1
      %p108 = por %p106, %p107
      %p109 = scmp.ne.s32.totalorder %s101, %s104
      %p110 = scmp.eq.s32.totalorder %s13, 0
      %p111 = por %p109, %p110
      %p112 = scmp.ne.s32.totalorder %s101, %s104
      %p113 = scmp.eq.s32.totalorder %s18, 1
      %p114 = por %p112, %p113
      %p115 = scmp.ne.s32.totalorder %s104, %s105
      %p116 = scmp.eq.s32.totalorder %s18, 0
      %p117 = por %p115, %p116
      %p118 = scmp.ne.s32.totalorder %s104, %s105
      %p119 = scmp.eq.s32.totalorder %s19, 1
      %p120 = por %p118, %p119
      %p122 = scmp.ne.s32.totalorder %s105, %s121
      %p123 = scmp.eq.s32.totalorder %s19, 0
      %p124 = por %p122, %p123
      %p125 = scmp.le.s32.totalorder 1, %s13
      %p126 = scmp.lt.s32.totalorder %s13, 3
      %p127 = pnand %p125, %p126
      %p128 = pneg %p127
      // Predicated region
      $region9: #{_lambda_.14} parent=5 // pred_check
        _
      $region10: #{_lambda_.14} parent=5 // pred_check_branch
        %130 = sbr.rel (%p127) target = $region12
      $region11: #{_lambda_.14} parent=5 // pred_region
        %s131 = ssub.s32 %s13, 1
      $region12: #{_lambda_.14} parent=5 // pred_fallthru
        _
      %p132 = scmp.lt.s32.totalorder %s13, 2
      // Predicated region
      $region13: #{_lambda_.14} parent=5 // pred_check
        %p133 = pneg %p132
      $region14: #{_lambda_.14} parent=5 // pred_check_branch
        %135 = sbr.rel (%p133) target = $region16
      $region15: #{_lambda_.14} parent=5 // pred_region
        // Predicated region
        $region17: #{_lambda_.14} parent=15 // pred_check
          %p136 = pneg %p33
        $region18: #{_lambda_.14} parent=15 // pred_check_branch
          %138 = sbr.rel (%p136) target = $region20
        $region19: #{_lambda_.14} parent=15 // pred_region
          %p139 = scmp.lt.s32.totalorder %s13, 1
          %s140 = scalar_select %p139, %s13, 1
          %s141 = smul.addr %s140, 4
          %s142 = scalar_lea.vmem %s0, %s141
        $region20: #{_lambda_.14} parent=15 // pred_fallthru
          _
        // Predicated region
        $region21: #{_lambda_.14} parent=15 // pred_check
          %p143 = pneg %p59
        $region22: #{_lambda_.14} parent=15 // pred_check_branch
          %145 = sbr.rel (%p143) target = $region24
        $region23: #{_lambda_.14} parent=15 // pred_region
          %p146 = scmp.lt.s32.totalorder %s13, 1
          %s147 = scalar_select %p146, %s13, 1
          %s148 = smul.addr %s147, 2
          %s149 = smul.addr %s148, 4
          %s150 = scalar_lea.vmem %s1, %s149
        $region24: #{_lambda_.14} parent=15 // pred_fallthru
          _
      $region16: #{_lambda_.14} parent=5 // pred_fallthru
        _
      %p151 = scmp.le.s32.totalorder 1, %s13
      %p152 = scmp.lt.s32.totalorder %s13, 3
      %p153 = pnand %p151, %p152
      %p154 = pneg %p153
      // Predicated region
      $region25: #{_lambda_.14} parent=5 // pred_check
        _
      $region26: #{_lambda_.14} parent=5 // pred_check_branch
        %156 = sbr.rel (%p153) target = $region28
      $region27: #{_lambda_.14} parent=5 // pred_region
        %s157 = ssub.s32 %s13, 1
        %p158 = scmp.lt.s32.totalorder %s18, 1
        %s159 = scalar_select %p158, %s18, 1
        %s160 = smul.addr %s159, 4
        %s161 = scalar_lea.vmem %s0, %s160
        %p162 = pneg %p39
        %p163 = pneg %p36
        %p164 = scmp.lt.s32.totalorder %s18, 1
        %s165 = scalar_select %p164, %s18, 1
        %s166 = smul.addr %s165, 2
        %s167 = smul.addr %s166, 4
        %s168 = scalar_lea.vmem %s1, %s167
        %p169 = pneg %p65
        %p170 = pneg %p62
        %p171 = pneg %p91
        %p172 = pneg %p88
        %p173 = scmp.lt.s32.totalorder %s18, 1
        %s174 = scalar_select %p173, %s18, 1
        %s175 = smul.addr %s174, 4
        %s176 = scalar_lea.vmem %s2, %s175
        %p177 = pneg %p117
        %p178 = pneg %p114
        %s179 = sand.u32 %s104, 1
        %s180 = scalar_lea.sflag [#allocation3], %s179
        %s181 = sand.u32 %s104, 1
        %s182 = smul.addr %s181, 8
        %s183 = scalar_lea.vmem [#allocation2], %s182
        %p184 = scmp.lt.s32.totalorder %s18, 1
        %s185 = scalar_select %p184, %s18, 1
        %s186 = smul.addr %s185, 4
        %s187 = scalar_lea.vmem %s0, %s186
        %p188 = scmp.lt.s32.totalorder %s18, 1
        %s189 = scalar_select %p188, %s18, 1
        %s190 = smul.addr %s189, 2
        %s191 = smul.addr %s190, 4
        %s192 = scalar_lea.vmem %s1, %s191
        %p193 = scmp.lt.s32.totalorder %s18, 1
        %s194 = scalar_select %p193, %s18, 1
        %s195 = smul.addr %s194, 4
        %s196 = scalar_lea.vmem %s2, %s195
        %v198 = vld [vmem:[%s187] sm:$0xf]
        %v199 = vld [vmem:[%s192] sm:$0xf]
        %v200 = vld [vmem:[%s192 + $0x4] sm:$0xf]
        %v203 = vunpack.c.l.b16 %v199
        %v204 = vunpack.c.l.b16 %v200
        %v205 = vpack.c.b16 %v204, %v203
        %vm206 = vcmask 64512
        %v208 = vsel %vm206, %v198, 0
        %v211 = vsel %vm206, %v205, 0
        %213 = vmatprep.subr.bf16.mxu0 0
        %214 = vmatpush1.bf16.xpose.msra.mxu0 %v211
        %215 = vmatprep.subr.bf16.mxu0 0
        %216 = vmatpush1.bf16.xpose.msra.mxu0 0
        %217 = vmatprep.subr.bf16.mxu0 0
        %218 = vmatpush1.bf16.xpose.msra.mxu0 0
        %219 = vmatprep.subr.bf16.mxu0 0
        %220 = vmatpush1.bf16.xpose.msra.mxu0 0
        %221 = vmatprep.subr.bf16.mxu0 0
        %222 = vmatpush1.bf16.xpose.msra.mxu0 0
        %223 = vmatprep.subr.bf16.mxu0 0
        %224 = vmatpush1.bf16.xpose.msra.mxu0 0
        %225 = vmatprep.subr.bf16.mxu0 0
        %226 = vmatpush1.bf16.xpose.msra.mxu0 0
        %227 = vmatprep.subr.bf16.mxu0 0
        %228 = vmatpush1.bf16.xpose.msra.mxu0 0
        %229 = vmatprep.subr.bf16.mxu0 0
        %230 = vmatpush1.bf16.xpose.msra.mxu0 0
        %231 = vmatprep.subr.bf16.mxu0 0
        %232 = vmatpush1.bf16.xpose.msra.mxu0 0
        %233 = vmatprep.subr.bf16.mxu0 0
        %234 = vmatpush1.bf16.xpose.msra.mxu0 0
        %235 = vmatprep.subr.bf16.mxu0 0
        %236 = vmatpush1.bf16.xpose.msra.mxu0 0
        %237 = vmatprep.subr.bf16.mxu0 0
        %238 = vmatpush1.bf16.xpose.msra.mxu0 0
        %239 = vmatprep.subr.bf16.mxu0 0
        %240 = vmatpush1.bf16.xpose.msra.mxu0 0
        %241 = vmatprep.subr.bf16.mxu0 0
        %242 = vmatpush1.bf16.xpose.msra.mxu0 0
        %243 = vmatprep.subr.bf16.mxu0 0
        %244 = vmatpush1.bf16.xpose.msra.mxu0 0
        %245 = vmatprep.mubr.bf16.mxu0 0
        %246 = vmatmul.mubr.bf16.gmra.mrb[0].mxu0 %v208
        %v247 = vpop.f32.mrb[0].mxu0
        %v248 = vadd.f32 0.0, %v247
        %v249 = vpop.f32.mrb[0].mxu0
        %v250 = vpop.f32.mrb[0].mxu0
        %v251 = vpop.f32.mrb[0].mxu0
        %252 = vdwg.mxu0
        %v253 = vmul.f32 %v248, 0.35355338
        %vm254 = vcmask 130048
        %v255 = vsel %vm254, %v253, -inf
        %256 = vmax.xlane.f32.xlu0 %v255
        %v257 = vpop.xlane.xlu0 %256
        %v258 = vsub.f32 %v253, %v257
        %v259 = vmul.f32 %v258, 1.442695
        %v260 = vpow.pop %v259
        %v261 = vsel %vm254, %v260, 0.0
        %262 = vadd.xlane.f32.xlu0 %v261
        %v263 = vpop.xlane.xlu0 %262
        %v264 = vrcp.pop %v263
        %v265 = vmul.f32 %v260, %v264
        %v266 = vadd.f32 %v265, 0.0
        %v267 = vpack.c.bf16 %v265, %v265
        %268 = vrot.lane.b32.xlu0 %v205, 96
        %v269 = vpop.permute.xlu0 %268
        %v272 = vsel %vm254, %v267, 0
        %274 = vmatprep.subr.bf16.mxu0 0
        %275 = vmatpush1.bf16.msra.mxu0 %v269
        %276 = vmatprep.subr.bf16.mxu0 0
        %277 = vmatpush1.bf16.msra.mxu0 0
        %278 = vmatprep.subr.bf16.mxu0 0
        %279 = vmatpush1.bf16.msra.mxu0 0
        %280 = vmatprep.subr.bf16.mxu0 0
        %281 = vmatpush1.bf16.msra.mxu0 0
        %282 = vmatprep.subr.bf16.mxu0 0
        %283 = vmatpush1.bf16.msra.mxu0 0
        %284 = vmatprep.subr.bf16.mxu0 0
        %285 = vmatpush1.bf16.msra.mxu0 0
        %286 = vmatprep.subr.bf16.mxu0 0
        %287 = vmatpush1.bf16.msra.mxu0 0
        %288 = vmatprep.subr.bf16.mxu0 0
        %289 = vmatpush1.bf16.msra.mxu0 0
        %290 = vmatprep.subr.bf16.mxu0 0
        %291 = vmatpush1.bf16.msra.mxu0 0
        %292 = vmatprep.subr.bf16.mxu0 0
        %293 = vmatpush1.bf16.msra.mxu0 0
        %294 = vmatprep.subr.bf16.mxu0 0
        %295 = vmatpush1.bf16.msra.mxu0 0
        %296 = vmatprep.subr.bf16.mxu0 0
        %297 = vmatpush1.bf16.msra.mxu0 0
        %298 = vmatprep.subr.bf16.mxu0 0
        %299 = vmatpush1.bf16.msra.mxu0 0
        %300 = vmatprep.subr.bf16.mxu0 0
        %301 = vmatpush1.bf16.msra.mxu0 0
        %302 = vmatprep.subr.bf16.mxu0 0
        %303 = vmatpush1.bf16.msra.mxu0 0
        %304 = vmatprep.subr.bf16.mxu0 0
        %305 = vmatpush1.bf16.msra.mxu0 0
        %306 = vmatprep.mubr.bf16.mxu0 0
        %307 = vmatmul.mubr.bf16.gmra.mrb[0].mxu0 %v272
        %v308 = vpop.f32.mrb[0].mxu0
        %v309 = vadd.f32 0.0, %v308
        %v310 = vpop.f32.mrb[0].mxu0
        %v311 = vpop.f32.mrb[0].mxu0
        %v312 = vpop.f32.mrb[0].mxu0
        %313 = vdwg.mxu0
        %v315 = vunpack.c.l.b16 %v198
        %v316 = vpack.c.b16 %v315, %v315
        %317 = vrot.lane.b32.xlu0 %v316, 120
        %v318 = vpop.permute.xlu0 %317
        %319 = vrot.lane.b32.xlu0 %v205, 120
        %v320 = vpop.permute.xlu0 %319
        %v322 = vsel %vm206, %v318, 0
        %v325 = vsel %vm206, %v320, 0
        %327 = vmatprep.subr.bf16.mxu0 0
        %328 = vmatpush1.bf16.xpose.msra.mxu0 %v325
        %329 = vmatprep.subr.bf16.mxu0 0
        %330 = vmatpush1.bf16.xpose.msra.mxu0 0
        %331 = vmatprep.subr.bf16.mxu0 0
        %332 = vmatpush1.bf16.xpose.msra.mxu0 0
        %333 = vmatprep.subr.bf16.mxu0 0
        %334 = vmatpush1.bf16.xpose.msra.mxu0 0
        %335 = vmatprep.subr.bf16.mxu0 0
        %336 = vmatpush1.bf16.xpose.msra.mxu0 0
        %337 = vmatprep.subr.bf16.mxu0 0
        %338 = vmatpush1.bf16.xpose.msra.mxu0 0
        %339 = vmatprep.subr.bf16.mxu0 0
        %340 = vmatpush1.bf16.xpose.msra.mxu0 0
        %341 = vmatprep.subr.bf16.mxu0 0
        %342 = vmatpush1.bf16.xpose.msra.mxu0 0
        %343 = vmatprep.subr.bf16.mxu0 0
        %344 = vmatpush1.bf16.xpose.msra.mxu0 0
        %345 = vmatprep.subr.bf16.mxu0 0
        %346 = vmatpush1.bf16.xpose.msra.mxu0 0
        %347 = vmatprep.subr.bf16.mxu0 0
        %348 = vmatpush1.bf16.xpose.msra.mxu0 0
        %349 = vmatprep.subr.bf16.mxu0 0
        %350 = vmatpush1.bf16.xpose.msra.mxu0 0
        %351 = vmatprep.subr.bf16.mxu0 0
        %352 = vmatpush1.bf16.xpose.msra.mxu0 0
        %353 = vmatprep.subr.bf16.mxu0 0
        %354 = vmatpush1.bf16.xpose.msra.mxu0 0
        %355 = vmatprep.subr.bf16.mxu0 0
        %356 = vmatpush1.bf16.xpose.msra.mxu0 0
        %357 = vmatprep.subr.bf16.mxu0 0
        %358 = vmatpush1.bf16.xpose.msra.mxu0 0
        %359 = vmatprep.mubr.bf16.mxu0 0
        %360 = vmatmul.mubr.bf16.gmra.mrb[0].mxu0 %v322
        %v361 = vpop.f32.mrb[0].mxu0
        %v362 = vadd.f32 0.0, %v361
        %v363 = vpop.f32.mrb[0].mxu0
        %v364 = vpop.f32.mrb[0].mxu0
        %v365 = vpop.f32.mrb[0].mxu0
        %366 = vdwg.mxu0
        %v367 = vmul.f32 %v362, 0.35355338
        %v368 = vsel %vm254, %v367, -inf
        %369 = vmax.xlane.f32.xlu0 %v368
        %v370 = vpop.xlane.xlu0 %369
        %v371 = vsub.f32 %v367, %v370
        %v372 = vmul.f32 %v371, 1.442695
        %v373 = vpow.pop %v372
        %v374 = vsel %vm254, %v373, 0.0
        %375 = vadd.xlane.f32.xlu0 %v374
        %v376 = vpop.xlane.xlu0 %375
        %v377 = vrcp.pop %v376
        %v378 = vmul.f32 %v373, %v377
        %v379 = vadd.f32 %v266, %v378
        %v380 = vpack.c.bf16 %v378, %v378
        %381 = vrot.lane.b32.xlu0 %v205, 88
        %v382 = vpop.permute.xlu0 %381
        %v385 = vsel %vm254, %v380, 0
        %387 = vmatprep.subr.bf16.mxu0 0
        %388 = vmatpush1.bf16.msra.mxu0 %v382
        %389 = vmatprep.subr.bf16.mxu0 0
        %390 = vmatpush1.bf16.msra.mxu0 0
        %391 = vmatprep.subr.bf16.mxu0 0
        %392 = vmatpush1.bf16.msra.mxu0 0
        %393 = vmatprep.subr.bf16.mxu0 0
        %394 = vmatpush1.bf16.msra.mxu0 0
        %395 = vmatprep.subr.bf16.mxu0 0
        %396 = vmatpush1.bf16.msra.mxu0 0
        %397 = vmatprep.subr.bf16.mxu0 0
        %398 = vmatpush1.bf16.msra.mxu0 0
        %399 = vmatprep.subr.bf16.mxu0 0
        %400 = vmatpush1.bf16.msra.mxu0 0
        %401 = vmatprep.subr.bf16.mxu0 0
        %402 = vmatpush1.bf16.msra.mxu0 0
        %403 = vmatprep.subr.bf16.mxu0 0
        %404 = vmatpush1.bf16.msra.mxu0 0
        %405 = vmatprep.subr.bf16.mxu0 0
        %406 = vmatpush1.bf16.msra.mxu0 0
        %407 = vmatprep.subr.bf16.mxu0 0
        %408 = vmatpush1.bf16.msra.mxu0 0
        %409 = vmatprep.subr.bf16.mxu0 0
        %410 = vmatpush1.bf16.msra.mxu0 0
        %411 = vmatprep.subr.bf16.mxu0 0
        %412 = vmatpush1.bf16.msra.mxu0 0
        %413 = vmatprep.subr.bf16.mxu0 0
        %414 = vmatpush1.bf16.msra.mxu0 0
        %415 = vmatprep.subr.bf16.mxu0 0
        %416 = vmatpush1.bf16.msra.mxu0 0
        %417 = vmatprep.subr.bf16.mxu0 0
        %418 = vmatpush1.bf16.msra.mxu0 0
        %419 = vmatprep.mubr.bf16.mxu0 0
        %420 = vmatmul.mubr.bf16.gmra.mrb[0].mxu0 %v385
        %v421 = vpop.f32.mrb[0].mxu0
        %v422 = vadd.f32 0.0, %v421
        %v423 = vpop.f32.mrb[0].mxu0
        %v424 = vpop.f32.mrb[0].mxu0
        %v425 = vpop.f32.mrb[0].mxu0
        %426 = vdwg.mxu0
        %427 = vrot.lane.b32.xlu0 %v316, 112
        %v428 = vpop.permute.xlu0 %427
        %429 = vrot.lane.b32.xlu0 %v205, 112
        %v430 = vpop.permute.xlu0 %429
        %v432 = vsel %vm206, %v428, 0
        %v435 = vsel %vm206, %v430, 0
        %437 = vmatprep.subr.bf16.mxu0 0
        %438 = vmatpush1.bf16.xpose.msra.mxu0 %v435
        %439 = vmatprep.subr.bf16.mxu0 0
        %440 = vmatpush1.bf16.xpose.msra.mxu0 0
        %441 = vmatprep.subr.bf16.mxu0 0
        %442 = vmatpush1.bf16.xpose.msra.mxu0 0
        %443 = vmatprep.subr.bf16.mxu0 0
        %444 = vmatpush1.bf16.xpose.msra.mxu0 0
        %445 = vmatprep.subr.bf16.mxu0 0
        %446 = vmatpush1.bf16.xpose.msra.mxu0 0
        %447 = vmatprep.subr.bf16.mxu0 0
        %448 = vmatpush1.bf16.xpose.msra.mxu0 0
        %449 = vmatprep.subr.bf16.mxu0 0
        %450 = vmatpush1.bf16.xpose.msra.mxu0 0
        %451 = vmatprep.subr.bf16.mxu0 0
        %452 = vmatpush1.bf16.xpose.msra.mxu0 0
        %453 = vmatprep.subr.bf16.mxu0 0
        %454 = vmatpush1.bf16.xpose.msra.mxu0 0
        %455 = vmatprep.subr.bf16.mxu0 0
        %456 = vmatpush1.bf16.xpose.msra.mxu0 0
        %457 = vmatprep.subr.bf16.mxu0 0
        %458 = vmatpush1.bf16.xpose.msra.mxu0 0
        %459 = vmatprep.subr.bf16.mxu0 0
        %460 = vmatpush1.bf16.xpose.msra.mxu0 0
        %461 = vmatprep.subr.bf16.mxu0 0
        %462 = vmatpush1.bf16.xpose.msra.mxu0 0
        %463 = vmatprep.subr.bf16.mxu0 0
        %464 = vmatpush1.bf16.xpose.msra.mxu0 0
        %465 = vmatprep.subr.bf16.mxu0 0
        %466 = vmatpush1.bf16.xpose.msra.mxu0 0
        %467 = vmatprep.subr.bf16.mxu0 0
        %468 = vmatpush1.bf16.xpose.msra.mxu0 0
        %469 = vmatprep.mubr.bf16.mxu0 0
        %470 = vmatmul.mubr.bf16.gmra.mrb[0].mxu0 %v432
        %v471 = vpop.f32.mrb[0].mxu0
        %v472 = vadd.f32 0.0, %v471
        %v473 = vpop.f32.mrb[0].mxu0
        %v474 = vpop.f32.mrb[0].mxu0
        %v475 = vpop.f32.mrb[0].mxu0
        %476 = vdwg.mxu0
        %v477 = vmul.f32 %v472, 0.35355338
        %v478 = vsel %vm254, %v477, -inf
        %479 = vmax.xlane.f32.xlu0 %v478
        %v480 = vpop.xlane.xlu0 %479
        %v481 = vsub.f32 %v477, %v480
        %v482 = vmul.f32 %v481, 1.442695
        %v483 = vpow.pop %v482
        %v484 = vsel %vm254, %v483, 0.0
        %485 = vadd.xlane.f32.xlu0 %v484
        %v486 = vpop.xlane.xlu0 %485
        %v487 = vrcp.pop %v486
        %v488 = vmul.f32 %v483, %v487
        %v489 = vadd.f32 %v379, %v488
        %v490 = vpack.c.bf16 %v488, %v488
        %491 = vrot.lane.b32.xlu0 %v205, 80
        %v492 = vpop.permute.xlu0 %491
        %v495 = vsel %vm254, %v490, 0
        %497 = vmatprep.subr.bf16.mxu0 0
        %498 = vmatpush1.bf16.msra.mxu0 %v492
        %499 = vmatprep.subr.bf16.mxu0 0
        %500 = vmatpush1.bf16.msra.mxu0 0
        %501 = vmatprep.subr.bf16.mxu0 0
        %502 = vmatpush1.bf16.msra.mxu0 0
        %503 = vmatprep.subr.bf16.mxu0 0
        %504 = vmatpush1.bf16.msra.mxu0 0
        %505 = vmatprep.subr.bf16.mxu0 0
        %506 = vmatpush1.bf16.msra.mxu0 0
        %507 = vmatprep.subr.bf16.mxu0 0
        %508 = vmatpush1.bf16.msra.mxu0 0
        %509 = vmatprep.subr.bf16.mxu0 0
        %510 = vmatpush1.bf16.msra.mxu0 0
        %511 = vmatprep.subr.bf16.mxu0 0
        %512 = vmatpush1.bf16.msra.mxu0 0
        %513 = vmatprep.subr.bf16.mxu0 0
        %514 = vmatpush1.bf16.msra.mxu0 0
        %515 = vmatprep.subr.bf16.mxu0 0
        %516 = vmatpush1.bf16.msra.mxu0 0
        %517 = vmatprep.subr.bf16.mxu0 0
        %518 = vmatpush1.bf16.msra.mxu0 0
        %519 = vmatprep.subr.bf16.mxu0 0
        %520 = vmatpush1.bf16.msra.mxu0 0
        %521 = vmatprep.subr.bf16.mxu0 0
        %522 = vmatpush1.bf16.msra.mxu0 0
        %523 = vmatprep.subr.bf16.mxu0 0
        %524 = vmatpush1.bf16.msra.mxu0 0
        %525 = vmatprep.subr.bf16.mxu0 0
        %526 = vmatpush1.bf16.msra.mxu0 0
        %527 = vmatprep.subr.bf16.mxu0 0
        %528 = vmatpush1.bf16.msra.mxu0 0
        %529 = vmatprep.mubr.bf16.mxu0 0
        %530 = vmatmul.mubr.bf16.gmra.mrb[0].mxu0 %v495
        %v531 = vpop.f32.mrb[0].mxu0
        %v532 = vadd.f32 0.0, %v531
        %v533 = vpop.f32.mrb[0].mxu0
        %v534 = vpop.f32.mrb[0].mxu0
        %v535 = vpop.f32.mrb[0].mxu0
        %536 = vdwg.mxu0
        %537 = vrot.lane.b32.xlu0 %v316, 104
        %v538 = vpop.permute.xlu0 %537
        %539 = vrot.lane.b32.xlu0 %v205, 104
        %v540 = vpop.permute.xlu0 %539
        %v542 = vsel %vm206, %v538, 0
        %v545 = vsel %vm206, %v540, 0
        %547 = vmatprep.subr.bf16.mxu0 0
        %548 = vmatpush1.bf16.xpose.msra.mxu0 %v545
        %549 = vmatprep.subr.bf16.mxu0 0
        %550 = vmatpush1.bf16.xpose.msra.mxu0 0
        %551 = vmatprep.subr.bf16.mxu0 0
        %552 = vmatpush1.bf16.xpose.msra.mxu0 0
        %553 = vmatprep.subr.bf16.mxu0 0
        %554 = vmatpush1.bf16.xpose.msra.mxu0 0
        %555 = vmatprep.subr.bf16.mxu0 0
        %556 = vmatpush1.bf16.xpose.msra.mxu0 0
        %557 = vmatprep.subr.bf16.mxu0 0
        %558 = vmatpush1.bf16.xpose.msra.mxu0 0
        %559 = vmatprep.subr.bf16.mxu0 0
        %560 = vmatpush1.bf16.xpose.msra.mxu0 0
        %561 = vmatprep.subr.bf16.mxu0 0
        %562 = vmatpush1.bf16.xpose.msra.mxu0 0
        %563 = vmatprep.subr.bf16.mxu0 0
        %564 = vmatpush1.bf16.xpose.msra.mxu0 0
        %565 = vmatprep.subr.bf16.mxu0 0
        %566 = vmatpush1.bf16.xpose.msra.mxu0 0
        %567 = vmatprep.subr.bf16.mxu0 0
        %568 = vmatpush1.bf16.xpose.msra.mxu0 0
        %569 = vmatprep.subr.bf16.mxu0 0
        %570 = vmatpush1.bf16.xpose.msra.mxu0 0
        %571 = vmatprep.subr.bf16.mxu0 0
        %572 = vmatpush1.bf16.xpose.msra.mxu0 0
        %573 = vmatprep.subr.bf16.mxu0 0
        %574 = vmatpush1.bf16.xpose.msra.mxu0 0
        %575 = vmatprep.subr.bf16.mxu0 0
        %576 = vmatpush1.bf16.xpose.msra.mxu0 0
        %577 = vmatprep.subr.bf16.mxu0 0
        %578 = vmatpush1.bf16.xpose.msra.mxu0 0
        %579 = vmatprep.mubr.bf16.mxu0 0
        %580 = vmatmul.mubr.bf16.gmra.mrb[0].mxu0 %v542
        %v581 = vpop.f32.mrb[0].mxu0
        %v582 = vadd.f32 0.0, %v581
        %v583 = vpop.f32.mrb[0].mxu0
        %v584 = vpop.f32.mrb[0].mxu0
        %v585 = vpop.f32.mrb[0].mxu0
        %586 = vdwg.mxu0
        %v587 = vmul.f32 %v582, 0.35355338
        %v588 = vsel %vm254, %v587, -inf
        %589 = vmax.xlane.f32.xlu0 %v588
        %v590 = vpop.xlane.xlu0 %589
        %v591 = vsub.f32 %v587, %v590
        %v592 = vmul.f32 %v591, 1.442695
        %v593 = vpow.pop %v592
        %v594 = vsel %vm254, %v593, 0.0
        %595 = vadd.xlane.f32.xlu0 %v594
        %v596 = vpop.xlane.xlu0 %595
        %v597 = vrcp.pop %v596
        %v598 = vmul.f32 %v593, %v597
        %v599 = vadd.f32 %v489, %v598
        %v600 = vpack.c.bf16 %v598, %v598
        %601 = vrot.lane.b32.xlu0 %v205, 72
        %v602 = vpop.permute.xlu0 %601
        %v605 = vsel %vm254, %v600, 0
        %607 = vmatprep.subr.bf16.mxu0 0
        %608 = vmatpush1.bf16.msra.mxu0 %v602
        %609 = vmatprep.subr.bf16.mxu0 0
        %610 = vmatpush1.bf16.msra.mxu0 0
        %611 = vmatprep.subr.bf16.mxu0 0
        %612 = vmatpush1.bf16.msra.mxu0 0
        %613 = vmatprep.subr.bf16.mxu0 0
        %614 = vmatpush1.bf16.msra.mxu0 0
        %615 = vmatprep.subr.bf16.mxu0 0
        %616 = vmatpush1.bf16.msra.mxu0 0
        %617 = vmatprep.subr.bf16.mxu0 0
        %618 = vmatpush1.bf16.msra.mxu0 0
        %619 = vmatprep.subr.bf16.mxu0 0
        %620 = vmatpush1.bf16.msra.mxu0 0
        %621 = vmatprep.subr.bf16.mxu0 0
        %622 = vmatpush1.bf16.msra.mxu0 0
        %623 = vmatprep.subr.bf16.mxu0 0
        %624 = vmatpush1.bf16.msra.mxu0 0
        %625 = vmatprep.subr.bf16.mxu0 0
        %626 = vmatpush1.bf16.msra.mxu0 0
        %627 = vmatprep.subr.bf16.mxu0 0
        %628 = vmatpush1.bf16.msra.mxu0 0
        %629 = vmatprep.subr.bf16.mxu0 0
        %630 = vmatpush1.bf16.msra.mxu0 0
        %631 = vmatprep.subr.bf16.mxu0 0
        %632 = vmatpush1.bf16.msra.mxu0 0
        %633 = vmatprep.subr.bf16.mxu0 0
        %634 = vmatpush1.bf16.msra.mxu0 0
        %635 = vmatprep.subr.bf16.mxu0 0
        %636 = vmatpush1.bf16.msra.mxu0 0
        %637 = vmatprep.subr.bf16.mxu0 0
        %638 = vmatpush1.bf16.msra.mxu0 0
        %639 = vmatprep.mubr.bf16.mxu0 0
        %640 = vmatmul.mubr.bf16.gmra.mrb[0].mxu0 %v605
        %v641 = vpop.f32.mrb[0].mxu0
        %v642 = vadd.f32 0.0, %v641
        %v643 = vpop.f32.mrb[0].mxu0
        %v644 = vpop.f32.mrb[0].mxu0
        %v645 = vpop.f32.mrb[0].mxu0
        %646 = vdwg.mxu0
        %648 = vrot.lane.b32.xlu0 %v422, 8
        %v649 = vpop.permute.xlu0 %648
        %652 = vrot.lane.b32.xlu0 %v532, 16
        %v653 = vpop.permute.xlu0 %652
        %656 = vrot.lane.b32.xlu0 %v642, 24
        %v657 = vpop.permute.xlu0 %656
        %v659 = vsel %vm206, %v309, %v649
        %v660 = vsel %vm254, %v659, %v653
        %vm661 = vcmask 195584
        %v662 = vsel %vm661, %v660, %v657
        %v663 = vpack.c.bf16 %v662, %v662
        %vm664 = vcmask 257024
        %665 = vst.msk [vmem:[%s196] sm:$0xf] %vm664, %v663
        %v666 = vmul.f32 %v599, 0.25
        %667 = vst.msk [vmem:[%s183] sm:$0xff] %vm254, %v666
        %p668 = scmp.lt.s32.totalorder %s18, 1
        %s669 = scalar_select %p668, %s18, 1
        %s670 = smul.addr %s669, 4
        %s671 = scalar_lea.vmem %s2, %s670
        %s672 = sand.u32 %s104, 1
        %s673 = scalar_lea.sflag [#allocation3], %s672
        %s674 = sand.u32 %s104, 1
        %s675 = smul.addr %s674, 8
        %s676 = scalar_lea.vmem [#allocation2], %s675
        // Predicated region
        $region29: #{_lambda_.14} parent=27 // pred_check
          %p677 = pneg %p88
        $region30: #{_lambda_.14} parent=27 // pred_check_branch
          %679 = sbr.rel (%p677) target = $region32
        $region31: #{_lambda_.14} parent=27 // pred_region
          _
        $region32: #{_lambda_.14} parent=27 // pred_fallthru
          _
        // Predicated region
        $region33: #{_lambda_.14} parent=27 // pred_check
          %p680 = pneg %p114
        $region34: #{_lambda_.14} parent=27 // pred_check_branch
          %682 = sbr.rel (%p680) target = $region36
        $region35: #{_lambda_.14} parent=27 // pred_region
          %s684 = ssub.s32 128, 128
          %685 = vsyncadd %s673, %s684
          %s686 = smul.addr %s18, 128
          %s687 = scalar_lea.hbm %s3, %s686
          %s689 = sshll.u32 %s676, 4
          %s690 = int_to_ptr.vmem [resolvable:$true] %s689
          %692 = dma.vmem_to_hbm [thread:$0]  %s690, 128, %s687, %s673
        $region36: #{_lambda_.14} parent=27 // pred_fallthru
          _
      $region28: #{_lambda_.14} parent=5 // pred_fallthru
        _
      %p693 = scmp.le.s32.totalorder 2, %s13
      // Predicated region
      $region37: #{_lambda_.14} parent=5 // pred_check
        %p694 = pneg %p693
      $region38: #{_lambda_.14} parent=5 // pred_check_branch
        %696 = sbr.rel (%p694) target = $region40
      $region39: #{_lambda_.14} parent=5 // pred_region
        %s697 = ssub.s32 %s13, 2
        // Predicated region
        $region41: #{_lambda_.14} parent=39 // pred_check
          %p698 = pneg %p94
        $region42: #{_lambda_.14} parent=39 // pred_check_branch
          %700 = sbr.rel (%p698) target = $region44
        $region43: #{_lambda_.14} parent=39 // pred_region
          %p701 = scmp.lt.s32.totalorder %s19, 1
          %s702 = scalar_select %p701, %s19, 1
          %s703 = smul.addr %s702, 4
          %s704 = scalar_lea.vmem %s2, %s703
        $region44: #{_lambda_.14} parent=39 // pred_fallthru
          _
        // Predicated region
        $region45: #{_lambda_.14} parent=39 // pred_check
          %p705 = pneg %p120
        $region46: #{_lambda_.14} parent=39 // pred_check_branch
          %707 = sbr.rel (%p705) target = $region48
        $region47: #{_lambda_.14} parent=39 // pred_region
          %s708 = sand.u32 %s105, 1
          %s709 = scalar_lea.sflag [#allocation3], %s708
          %s710 = sand.u32 %s105, 1
          %s711 = smul.addr %s710, 8
          %s712 = scalar_lea.vmem [#allocation2], %s711
          %713 = dma.done %s709, 128
        $region48: #{_lambda_.14} parent=39 // pred_fallthru
          _
      $region40: #{_lambda_.14} parent=5 // pred_fallthru
        _
    $region6: #{_lambda_.14} parent=1 // loop_footer
      %s17 = sadd.s32 1, %s13
    $region7: #{_lambda_.14} parent=1 // loop_footer_branch
      %12 = sbr.rel target = $region3
    $region8: #{_lambda_.14} parent=1 // loop_exit
      _
    %714 = vsyncpa [#allocation3], 1
    %s715 = scalar_lea.sflag [#allocation3], 1
    %716 = vsyncpa %s715, 1

// kernel: _lambda_.17
$region0: #{_lambda_.17}
  #allocation0 [shape = 'u32[]', space=smem, size = 0x4, offset = 0x4, fixed_abs, tag = 'smem constant byte address 0x4 - core index']
  #allocation1 [shape = 'u32[144,128]{1,0:T(1,128)}', space=vmem, size = 0x12000, scoped, tag = 'internal scratch']
  #allocation2 [shape = 'f32[16,32]{1,0:T(8,128)}', space=vmem, size = 0x2000, scoped, tag = 'scratch operand']
  %s0 = inlined_call_operand.vmem [shape: bf16[16,64], index: 0, kind: input, shape index: {}]
  %s1 = inlined_call_operand.vmem [shape: bf16[64,32], index: 1, kind: input, shape index: {}]
  %s2 = inlined_call_operand.vmem [shape: f32[1,32], index: 2, kind: input, shape index: {}, may-alias: {2,5}]
  %s3 = inlined_call_operand.vmem [shape: f32[16,32], index: 3, kind: input, shape index: {}]
  %s4 = inlined_call_operand.vmem [shape: f32[1,32], index: 4, kind: input, shape index: {}]
  %s5 = inlined_call_operand.vmem [shape: f32[1,32], index: 5, kind: input, shape index: {}, may-alias: {2,5}]
  %s6 = inlined_call_operand.vmem [shape: f32[16,32], index: 6, kind: output, shape index: {}]
  %s7 = sld [smem:[#allocation0]]
  $region42: #{_lambda_.17} parent=0
    _
  %s9 = ssub.s32 1, %s7
  %s10 = scalar_select 0, %s9, %s7
  // Predicated region
  $region2: #{_lambda_.17} parent=0 // pred_check
    _
  $region3: #{_lambda_.17} parent=0 // pred_check_branch
    %12 = sbr.rel (0) target = $region5
  $region4: #{_lambda_.17} parent=0 // pred_region
    _
  $region5: #{_lambda_.17} parent=0 // pred_fallthru
    _
  // Predicated region
  $region6: #{_lambda_.17} parent=0 // pred_check
    _
  $region7: #{_lambda_.17} parent=0 // pred_check_branch
    %14 = sbr.rel (0) target = $region9
  $region8: #{_lambda_.17} parent=0 // pred_region
    _
  $region9: #{_lambda_.17} parent=0 // pred_fallthru
    _
  // Predicated region
  $region10: #{_lambda_.17} parent=0 // pred_check
    _
  $region11: #{_lambda_.17} parent=0 // pred_check_branch
    %16 = sbr.rel (0) target = $region13
  $region12: #{_lambda_.17} parent=0 // pred_region
    _
  $region13: #{_lambda_.17} parent=0 // pred_fallthru
    _
  // Predicated region
  $region14: #{_lambda_.17} parent=0 // pred_check
    _
  $region15: #{_lambda_.17} parent=0 // pred_check_branch
    %18 = sbr.rel (0) target = $region17
  $region16: #{_lambda_.17} parent=0 // pred_region
    _
  $region17: #{_lambda_.17} parent=0 // pred_fallthru
    _
  // Predicated region
  $region18: #{_lambda_.17} parent=0 // pred_check
    _
  $region19: #{_lambda_.17} parent=0 // pred_check_branch
    %20 = sbr.rel (0) target = $region21
  $region20: #{_lambda_.17} parent=0 // pred_region
    _
  $region21: #{_lambda_.17} parent=0 // pred_fallthru
    _
  // Predicated region
  $region22: #{_lambda_.17} parent=0 // pred_check
    _
  $region23: #{_lambda_.17} parent=0 // pred_check_branch
    %22 = sbr.rel (0) target = $region25
  $region24: #{_lambda_.17} parent=0 // pred_region
    _
  $region25: #{_lambda_.17} parent=0 // pred_fallthru
    _
  %p24 = scmp.eq.s32.totalorder 0, 0
  // Predicated region
  $region26: #{_lambda_.17} parent=0 // pred_check
    %p25 = pneg %p24
  $region27: #{_lambda_.17} parent=0 // pred_check_branch
    %27 = sbr.rel (%p25) target = $region29
  $region28: #{_lambda_.17} parent=0 // pred_region
    %vm28 = vcmask 261120
    %29 = vst.msk [vmem:[#allocation2] sm:$0xff] %vm28, 0.0
    %30 = vst.msk [vmem:[#allocation2 + $0x8] sm:$0xff] %vm28, 0.0
  $region29: #{_lambda_.17} parent=0 // pred_fallthru
    _
  %v31 = vld [vmem:[#allocation2] sm:$0xff]
  %v32 = vld [vmem:[#allocation2 + $0x8] sm:$0xff]
  %v33 = vld [vmem:[%s0] sm:$0xf]
  %v34 = vld [vmem:[%s0 + $0x4] sm:$0xf]
  %v35 = vld [vmem:[%s1] sm:$0xf]
  %v36 = vld [vmem:[%s1 + $0x4] sm:$0xf]
  %v37 = vld [vmem:[%s1 + $0x8] sm:$0xf]
  %v38 = vld [vmem:[%s1 + $0xc] sm:$0xf]
  %v39 = vld [vmem:[%s1 + $0x10] sm:$0xf]
  %v40 = vld [vmem:[%s1 + $0x14] sm:$0xf]
  %v41 = vld [vmem:[%s1 + $0x18] sm:$0xf]
  %v42 = vld [vmem:[%s1 + $0x1c] sm:$0xf]
  %v45 = vunpack.c.l.b16 %v33
  %v46 = vunpack.c.l.b16 %v34
  %v47 = vpack.c.b16 %v46, %v45
  %v56 = vunpack.c.l.b16 %v35
  %v57 = vunpack.c.l.b16 %v36
  %v58 = vunpack.c.l.b16 %v37
  %v59 = vunpack.c.l.b16 %v38
  %v60 = vunpack.c.l.b16 %v39
  %v61 = vunpack.c.l.b16 %v40
  %v62 = vunpack.c.l.b16 %v41
  %v63 = vunpack.c.l.b16 %v42
  %v64 = vpack.c.b16 %v57, %v56
  %v65 = vpack.c.b16 %v59, %v58
  %v66 = vpack.c.b16 %v61, %v60
  %v67 = vpack.c.b16 %v63, %v62
  %vm72 = vcmask 523264
  %v74 = vsel %vm72, %v47, 0
  %76 = vmatprep.subr.bf16.mxu0 0
  %77 = vmatpush1.bf16.msra.mxu0 %v64
  %78 = vmatprep.subr.bf16.mxu0 0
  %79 = vmatpush1.bf16.msra.mxu0 %v65
  %80 = vmatprep.subr.bf16.mxu0 0
  %81 = vmatpush1.bf16.msra.mxu0 %v66
  %82 = vmatprep.subr.bf16.mxu0 0
  %83 = vmatpush1.bf16.msra.mxu0 %v67
  %84 = vmatprep.subr.bf16.mxu0 0
  %85 = vmatpush1.bf16.msra.mxu0 0
  %86 = vmatprep.subr.bf16.mxu0 0
  %87 = vmatpush1.bf16.msra.mxu0 0
  %88 = vmatprep.subr.bf16.mxu0 0
  %89 = vmatpush1.bf16.msra.mxu0 0
  %90 = vmatprep.subr.bf16.mxu0 0
  %91 = vmatpush1.bf16.msra.mxu0 0
  %92 = vmatprep.subr.bf16.mxu0 0
  %93 = vmatpush1.bf16.msra.mxu0 0
  %94 = vmatprep.subr.bf16.mxu0 0
  %95 = vmatpush1.bf16.msra.mxu0 0
  %96 = vmatprep.subr.bf16.mxu0 0
  %97 = vmatpush1.bf16.msra.mxu0 0
  %98 = vmatprep.subr.bf16.mxu0 0
  %99 = vmatpush1.bf16.msra.mxu0 0
  %100 = vmatprep.subr.bf16.mxu0 0
  %101 = vmatpush1.bf16.msra.mxu0 0
  %102 = vmatprep.subr.bf16.mxu0 0
  %103 = vmatpush1.bf16.msra.mxu0 0
  %104 = vmatprep.subr.bf16.mxu0 0
  %105 = vmatpush1.bf16.msra.mxu0 0
  %106 = vmatprep.subr.bf16.mxu0 0
  %107 = vmatpush1.bf16.msra.mxu0 0
  %108 = vmatprep.mubr.bf16.mxu0 0
  %109 = vmatmul.mubr.bf16.gmra.mrb[0].mxu0 %v74
  %v110 = vpop.f32.mrb[0].mxu0
  %v111 = vadd.f32 0.0, %v110
  %v112 = vpop.f32.mrb[0].mxu0
  %v113 = vpop.f32.mrb[0].mxu0
  %v114 = vadd.f32 0.0, %v113
  %v115 = vpop.f32.mrb[0].mxu0
  %116 = vdwg.mxu0
  %v117 = vadd.f32 %v31, %v111
  %v118 = vadd.f32 %v32, %v114
  %vm119 = vcmask 261120
  %120 = vst.msk [vmem:[#allocation2] sm:$0xff] %vm119, %v117
  %121 = vst.msk [vmem:[#allocation2 + $0x8] sm:$0xff] %vm119, %v118
  // Predicated region
  $region30: #{_lambda_.17} parent=0 // pred_check
    %p122 = pneg %p24
  $region31: #{_lambda_.17} parent=0 // pred_check_branch
    %124 = sbr.rel (%p122) target = $region33
  $region32: #{_lambda_.17} parent=0 // pred_region
    %v125 = vld [vmem:[#allocation2] sm:$0xff]
    %v126 = vld [vmem:[#allocation2 + $0x8] sm:$0xff]
    %v127 = vld [vmem:[%s2] sm:$0x1]
    %v129 = vlaneseq
    %v130 = vshrl.u32 %v129, 7
    %v131 = vsub.s32 0, %v130
    %v132 = vrot.slane %v127, %v131
    %v134 = vadd.f32 %v125, %v132
    %v135 = vadd.f32 %v126, %v132
    %v136 = vld [vmem:[%s3] sm:$0xff]
    %v137 = vld [vmem:[%s3 + $0x8] sm:$0xff]
    %v138 = vadd.f32 %v134, %v136
    %v139 = vadd.f32 %v135, %v137
    %v140 = vsel %vm119, %v138, 0.0
    %141 = vadd.xlane.f32.xlu0 %v140
    %v142 = vpop.xlane.xlu0 %141
    %v143 = vsel %vm119, %v139, 0.0
    %144 = vadd.xlane.f32.xlu0 %v143
    %v145 = vpop.xlane.xlu0 %144
    %v146 = vrcp.pop 32.0
    %v147 = vmul.f32 %v142, %v146
    %v148 = vmul.f32 %v145, %v146
    %v149 = vsub.f32 %v138, %v147
    %v150 = vsub.f32 %v139, %v148
    %v151 = vmul.f32 %v149, %v149
    %v152 = vmul.f32 %v150, %v150
    %v153 = vsel %vm119, %v151, 0.0
    %154 = vadd.xlane.f32.xlu0 %v153
    %v155 = vpop.xlane.xlu0 %154
    %v156 = vsel %vm119, %v152, 0.0
    %157 = vadd.xlane.f32.xlu0 %v156
    %v158 = vpop.xlane.xlu0 %157
    %v159 = vmul.f32 %v155, %v146
    %v160 = vmul.f32 %v158, %v146
    %v161 = vadd.f32 %v159, 1e-05
    %v162 = vadd.f32 %v160, 1e-05
    %v163 = vrsqrt.pop %v161
    %v164 = vrsqrt.pop %v162
    %v165 = vmul.f32 %v149, %v163
    %v166 = vmul.f32 %v150, %v164
    %v167 = vld [vmem:[%s4] sm:$0x1]
    %v169 = vlaneseq
    %v170 = vshrl.u32 %v169, 7
    %v171 = vsub.s32 0, %v170
    %v172 = vrot.slane %v167, %v171
    %v174 = vmul.f32 %v165, %v172
    %v175 = vmul.f32 %v166, %v172
    %v176 = vld [vmem:[%s5] sm:$0x1]
    %v178 = vlaneseq
    %v179 = vshrl.u32 %v178, 7
    %v180 = vsub.s32 0, %v179
    %v181 = vrot.slane %v176, %v180
    %v183 = vadd.f32 %v174, %v181
    %v184 = vadd.f32 %v175, %v181
    %185 = vst.msk [vmem:[%s6] sm:$0xff] %vm119, %v183
    %186 = vst.msk [vmem:[%s6 + $0x8] sm:$0xff] %vm119, %v184
  $region33: #{_lambda_.17} parent=0 // pred_fallthru
    _
  // Predicated region
  $region34: #{_lambda_.17} parent=0 // pred_check
    _
  $region35: #{_lambda_.17} parent=0 // pred_check_branch
    %188 = sbr.rel (0) target = $region37
  $region36: #{_lambda_.17} parent=0 // pred_region
    _
  $region37: #{_lambda_.17} parent=0 // pred_fallthru
    _
  // Predicated region
  $region38: #{_lambda_.17} parent=0 // pred_check
    _
  $region39: #{_lambda_.17} parent=0 // pred_check_branch
    %190 = sbr.rel (0) target = $region41
  $region40: #{_lambda_.17} parent=0 // pred_region
    _
  $region41: #{_lambda_.17} parent=0 // pred_fallthru
    _

</llo_original>
